<compile_context>
chip_gen: v6e
topology: v6e:2x2x1
jax: 0.10.0
libtpu: 0.0.40
codegen_flags: <defaults>
</compile_context>

<pallas_src>
import functools

import jax
import jax.numpy as jnp
from jax.experimental import pallas as pl
from jax.experimental.pallas import tpu as pltpu

LANE = 128
SUBLANE = 8

# PyTorch gate order is [i, f, g, o]; the kernel uses [i, f, o, g] so the three
# sigmoid gates are contiguous and the tanh gate is the last block.
GATE_ORDER = (0, 1, 3, 2)   # new block g_new <- old block GATE_ORDER[g_new]


def _round_up(n: int, m: int) -> int:
    return ((n + m - 1) // m) * m


# ------------------------------- fused kernel --------------------------------

def fused_lstm_fc_kernel(x_ref, wih1_ref, whh1_ref, b1_ref, w2_ref, b2_ref,
                         fcw_ref, fcb_ref, out_ref, gx_ref, *, seq_len,
                         batch_p):
    """2-layer LSTM recurrence + FC head in one kernel invocation.

    x_ref    : (T*Bp, D)   f32   time-major flattened, batch sublane-padded
    wih1_ref : (D, 4Hp)    bf16  layer-1 input weights   (gate blocks [i,f,o,g])
    whh1_ref : (Hp, 4Hp)   bf16  layer-1 recurrent weights
    b1_ref   : (1, 4Hp)    f32   layer-1 bias (b_ih + b_hh), zero in padding
    w2_ref   : (2Hp, 4Hp)  bf16  layer-2 fused [W_ih; W_hh]
    b2_ref   : (1, 4Hp)    f32   layer-2 bias
    fcw_ref  : (Hp, Cp)    bf16  FC weights
    fcb_ref  : (1, Cp)     f32   FC bias
    out_ref  : (Bp, Cp)    f32   lane-dense logits (sliced to (B, C) in wrapper)
    gx_ref   : (T*Bp, 4Hp) f32   scratch: hoisted layer-1 input projection
    """
    T, Bp = seq_len, batch_p
    Hp = whh1_ref.shape[0]

    # Prologue: the x-projection has no sequential dependence -> one big matmul.
    gx_ref[...] = (
        jnp.dot(x_ref[...].astype(jnp.bfloat16), wih1_ref[...],
                preferred_element_type=jnp.float32)
        + b1_ref[...])

    # Loop-invariant hoists (JAX does not CSE broadcast_in_dim inside loops).
    b2 = jnp.broadcast_to(b2_ref[...], (Bp, 4 * Hp))

    def gate_math(gates, c):
        # Gate blocks are Hp=128 wide and ordered [i, f, o, g]:
        #   one sigmoid over a contiguous (Bp, 3Hp) slab, one tanh over (Bp, Hp).
        sig = jax.nn.sigmoid(gates[:, :3 * Hp])
        g = jnp.tanh(gates[:, 3 * Hp:])
        i = sig[:, 0 * Hp:1 * Hp]
        f = sig[:, 1 * Hp:2 * Hp]
        o = sig[:, 2 * Hp:3 * Hp]
        c_new = f * c + i * g
        h_new = o * jnp.tanh(c_new)
        return h_new, c_new

    def step(t, carry):
        h1, c1, h2, c2 = carry
        row = t * Bp
        if not isinstance(row, int):
            # Dynamic index (fori_loop path): tell Mosaic the slice start is
            # sublane-aligned so the load stays a plain unmasked vld.
            row = pl.multiple_of(row, Bp)
        # Layer 1: only the recurrent matmul remains in the serial loop.
        g1 = gx_ref[pl.ds(row, Bp), :] + jnp.dot(
            h1.astype(jnp.bfloat16), whh1_ref[...],
            preferred_element_type=jnp.float32)
        h1, c1 = gate_math(g1, c1)
        # Layer 2: a single fused matmul on concat([x_t(=h1), h2]).
        xh = jnp.concatenate([h1, h2], axis=1).astype(jnp.bfloat16)
        g2 = (jnp.dot(xh, w2_ref[...], preferred_element_type=jnp.float32)
              + b2)
        h2, c2 = gate_math(g2, c2)
        return h1, c1, h2, c2

    z = jnp.zeros((Bp, Hp), jnp.float32)
    carry = (z, z, z, z)
    if T <= 32:
        # Short sequence: full trace-time unroll (cross-step scheduler
        # visibility; carries are ~1 vreg each, so register pressure is tiny).
        for t in range(T):
            carry = step(t, carry)
    else:
        # Long sequence: partial unroll so adjacent steps can still overlap.
        carry = jax.lax.fori_loop(0, T, step, carry, unroll=2)
    _, _, h2, _ = carry

    # Epilogue: FC head fused into the same kernel (no extra launch / HBM trip).
    out_ref[...] = (
        jnp.dot(h2.astype(jnp.bfloat16), fcw_ref[...],
                preferred_element_type=jnp.float32)
        + fcb_ref[...]).astype(out_ref.dtype)


# --------------------------------- wrapper -----------------------------------

def rnn_forward(x_btd, kparams):
    """Equivalent of RNN.forward: 2-layer LSTM (zero init states) + fc(out[:,-1,:])."""
    B, T, D = x_btd.shape
    Hp = kparams["Hp"]
    Cp = kparams["Cp"]
    C = kparams["num_classes"]
    Bp = _round_up(max(B, SUBLANE), SUBLANE)   # sublane-pad the batch

    # Zero-pad batch rows (recurrence is row-independent; padded rows are
    # sliced off at the end), then time-major flatten so the hoisted projection
    # is one contiguous matmul and each step reads an aligned (Bp, 4Hp) tile.
    x_pad = jnp.zeros((Bp, T, D), x_btd.dtype).at[:B].set(x_btd)
    x_flat = jnp.transpose(x_pad, (1, 0, 2)).reshape(T * Bp, D)

    kernel = functools.partial(fused_lstm_fc_kernel, seq_len=T, batch_p=Bp)
    vmem = pl.BlockSpec(memory_space=pltpu.MemorySpace.VMEM)
    out_padded = pl.pallas_call(
        kernel,
        out_shape=jax.ShapeDtypeStruct((Bp, Cp), jnp.float32),
        in_specs=[vmem] * 8,
        out_specs=vmem,
        scratch_shapes=[pltpu.VMEM((T * Bp, 4 * Hp), jnp.float32)],
        compiler_params=pltpu.CompilerParams(
            # Explicit limit: v5e's default scoped VMEM is only 16 MiB; keep
            # comfortable headroom under v7x's 64 MiB physical VMEM.
            vmem_limit_bytes=32 * 1024 * 1024),
    )(x_flat, kparams["wih1"], kparams["whh1"], kparams["b1"],
      kparams["w2"], kparams["b2"], kparams["fc_w"], kparams["fc_b"])
    return out_padded[:B, :C]


# --------------------------- parameter preparation ---------------------------

def init_params(key, input_size, hidden_size, num_layers, num_classes):
    """Raw PyTorch-shaped params, U(-1/sqrt(H), 1/sqrt(H)) init."""
    H = hidden_size
    k = 1.0 / jnp.sqrt(jnp.float32(H))
    params = {"lstm": []}
    for layer in range(num_layers):
        d_in = input_size if layer == 0 else H
        key, k1, k2, k3, k4 = jax.random.split(key, 5)
        params["lstm"].append({
            "w_ih": jax.random.uniform(k1, (4 * H, d_in), jnp.float32, -k, k),
            "w_hh": jax.random.uniform(k2, (4 * H, H), jnp.float32, -k, k),
            "b_ih": jax.random.uniform(k3, (4 * H,), jnp.float32, -k, k),
            "b_hh": jax.random.uniform(k4, (4 * H,), jnp.float32, -k, k),
        })
    key, k5, k6 = jax.random.split(key, 3)
    params["fc_w"] = jax.random.uniform(k5, (num_classes, H), jnp.float32, -k, k)
    params["fc_b"] = jax.random.uniform(k6, (num_classes,), jnp.float32, -k, k)
    return params


def prepare_kernel_params(params):
    """Pad/transpose/reorder/cast raw params to the lane-dense bf16 kernel layout.

    Gate blocks are reordered from PyTorch [i, f, g, o] to [i, f, o, g] and each
    block is padded H -> Hp (multiple of 128); padded bias entries are zero, so
    padded h/c lanes stay exactly zero through the recurrence (sigmoid(0) gates
    multiply a zero c and a zero tanh block).
    """
    lstm = params["lstm"]
    assert len(lstm) == 2, "fused kernel is specialized for num_layers=2"
    H = lstm[0]["w_hh"].shape[1]
    C = params["fc_w"].shape[0]
    Hp = _round_up(H, LANE)
    Cp = _round_up(C, LANE)

    def pad_gate_cols(w_t):                        # (K, 4H) -> (K, 4Hp), reordered
        out = jnp.zeros((w_t.shape[0], 4 * Hp), jnp.float32)
        for g_new, g_old in enumerate(GATE_ORDER):
            out = out.at[:, g_new * Hp:g_new * Hp + H].set(
                w_t[:, g_old * H:(g_old + 1) * H])
        return out

    def pad_rows(w):                               # (H, N) -> (Hp, N)
        return jnp.zeros((Hp, w.shape[1]), jnp.float32).at[:w.shape[0]].set(w)

    def pad_gate_bias(b):                          # (4H,) -> (1, 4Hp), reordered
        out = jnp.zeros((4 * Hp,), jnp.float32)
        for g_new, g_old in enumerate(GATE_ORDER):
            out = out.at[g_new * Hp:g_new * Hp + H].set(
                b[g_old * H:(g_old + 1) * H])
        return out[None, :]

    l1, l2 = lstm
    wih1 = pad_gate_cols(l1["w_ih"].T).astype(jnp.bfloat16)             # (D, 4Hp)
    whh1 = pad_rows(pad_gate_cols(l1["w_hh"].T)).astype(jnp.bfloat16)   # (Hp, 4Hp)
    b1 = pad_gate_bias(l1["b_ih"] + l1["b_hh"])                         # (1, 4Hp)

    wih2 = pad_rows(pad_gate_cols(l2["w_ih"].T))
    whh2 = pad_rows(pad_gate_cols(l2["w_hh"].T))
    w2 = jnp.concatenate([wih2, whh2], axis=0).astype(jnp.bfloat16)     # (2Hp, 4Hp)
    b2 = pad_gate_bias(l2["b_ih"] + l2["b_hh"])                         # (1, 4Hp)

    fc_w = (jnp.zeros((Hp, Cp), jnp.float32)
            .at[:H, :C].set(params["fc_w"].T)).astype(jnp.bfloat16)     # (Hp, Cp)
    fc_b = jnp.zeros((Cp,), jnp.float32).at[:C].set(params["fc_b"])[None, :]

    return {"wih1": wih1, "whh1": whh1, "b1": b1, "w2": w2, "b2": b2,
            "fc_w": fc_w, "fc_b": fc_b, "num_classes": C, "Hp": Hp, "Cp": Cp}


# ----------------------------- pure-JAX reference ----------------------------

def rnn_reference(x_btd, params):
    """Reference with identical numerics (bf16 matmul inputs, f32 accumulation)."""
    def bf(a):
        return a.astype(jnp.bfloat16)

    B, T, _ = x_btd.shape
    seq = x_btd
    for lyr in params["lstm"]:
        H = lyr["w_hh"].shape[1]
        w_ih_t, w_hh_t = lyr["w_ih"].T, lyr["w_hh"].T
        b = (lyr["b_ih"] + lyr["b_hh"])[None, :]
        h = jnp.zeros((B, H), jnp.float32)
        c = jnp.zeros((B, H), jnp.float32)
        outs = []
        for t in range(T):
            gates = (jnp.dot(bf(seq[:, t, :]), bf(w_ih_t),
                             preferred_element_type=jnp.float32)
                     + jnp.dot(bf(h), bf(w_hh_t),
                               preferred_element_type=jnp.float32) + b)
            i = jax.nn.sigmoid(gates[:, 0 * H:1 * H])
            f = jax.nn.sigmoid(gates[:, 1 * H:2 * H])
            g = jnp.tanh(gates[:, 2 * H:3 * H])
            o = jax.nn.sigmoid(gates[:, 3 * H:4 * H])
            c = f * c + i * g
            h = o * jnp.tanh(c)
            outs.append(h)
        seq = jnp.stack(outs, axis=1)
    return (jnp.dot(bf(seq[:, -1, :]), bf(params["fc_w"].T),
                    preferred_element_type=jnp.float32)
            + params["fc_b"][None, :])


# ------------------------------------ main ------------------------------------

if __name__ == "__main__":
    batch = 2
    seq_len = 8
    input_size = 16
    hidden_size = 32
    num_layers = 2
    num_classes = 3

    key = jax.random.PRNGKey(0)
    key, kx, kp = jax.random.split(key, 3)
    x = jax.random.normal(kx, (batch, seq_len, input_size), jnp.float32)
    params = init_params(kp, input_size, hidden_size, num_layers, num_classes)
    kparams = prepare_kernel_params(params)

    out = rnn_forward(x, kparams)
    out = jax.block_until_ready(out)

    ref = rnn_reference(x, params)
    assert out.shape == (batch, num_classes)
    assert jnp.allclose(out, ref, atol=2e-3, rtol=2e-3), (out, ref)

    print("KERNEL_OK")
</pallas_src>

<mosaic_0001>
module attributes {stable_mosaic.version = 11 : i64} {
  func.func @fused_lstm_fc_kernel(%arg0: memref<64x16xf32, #tpu.memory_space<vmem>>, %arg1: memref<16x512xbf16, #tpu.memory_space<vmem>>, %arg2: memref<128x512xbf16, #tpu.memory_space<vmem>>, %arg3: memref<1x512xf32, #tpu.memory_space<vmem>>, %arg4: memref<256x512xbf16, #tpu.memory_space<vmem>>, %arg5: memref<1x512xf32, #tpu.memory_space<vmem>>, %arg6: memref<128x128xbf16, #tpu.memory_space<vmem>>, %arg7: memref<1x128xf32, #tpu.memory_space<vmem>>, %arg8: memref<8x128xf32, #tpu.memory_space<vmem>>, %arg9: memref<64x512xf32, #tpu.memory_space<vmem>>) attributes {dimension_semantics = [], scalar_prefetch = 0 : i64, scratch_operands = 1 : i64, tpu.core_type = #tpu.core_type<tc>} {
    %c0 = arith.constant 0 : index
    %c0_0 = arith.constant 0 : index
    %0 = vector.load %arg0[%c0, %c0_0] : memref<64x16xf32, #tpu.memory_space<vmem>>, vector<64x16xf32>
    %1 = arith.truncf %0 : vector<64x16xf32> to vector<64x16xbf16>
    %c0_1 = arith.constant 0 : index
    %c0_2 = arith.constant 0 : index
    %2 = vector.load %arg1[%c0_1, %c0_2] : memref<16x512xbf16, #tpu.memory_space<vmem>>, vector<16x512xbf16>
    %cst = arith.constant dense<0.000000e+00> : vector<64x512xf32>
    %3 = tpu.matmul %1, %2, %cst {dimension_numbers = #tpu.dot_dimension_numbers<[1], [0], [0], [1], [0, 0, 1, 1], [], []>} : vector<64x16xbf16>, vector<16x512xbf16>, vector<64x512xf32> -> vector<64x512xf32>
    %c0_3 = arith.constant 0 : index
    %c0_4 = arith.constant 0 : index
    %4 = vector.load %arg3[%c0_3, %c0_4] : memref<1x512xf32, #tpu.memory_space<vmem>>, vector<1x512xf32>
    %5 = vector.broadcast %4 : vector<1x512xf32> to vector<64x512xf32>
    %6 = arith.addf %3, %5 : vector<64x512xf32>
    %c0_5 = arith.constant 0 : index
    %c0_6 = arith.constant 0 : index
    %7 = vector.load %arg9[%c0_5, %c0_6] : memref<64x512xf32, #tpu.memory_space<vmem>>, vector<64x512xf32>
    tpu.vector_store %arg9[%c0_5, %c0_6], %6 {strides = array<i32>} : memref<64x512xf32, #tpu.memory_space<vmem>>, vector<64x512xf32>,
    %c0_7 = arith.constant 0 : index
    %c0_8 = arith.constant 0 : index
    %8 = vector.load %arg5[%c0_7, %c0_8] : memref<1x512xf32, #tpu.memory_space<vmem>>, vector<1x512xf32>
    %9 = vector.shape_cast %8 : vector<1x512xf32> to vector<1x512xf32>
    %10 = vector.broadcast %9 : vector<1x512xf32> to vector<8x512xf32>
    %cst_9 = arith.constant 0.000000e+00 : f32
    %11 = vector.broadcast %cst_9 : f32 to vector<8x128xf32>
    %c0_10 = arith.constant 0 : index
    %c0_11 = arith.constant 0 : index
    %12 = vector.load %arg9[%c0_10, %c0_11] : memref<64x512xf32, #tpu.memory_space<vmem>>, vector<8x512xf32>
    %13 = arith.truncf %11 : vector<8x128xf32> to vector<8x128xbf16>
    %c0_12 = arith.constant 0 : index
    %c0_13 = arith.constant 0 : index
    %14 = vector.load %arg2[%c0_12, %c0_13] : memref<128x512xbf16, #tpu.memory_space<vmem>>, vector<128x512xbf16>
    %cst_14 = arith.constant dense<0.000000e+00> : vector<8x512xf32>
    %15 = tpu.matmul %13, %14, %cst_14 {dimension_numbers = #tpu.dot_dimension_numbers<[1], [0], [0], [1], [0, 0, 1, 1], [], []>} : vector<8x128xbf16>, vector<128x512xbf16>, vector<8x512xf32> -> vector<8x512xf32>
    %16 = arith.addf %12, %15 : vector<8x512xf32>
    %17 = vector.extract_strided_slice %16 {offsets = [0, 0], sizes = [8, 384], strides = [1, 1]} : vector<8x512xf32> to vector<8x384xf32>
    %18 = arith.negf %17 : vector<8x384xf32>
    %19 = math.exp %18 : vector<8x384xf32>
    %cst_15 = arith.constant 1.000000e+00 : f32
    %20 = vector.broadcast %cst_15 : f32 to vector<8x384xf32>
    %21 = arith.addf %20, %19 : vector<8x384xf32>
    %22 = arith.divf %20, %21 : vector<8x384xf32>
    %23 = vector.extract_strided_slice %16 {offsets = [0, 384], sizes = [8, 128], strides = [1, 1]} : vector<8x512xf32> to vector<8x128xf32>
    %24 = math.tanh %23 : vector<8x128xf32>
    %25 = vector.extract_strided_slice %22 {offsets = [0, 0], sizes = [8, 128], strides = [1, 1]} : vector<8x384xf32> to vector<8x128xf32>
    %26 = vector.extract_strided_slice %22 {offsets = [0, 128], sizes = [8, 128], strides = [1, 1]} : vector<8x384xf32> to vector<8x128xf32>
    %27 = vector.extract_strided_slice %22 {offsets = [0, 256], sizes = [8, 128], strides = [1, 1]} : vector<8x384xf32> to vector<8x128xf32>
    %28 = arith.mulf %26, %11 : vector<8x128xf32>
    %29 = arith.mulf %25, %24 : vector<8x128xf32>
    %30 = arith.addf %28, %29 : vector<8x128xf32>
    %31 = math.tanh %30 : vector<8x128xf32>
    %32 = arith.mulf %27, %31 : vector<8x128xf32>
    %33 = tpu.concatenate %32, %11 in 1 : vector<8x128xf32>, vector<8x128xf32> -> vector<8x256xf32>
    %34 = arith.truncf %33 : vector<8x256xf32> to vector<8x256xbf16>
    %c0_16 = arith.constant 0 : index
    %c0_17 = arith.constant 0 : index
    %35 = vector.load %arg4[%c0_16, %c0_17] : memref<256x512xbf16, #tpu.memory_space<vmem>>, vector<256x512xbf16>
    %cst_18 = arith.constant dense<0.000000e+00> : vector<8x512xf32>
    %36 = tpu.matmul %34, %35, %cst_18 {dimension_numbers = #tpu.dot_dimension_numbers<[1], [0], [0], [1], [0, 0, 1, 1], [], []>} : vector<8x256xbf16>, vector<256x512xbf16>, vector<8x512xf32> -> vector<8x512xf32>
    %37 = arith.addf %36, %10 : vector<8x512xf32>
    %38 = vector.extract_strided_slice %37 {offsets = [0, 0], sizes = [8, 384], strides = [1, 1]} : vector<8x512xf32> to vector<8x384xf32>
    %39 = arith.negf %38 : vector<8x384xf32>
    %40 = math.exp %39 : vector<8x384xf32>
    %cst_19 = arith.constant 1.000000e+00 : f32
    %41 = vector.broadcast %cst_19 : f32 to vector<8x384xf32>
    %42 = arith.addf %41, %40 : vector<8x384xf32>
    %43 = arith.divf %41, %42 : vector<8x384xf32>
    %44 = vector.extract_strided_slice %37 {offsets = [0, 384], sizes = [8, 128], strides = [1, 1]} : vector<8x512xf32> to vector<8x128xf32>
    %45 = math.tanh %44 : vector<8x128xf32>
    %46 = vector.extract_strided_slice %43 {offsets = [0, 0], sizes = [8, 128], strides = [1, 1]} : vector<8x384xf32> to vector<8x128xf32>
    %47 = vector.extract_strided_slice %43 {offsets = [0, 128], sizes = [8, 128], strides = [1, 1]} : vector<8x384xf32> to vector<8x128xf32>
    %48 = vector.extract_strided_slice %43 {offsets = [0, 256], sizes = [8, 128], strides = [1, 1]} : vector<8x384xf32> to vector<8x128xf32>
    %49 = arith.mulf %47, %11 : vector<8x128xf32>
    %50 = arith.mulf %46, %45 : vector<8x128xf32>
    %51 = arith.addf %49, %50 : vector<8x128xf32>
    %52 = math.tanh %51 : vector<8x128xf32>
    %53 = arith.mulf %48, %52 : vector<8x128xf32>
    %c8 = arith.constant 8 : index
    %c0_20 = arith.constant 0 : index
    %54 = vector.load %arg9[%c8, %c0_20] : memref<64x512xf32, #tpu.memory_space<vmem>>, vector<8x512xf32>
    %55 = arith.truncf %32 : vector<8x128xf32> to vector<8x128xbf16>
    %c0_21 = arith.constant 0 : index
    %c0_22 = arith.constant 0 : index
    %56 = vector.load %arg2[%c0_21, %c0_22] : memref<128x512xbf16, #tpu.memory_space<vmem>>, vector<128x512xbf16>
    %cst_23 = arith.constant dense<0.000000e+00> : vector<8x512xf32>
    %57 = tpu.matmul %55, %56, %cst_23 {dimension_numbers = #tpu.dot_dimension_numbers<[1], [0], [0], [1], [0, 0, 1, 1], [], []>} : vector<8x128xbf16>, vector<128x512xbf16>, vector<8x512xf32> -> vector<8x512xf32>
    %58 = arith.addf %54, %57 : vector<8x512xf32>
    %59 = vector.extract_strided_slice %58 {offsets = [0, 0], sizes = [8, 384], strides = [1, 1]} : vector<8x512xf32> to vector<8x384xf32>
    %60 = arith.negf %59 : vector<8x384xf32>
    %61 = math.exp %60 : vector<8x384xf32>
    %cst_24 = arith.constant 1.000000e+00 : f32
    %62 = vector.broadcast %cst_24 : f32 to vector<8x384xf32>
    %63 = arith.addf %62, %61 : vector<8x384xf32>
    %64 = arith.divf %62, %63 : vector<8x384xf32>
    %65 = vector.extract_strided_slice %58 {offsets = [0, 384], sizes = [8, 128], strides = [1, 1]} : vector<8x512xf32> to vector<8x128xf32>
    %66 = math.tanh %65 : vector<8x128xf32>
    %67 = vector.extract_strided_slice %64 {offsets = [0, 0], sizes = [8, 128], strides = [1, 1]} : vector<8x384xf32> to vector<8x128xf32>
    %68 = vector.extract_strided_slice %64 {offsets = [0, 128], sizes = [8, 128], strides = [1, 1]} : vector<8x384xf32> to vector<8x128xf32>
    %69 = vector.extract_strided_slice %64 {offsets = [0, 256], sizes = [8, 128], strides = [1, 1]} : vector<8x384xf32> to vector<8x128xf32>
    %70 = arith.mulf %68, %30 : vector<8x128xf32>
    %71 = arith.mulf %67, %66 : vector<8x128xf32>
    %72 = arith.addf %70, %71 : vector<8x128xf32>
    %73 = math.tanh %72 : vector<8x128xf32>
    %74 = arith.mulf %69, %73 : vector<8x128xf32>
    %75 = tpu.concatenate %74, %53 in 1 : vector<8x128xf32>, vector<8x128xf32> -> vector<8x256xf32>
    %76 = arith.truncf %75 : vector<8x256xf32> to vector<8x256xbf16>
    %c0_25 = arith.constant 0 : index
    %c0_26 = arith.constant 0 : index
    %77 = vector.load %arg4[%c0_25, %c0_26] : memref<256x512xbf16, #tpu.memory_space<vmem>>, vector<256x512xbf16>
    %cst_27 = arith.constant dense<0.000000e+00> : vector<8x512xf32>
    %78 = tpu.matmul %76, %77, %cst_27 {dimension_numbers = #tpu.dot_dimension_numbers<[1], [0], [0], [1], [0, 0, 1, 1], [], []>} : vector<8x256xbf16>, vector<256x512xbf16>, vector<8x512xf32> -> vector<8x512xf32>
    %79 = arith.addf %78, %10 : vector<8x512xf32>
    %80 = vector.extract_strided_slice %79 {offsets = [0, 0], sizes = [8, 384], strides = [1, 1]} : vector<8x512xf32> to vector<8x384xf32>
    %81 = arith.negf %80 : vector<8x384xf32>
    %82 = math.exp %81 : vector<8x384xf32>
    %cst_28 = arith.constant 1.000000e+00 : f32
    %83 = vector.broadcast %cst_28 : f32 to vector<8x384xf32>
    %84 = arith.addf %83, %82 : vector<8x384xf32>
    %85 = arith.divf %83, %84 : vector<8x384xf32>
    %86 = vector.extract_strided_slice %79 {offsets = [0, 384], sizes = [8, 128], strides = [1, 1]} : vector<8x512xf32> to vector<8x128xf32>
    %87 = math.tanh %86 : vector<8x128xf32>
    %88 = vector.extract_strided_slice %85 {offsets = [0, 0], sizes = [8, 128], strides = [1, 1]} : vector<8x384xf32> to vector<8x128xf32>
    %89 = vector.extract_strided_slice %85 {offsets = [0, 128], sizes = [8, 128], strides = [1, 1]} : vector<8x384xf32> to vector<8x128xf32>
    %90 = vector.extract_strided_slice %85 {offsets = [0, 256], sizes = [8, 128], strides = [1, 1]} : vector<8x384xf32> to vector<8x128xf32>
    %91 = arith.mulf %89, %51 : vector<8x128xf32>
    %92 = arith.mulf %88, %87 : vector<8x128xf32>
    %93 = arith.addf %91, %92 : vector<8x128xf32>
    %94 = math.tanh %93 : vector<8x128xf32>
    %95 = arith.mulf %90, %94 : vector<8x128xf32>
    %c16 = arith.constant 16 : index
    %c0_29 = arith.constant 0 : index
    %96 = vector.load %arg9[%c16, %c0_29] : memref<64x512xf32, #tpu.memory_space<vmem>>, vector<8x512xf32>
    %97 = arith.truncf %74 : vector<8x128xf32> to vector<8x128xbf16>
    %c0_30 = arith.constant 0 : index
    %c0_31 = arith.constant 0 : index
    %98 = vector.load %arg2[%c0_30, %c0_31] : memref<128x512xbf16, #tpu.memory_space<vmem>>, vector<128x512xbf16>
    %cst_32 = arith.constant dense<0.000000e+00> : vector<8x512xf32>
    %99 = tpu.matmul %97, %98, %cst_32 {dimension_numbers = #tpu.dot_dimension_numbers<[1], [0], [0], [1], [0, 0, 1, 1], [], []>} : vector<8x128xbf16>, vector<128x512xbf16>, vector<8x512xf32> -> vector<8x512xf32>
    %100 = arith.addf %96, %99 : vector<8x512xf32>
    %101 = vector.extract_strided_slice %100 {offsets = [0, 0], sizes = [8, 384], strides = [1, 1]} : vector<8x512xf32> to vector<8x384xf32>
    %102 = arith.negf %101 : vector<8x384xf32>
    %103 = math.exp %102 : vector<8x384xf32>
    %cst_33 = arith.constant 1.000000e+00 : f32
    %104 = vector.broadcast %cst_33 : f32 to vector<8x384xf32>
    %105 = arith.addf %104, %103 : vector<8x384xf32>
    %106 = arith.divf %104, %105 : vector<8x384xf32>
    %107 = vector.extract_strided_slice %100 {offsets = [0, 384], sizes = [8, 128], strides = [1, 1]} : vector<8x512xf32> to vector<8x128xf32>
    %108 = math.tanh %107 : vector<8x128xf32>
    %109 = vector.extract_strided_slice %106 {offsets = [0, 0], sizes = [8, 128], strides = [1, 1]} : vector<8x384xf32> to vector<8x128xf32>
    %110 = vector.extract_strided_slice %106 {offsets = [0, 128], sizes = [8, 128], strides = [1, 1]} : vector<8x384xf32> to vector<8x128xf32>
    %111 = vector.extract_strided_slice %106 {offsets = [0, 256], sizes = [8, 128], strides = [1, 1]} : vector<8x384xf32> to vector<8x128xf32>
    %112 = arith.mulf %110, %72 : vector<8x128xf32>
    %113 = arith.mulf %109, %108 : vector<8x128xf32>
    %114 = arith.addf %112, %113 : vector<8x128xf32>
    %115 = math.tanh %114 : vector<8x128xf32>
    %116 = arith.mulf %111, %115 : vector<8x128xf32>
    %117 = tpu.concatenate %116, %95 in 1 : vector<8x128xf32>, vector<8x128xf32> -> vector<8x256xf32>
    %118 = arith.truncf %117 : vector<8x256xf32> to vector<8x256xbf16>
    %c0_34 = arith.constant 0 : index
    %c0_35 = arith.constant 0 : index
    %119 = vector.load %arg4[%c0_34, %c0_35] : memref<256x512xbf16, #tpu.memory_space<vmem>>, vector<256x512xbf16>
    %cst_36 = arith.constant dense<0.000000e+00> : vector<8x512xf32>
    %120 = tpu.matmul %118, %119, %cst_36 {dimension_numbers = #tpu.dot_dimension_numbers<[1], [0], [0], [1], [0, 0, 1, 1], [], []>} : vector<8x256xbf16>, vector<256x512xbf16>, vector<8x512xf32> -> vector<8x512xf32>
    %121 = arith.addf %120, %10 : vector<8x512xf32>
    %122 = vector.extract_strided_slice %121 {offsets = [0, 0], sizes = [8, 384], strides = [1, 1]} : vector<8x512xf32> to vector<8x384xf32>
    %123 = arith.negf %122 : vector<8x384xf32>
    %124 = math.exp %123 : vector<8x384xf32>
    %cst_37 = arith.constant 1.000000e+00 : f32
    %125 = vector.broadcast %cst_37 : f32 to vector<8x384xf32>
    %126 = arith.addf %125, %124 : vector<8x384xf32>
    %127 = arith.divf %125, %126 : vector<8x384xf32>
    %128 = vector.extract_strided_slice %121 {offsets = [0, 384], sizes = [8, 128], strides = [1, 1]} : vector<8x512xf32> to vector<8x128xf32>
    %129 = math.tanh %128 : vector<8x128xf32>
    %130 = vector.extract_strided_slice %127 {offsets = [0, 0], sizes = [8, 128], strides = [1, 1]} : vector<8x384xf32> to vector<8x128xf32>
    %131 = vector.extract_strided_slice %127 {offsets = [0, 128], sizes = [8, 128], strides = [1, 1]} : vector<8x384xf32> to vector<8x128xf32>
    %132 = vector.extract_strided_slice %127 {offsets = [0, 256], sizes = [8, 128], strides = [1, 1]} : vector<8x384xf32> to vector<8x128xf32>
    %133 = arith.mulf %131, %93 : vector<8x128xf32>
    %134 = arith.mulf %130, %129 : vector<8x128xf32>
    %135 = arith.addf %133, %134 : vector<8x128xf32>
    %136 = math.tanh %135 : vector<8x128xf32>
    %137 = arith.mulf %132, %136 : vector<8x128xf32>
    %c24 = arith.constant 24 : index
    %c0_38 = arith.constant 0 : index
    %138 = vector.load %arg9[%c24, %c0_38] : memref<64x512xf32, #tpu.memory_space<vmem>>, vector<8x512xf32>
    %139 = arith.truncf %116 : vector<8x128xf32> to vector<8x128xbf16>
    %c0_39 = arith.constant 0 : index
    %c0_40 = arith.constant 0 : index
    %140 = vector.load %arg2[%c0_39, %c0_40] : memref<128x512xbf16, #tpu.memory_space<vmem>>, vector<128x512xbf16>
    %cst_41 = arith.constant dense<0.000000e+00> : vector<8x512xf32>
    %141 = tpu.matmul %139, %140, %cst_41 {dimension_numbers = #tpu.dot_dimension_numbers<[1], [0], [0], [1], [0, 0, 1, 1], [], []>} : vector<8x128xbf16>, vector<128x512xbf16>, vector<8x512xf32> -> vector<8x512xf32>
    %142 = arith.addf %138, %141 : vector<8x512xf32>
    %143 = vector.extract_strided_slice %142 {offsets = [0, 0], sizes = [8, 384], strides = [1, 1]} : vector<8x512xf32> to vector<8x384xf32>
    %144 = arith.negf %143 : vector<8x384xf32>
    %145 = math.exp %144 : vector<8x384xf32>
    %cst_42 = arith.constant 1.000000e+00 : f32
    %146 = vector.broadcast %cst_42 : f32 to vector<8x384xf32>
    %147 = arith.addf %146, %145 : vector<8x384xf32>
    %148 = arith.divf %146, %147 : vector<8x384xf32>
    %149 = vector.extract_strided_slice %142 {offsets = [0, 384], sizes = [8, 128], strides = [1, 1]} : vector<8x512xf32> to vector<8x128xf32>
    %150 = math.tanh %149 : vector<8x128xf32>
    %151 = vector.extract_strided_slice %148 {offsets = [0, 0], sizes = [8, 128], strides = [1, 1]} : vector<8x384xf32> to vector<8x128xf32>
    %152 = vector.extract_strided_slice %148 {offsets = [0, 128], sizes = [8, 128], strides = [1, 1]} : vector<8x384xf32> to vector<8x128xf32>
    %153 = vector.extract_strided_slice %148 {offsets = [0, 256], sizes = [8, 128], strides = [1, 1]} : vector<8x384xf32> to vector<8x128xf32>
    %154 = arith.mulf %152, %114 : vector<8x128xf32>
    %155 = arith.mulf %151, %150 : vector<8x128xf32>
    %156 = arith.addf %154, %155 : vector<8x128xf32>
    %157 = math.tanh %156 : vector<8x128xf32>
    %158 = arith.mulf %153, %157 : vector<8x128xf32>
    %159 = tpu.concatenate %158, %137 in 1 : vector<8x128xf32>, vector<8x128xf32> -> vector<8x256xf32>
    %160 = arith.truncf %159 : vector<8x256xf32> to vector<8x256xbf16>
    %c0_43 = arith.constant 0 : index
    %c0_44 = arith.constant 0 : index
    %161 = vector.load %arg4[%c0_43, %c0_44] : memref<256x512xbf16, #tpu.memory_space<vmem>>, vector<256x512xbf16>
    %cst_45 = arith.constant dense<0.000000e+00> : vector<8x512xf32>
    %162 = tpu.matmul %160, %161, %cst_45 {dimension_numbers = #tpu.dot_dimension_numbers<[1], [0], [0], [1], [0, 0, 1, 1], [], []>} : vector<8x256xbf16>, vector<256x512xbf16>, vector<8x512xf32> -> vector<8x512xf32>
    %163 = arith.addf %162, %10 : vector<8x512xf32>
    %164 = vector.extract_strided_slice %163 {offsets = [0, 0], sizes = [8, 384], strides = [1, 1]} : vector<8x512xf32> to vector<8x384xf32>
    %165 = arith.negf %164 : vector<8x384xf32>
    %166 = math.exp %165 : vector<8x384xf32>
    %cst_46 = arith.constant 1.000000e+00 : f32
    %167 = vector.broadcast %cst_46 : f32 to vector<8x384xf32>
    %168 = arith.addf %167, %166 : vector<8x384xf32>
    %169 = arith.divf %167, %168 : vector<8x384xf32>
    %170 = vector.extract_strided_slice %163 {offsets = [0, 384], sizes = [8, 128], strides = [1, 1]} : vector<8x512xf32> to vector<8x128xf32>
    %171 = math.tanh %170 : vector<8x128xf32>
    %172 = vector.extract_strided_slice %169 {offsets = [0, 0], sizes = [8, 128], strides = [1, 1]} : vector<8x384xf32> to vector<8x128xf32>
    %173 = vector.extract_strided_slice %169 {offsets = [0, 128], sizes = [8, 128], strides = [1, 1]} : vector<8x384xf32> to vector<8x128xf32>
    %174 = vector.extract_strided_slice %169 {offsets = [0, 256], sizes = [8, 128], strides = [1, 1]} : vector<8x384xf32> to vector<8x128xf32>
    %175 = arith.mulf %173, %135 : vector<8x128xf32>
    %176 = arith.mulf %172, %171 : vector<8x128xf32>
    %177 = arith.addf %175, %176 : vector<8x128xf32>
    %178 = math.tanh %177 : vector<8x128xf32>
    %179 = arith.mulf %174, %178 : vector<8x128xf32>
    %c32 = arith.constant 32 : index
    %c0_47 = arith.constant 0 : index
    %180 = vector.load %arg9[%c32, %c0_47] : memref<64x512xf32, #tpu.memory_space<vmem>>, vector<8x512xf32>
    %181 = arith.truncf %158 : vector<8x128xf32> to vector<8x128xbf16>
    %c0_48 = arith.constant 0 : index
    %c0_49 = arith.constant 0 : index
    %182 = vector.load %arg2[%c0_48, %c0_49] : memref<128x512xbf16, #tpu.memory_space<vmem>>, vector<128x512xbf16>
    %cst_50 = arith.constant dense<0.000000e+00> : vector<8x512xf32>
    %183 = tpu.matmul %181, %182, %cst_50 {dimension_numbers = #tpu.dot_dimension_numbers<[1], [0], [0], [1], [0, 0, 1, 1], [], []>} : vector<8x128xbf16>, vector<128x512xbf16>, vector<8x512xf32> -> vector<8x512xf32>
    %184 = arith.addf %180, %183 : vector<8x512xf32>
    %185 = vector.extract_strided_slice %184 {offsets = [0, 0], sizes = [8, 384], strides = [1, 1]} : vector<8x512xf32> to vector<8x384xf32>
    %186 = arith.negf %185 : vector<8x384xf32>
    %187 = math.exp %186 : vector<8x384xf32>
    %cst_51 = arith.constant 1.000000e+00 : f32
    %188 = vector.broadcast %cst_51 : f32 to vector<8x384xf32>
    %189 = arith.addf %188, %187 : vector<8x384xf32>
    %190 = arith.divf %188, %189 : vector<8x384xf32>
    %191 = vector.extract_strided_slice %184 {offsets = [0, 384], sizes = [8, 128], strides = [1, 1]} : vector<8x512xf32> to vector<8x128xf32>
    %192 = math.tanh %191 : vector<8x128xf32>
    %193 = vector.extract_strided_slice %190 {offsets = [0, 0], sizes = [8, 128], strides = [1, 1]} : vector<8x384xf32> to vector<8x128xf32>
    %194 = vector.extract_strided_slice %190 {offsets = [0, 128], sizes = [8, 128], strides = [1, 1]} : vector<8x384xf32> to vector<8x128xf32>
    %195 = vector.extract_strided_slice %190 {offsets = [0, 256], sizes = [8, 128], strides = [1, 1]} : vector<8x384xf32> to vector<8x128xf32>
    %196 = arith.mulf %194, %156 : vector<8x128xf32>
    %197 = arith.mulf %193, %192 : vector<8x128xf32>
    %198 = arith.addf %196, %197 : vector<8x128xf32>
    %199 = math.tanh %198 : vector<8x128xf32>
    %200 = arith.mulf %195, %199 : vector<8x128xf32>
    %201 = tpu.concatenate %200, %179 in 1 : vector<8x128xf32>, vector<8x128xf32> -> vector<8x256xf32>
    %202 = arith.truncf %201 : vector<8x256xf32> to vector<8x256xbf16>
    %c0_52 = arith.constant 0 : index
    %c0_53 = arith.constant 0 : index
    %203 = vector.load %arg4[%c0_52, %c0_53] : memref<256x512xbf16, #tpu.memory_space<vmem>>, vector<256x512xbf16>
    %cst_54 = arith.constant dense<0.000000e+00> : vector<8x512xf32>
    %204 = tpu.matmul %202, %203, %cst_54 {dimension_numbers = #tpu.dot_dimension_numbers<[1], [0], [0], [1], [0, 0, 1, 1], [], []>} : vector<8x256xbf16>, vector<256x512xbf16>, vector<8x512xf32> -> vector<8x512xf32>
    %205 = arith.addf %204, %10 : vector<8x512xf32>
    %206 = vector.extract_strided_slice %205 {offsets = [0, 0], sizes = [8, 384], strides = [1, 1]} : vector<8x512xf32> to vector<8x384xf32>
    %207 = arith.negf %206 : vector<8x384xf32>
    %208 = math.exp %207 : vector<8x384xf32>
    %cst_55 = arith.constant 1.000000e+00 : f32
    %209 = vector.broadcast %cst_55 : f32 to vector<8x384xf32>
    %210 = arith.addf %209, %208 : vector<8x384xf32>
    %211 = arith.divf %209, %210 : vector<8x384xf32>
    %212 = vector.extract_strided_slice %205 {offsets = [0, 384], sizes = [8, 128], strides = [1, 1]} : vector<8x512xf32> to vector<8x128xf32>
    %213 = math.tanh %212 : vector<8x128xf32>
    %214 = vector.extract_strided_slice %211 {offsets = [0, 0], sizes = [8, 128], strides = [1, 1]} : vector<8x384xf32> to vector<8x128xf32>
    %215 = vector.extract_strided_slice %211 {offsets = [0, 128], sizes = [8, 128], strides = [1, 1]} : vector<8x384xf32> to vector<8x128xf32>
    %216 = vector.extract_strided_slice %211 {offsets = [0, 256], sizes = [8, 128], strides = [1, 1]} : vector<8x384xf32> to vector<8x128xf32>
    %217 = arith.mulf %215, %177 : vector<8x128xf32>
    %218 = arith.mulf %214, %213 : vector<8x128xf32>
    %219 = arith.addf %217, %218 : vector<8x128xf32>
    %220 = math.tanh %219 : vector<8x128xf32>
    %221 = arith.mulf %216, %220 : vector<8x128xf32>
    %c40 = arith.constant 40 : index
    %c0_56 = arith.constant 0 : index
    %222 = vector.load %arg9[%c40, %c0_56] : memref<64x512xf32, #tpu.memory_space<vmem>>, vector<8x512xf32>
    %223 = arith.truncf %200 : vector<8x128xf32> to vector<8x128xbf16>
    %c0_57 = arith.constant 0 : index
    %c0_58 = arith.constant 0 : index
    %224 = vector.load %arg2[%c0_57, %c0_58] : memref<128x512xbf16, #tpu.memory_space<vmem>>, vector<128x512xbf16>
    %cst_59 = arith.constant dense<0.000000e+00> : vector<8x512xf32>
    %225 = tpu.matmul %223, %224, %cst_59 {dimension_numbers = #tpu.dot_dimension_numbers<[1], [0], [0], [1], [0, 0, 1, 1], [], []>} : vector<8x128xbf16>, vector<128x512xbf16>, vector<8x512xf32> -> vector<8x512xf32>
    %226 = arith.addf %222, %225 : vector<8x512xf32>
    %227 = vector.extract_strided_slice %226 {offsets = [0, 0], sizes = [8, 384], strides = [1, 1]} : vector<8x512xf32> to vector<8x384xf32>
    %228 = arith.negf %227 : vector<8x384xf32>
    %229 = math.exp %228 : vector<8x384xf32>
    %cst_60 = arith.constant 1.000000e+00 : f32
    %230 = vector.broadcast %cst_60 : f32 to vector<8x384xf32>
    %231 = arith.addf %230, %229 : vector<8x384xf32>
    %232 = arith.divf %230, %231 : vector<8x384xf32>
    %233 = vector.extract_strided_slice %226 {offsets = [0, 384], sizes = [8, 128], strides = [1, 1]} : vector<8x512xf32> to vector<8x128xf32>
    %234 = math.tanh %233 : vector<8x128xf32>
    %235 = vector.extract_strided_slice %232 {offsets = [0, 0], sizes = [8, 128], strides = [1, 1]} : vector<8x384xf32> to vector<8x128xf32>
    %236 = vector.extract_strided_slice %232 {offsets = [0, 128], sizes = [8, 128], strides = [1, 1]} : vector<8x384xf32> to vector<8x128xf32>
    %237 = vector.extract_strided_slice %232 {offsets = [0, 256], sizes = [8, 128], strides = [1, 1]} : vector<8x384xf32> to vector<8x128xf32>
    %238 = arith.mulf %236, %198 : vector<8x128xf32>
    %239 = arith.mulf %235, %234 : vector<8x128xf32>
    %240 = arith.addf %238, %239 : vector<8x128xf32>
    %241 = math.tanh %240 : vector<8x128xf32>
    %242 = arith.mulf %237, %241 : vector<8x128xf32>
    %243 = tpu.concatenate %242, %221 in 1 : vector<8x128xf32>, vector<8x128xf32> -> vector<8x256xf32>
    %244 = arith.truncf %243 : vector<8x256xf32> to vector<8x256xbf16>
    %c0_61 = arith.constant 0 : index
    %c0_62 = arith.constant 0 : index
    %245 = vector.load %arg4[%c0_61, %c0_62] : memref<256x512xbf16, #tpu.memory_space<vmem>>, vector<256x512xbf16>
    %cst_63 = arith.constant dense<0.000000e+00> : vector<8x512xf32>
    %246 = tpu.matmul %244, %245, %cst_63 {dimension_numbers = #tpu.dot_dimension_numbers<[1], [0], [0], [1], [0, 0, 1, 1], [], []>} : vector<8x256xbf16>, vector<256x512xbf16>, vector<8x512xf32> -> vector<8x512xf32>
    %247 = arith.addf %246, %10 : vector<8x512xf32>
    %248 = vector.extract_strided_slice %247 {offsets = [0, 0], sizes = [8, 384], strides = [1, 1]} : vector<8x512xf32> to vector<8x384xf32>
    %249 = arith.negf %248 : vector<8x384xf32>
    %250 = math.exp %249 : vector<8x384xf32>
    %cst_64 = arith.constant 1.000000e+00 : f32
    %251 = vector.broadcast %cst_64 : f32 to vector<8x384xf32>
    %252 = arith.addf %251, %250 : vector<8x384xf32>
    %253 = arith.divf %251, %252 : vector<8x384xf32>
    %254 = vector.extract_strided_slice %247 {offsets = [0, 384], sizes = [8, 128], strides = [1, 1]} : vector<8x512xf32> to vector<8x128xf32>
    %255 = math.tanh %254 : vector<8x128xf32>
    %256 = vector.extract_strided_slice %253 {offsets = [0, 0], sizes = [8, 128], strides = [1, 1]} : vector<8x384xf32> to vector<8x128xf32>
    %257 = vector.extract_strided_slice %253 {offsets = [0, 128], sizes = [8, 128], strides = [1, 1]} : vector<8x384xf32> to vector<8x128xf32>
    %258 = vector.extract_strided_slice %253 {offsets = [0, 256], sizes = [8, 128], strides = [1, 1]} : vector<8x384xf32> to vector<8x128xf32>
    %259 = arith.mulf %257, %219 : vector<8x128xf32>
    %260 = arith.mulf %256, %255 : vector<8x128xf32>
    %261 = arith.addf %259, %260 : vector<8x128xf32>
    %262 = math.tanh %261 : vector<8x128xf32>
    %263 = arith.mulf %258, %262 : vector<8x128xf32>
    %c48 = arith.constant 48 : index
    %c0_65 = arith.constant 0 : index
    %264 = vector.load %arg9[%c48, %c0_65] : memref<64x512xf32, #tpu.memory_space<vmem>>, vector<8x512xf32>
    %265 = arith.truncf %242 : vector<8x128xf32> to vector<8x128xbf16>
    %c0_66 = arith.constant 0 : index
    %c0_67 = arith.constant 0 : index
    %266 = vector.load %arg2[%c0_66, %c0_67] : memref<128x512xbf16, #tpu.memory_space<vmem>>, vector<128x512xbf16>
    %cst_68 = arith.constant dense<0.000000e+00> : vector<8x512xf32>
    %267 = tpu.matmul %265, %266, %cst_68 {dimension_numbers = #tpu.dot_dimension_numbers<[1], [0], [0], [1], [0, 0, 1, 1], [], []>} : vector<8x128xbf16>, vector<128x512xbf16>, vector<8x512xf32> -> vector<8x512xf32>
    %268 = arith.addf %264, %267 : vector<8x512xf32>
    %269 = vector.extract_strided_slice %268 {offsets = [0, 0], sizes = [8, 384], strides = [1, 1]} : vector<8x512xf32> to vector<8x384xf32>
    %270 = arith.negf %269 : vector<8x384xf32>
    %271 = math.exp %270 : vector<8x384xf32>
    %cst_69 = arith.constant 1.000000e+00 : f32
    %272 = vector.broadcast %cst_69 : f32 to vector<8x384xf32>
    %273 = arith.addf %272, %271 : vector<8x384xf32>
    %274 = arith.divf %272, %273 : vector<8x384xf32>
    %275 = vector.extract_strided_slice %268 {offsets = [0, 384], sizes = [8, 128], strides = [1, 1]} : vector<8x512xf32> to vector<8x128xf32>
    %276 = math.tanh %275 : vector<8x128xf32>
    %277 = vector.extract_strided_slice %274 {offsets = [0, 0], sizes = [8, 128], strides = [1, 1]} : vector<8x384xf32> to vector<8x128xf32>
    %278 = vector.extract_strided_slice %274 {offsets = [0, 128], sizes = [8, 128], strides = [1, 1]} : vector<8x384xf32> to vector<8x128xf32>
    %279 = vector.extract_strided_slice %274 {offsets = [0, 256], sizes = [8, 128], strides = [1, 1]} : vector<8x384xf32> to vector<8x128xf32>
    %280 = arith.mulf %278, %240 : vector<8x128xf32>
    %281 = arith.mulf %277, %276 : vector<8x128xf32>
    %282 = arith.addf %280, %281 : vector<8x128xf32>
    %283 = math.tanh %282 : vector<8x128xf32>
    %284 = arith.mulf %279, %283 : vector<8x128xf32>
    %285 = tpu.concatenate %284, %263 in 1 : vector<8x128xf32>, vector<8x128xf32> -> vector<8x256xf32>
    %286 = arith.truncf %285 : vector<8x256xf32> to vector<8x256xbf16>
    %c0_70 = arith.constant 0 : index
    %c0_71 = arith.constant 0 : index
    %287 = vector.load %arg4[%c0_70, %c0_71] : memref<256x512xbf16, #tpu.memory_space<vmem>>, vector<256x512xbf16>
    %cst_72 = arith.constant dense<0.000000e+00> : vector<8x512xf32>
    %288 = tpu.matmul %286, %287, %cst_72 {dimension_numbers = #tpu.dot_dimension_numbers<[1], [0], [0], [1], [0, 0, 1, 1], [], []>} : vector<8x256xbf16>, vector<256x512xbf16>, vector<8x512xf32> -> vector<8x512xf32>
    %289 = arith.addf %288, %10 : vector<8x512xf32>
    %290 = vector.extract_strided_slice %289 {offsets = [0, 0], sizes = [8, 384], strides = [1, 1]} : vector<8x512xf32> to vector<8x384xf32>
    %291 = arith.negf %290 : vector<8x384xf32>
    %292 = math.exp %291 : vector<8x384xf32>
    %cst_73 = arith.constant 1.000000e+00 : f32
    %293 = vector.broadcast %cst_73 : f32 to vector<8x384xf32>
    %294 = arith.addf %293, %292 : vector<8x384xf32>
    %295 = arith.divf %293, %294 : vector<8x384xf32>
    %296 = vector.extract_strided_slice %289 {offsets = [0, 384], sizes = [8, 128], strides = [1, 1]} : vector<8x512xf32> to vector<8x128xf32>
    %297 = math.tanh %296 : vector<8x128xf32>
    %298 = vector.extract_strided_slice %295 {offsets = [0, 0], sizes = [8, 128], strides = [1, 1]} : vector<8x384xf32> to vector<8x128xf32>
    %299 = vector.extract_strided_slice %295 {offsets = [0, 128], sizes = [8, 128], strides = [1, 1]} : vector<8x384xf32> to vector<8x128xf32>
    %300 = vector.extract_strided_slice %295 {offsets = [0, 256], sizes = [8, 128], strides = [1, 1]} : vector<8x384xf32> to vector<8x128xf32>
    %301 = arith.mulf %299, %261 : vector<8x128xf32>
    %302 = arith.mulf %298, %297 : vector<8x128xf32>
    %303 = arith.addf %301, %302 : vector<8x128xf32>
    %304 = math.tanh %303 : vector<8x128xf32>
    %305 = arith.mulf %300, %304 : vector<8x128xf32>
    %c56 = arith.constant 56 : index
    %c0_74 = arith.constant 0 : index
    %306 = vector.load %arg9[%c56, %c0_74] : memref<64x512xf32, #tpu.memory_space<vmem>>, vector<8x512xf32>
    %307 = arith.truncf %284 : vector<8x128xf32> to vector<8x128xbf16>
    %c0_75 = arith.constant 0 : index
    %c0_76 = arith.constant 0 : index
    %308 = vector.load %arg2[%c0_75, %c0_76] : memref<128x512xbf16, #tpu.memory_space<vmem>>, vector<128x512xbf16>
    %cst_77 = arith.constant dense<0.000000e+00> : vector<8x512xf32>
    %309 = tpu.matmul %307, %308, %cst_77 {dimension_numbers = #tpu.dot_dimension_numbers<[1], [0], [0], [1], [0, 0, 1, 1], [], []>} : vector<8x128xbf16>, vector<128x512xbf16>, vector<8x512xf32> -> vector<8x512xf32>
    %310 = arith.addf %306, %309 : vector<8x512xf32>
    %311 = vector.extract_strided_slice %310 {offsets = [0, 0], sizes = [8, 384], strides = [1, 1]} : vector<8x512xf32> to vector<8x384xf32>
    %312 = arith.negf %311 : vector<8x384xf32>
    %313 = math.exp %312 : vector<8x384xf32>
    %cst_78 = arith.constant 1.000000e+00 : f32
    %314 = vector.broadcast %cst_78 : f32 to vector<8x384xf32>
    %315 = arith.addf %314, %313 : vector<8x384xf32>
    %316 = arith.divf %314, %315 : vector<8x384xf32>
    %317 = vector.extract_strided_slice %310 {offsets = [0, 384], sizes = [8, 128], strides = [1, 1]} : vector<8x512xf32> to vector<8x128xf32>
    %318 = math.tanh %317 : vector<8x128xf32>
    %319 = vector.extract_strided_slice %316 {offsets = [0, 0], sizes = [8, 128], strides = [1, 1]} : vector<8x384xf32> to vector<8x128xf32>
    %320 = vector.extract_strided_slice %316 {offsets = [0, 128], sizes = [8, 128], strides = [1, 1]} : vector<8x384xf32> to vector<8x128xf32>
    %321 = vector.extract_strided_slice %316 {offsets = [0, 256], sizes = [8, 128], strides = [1, 1]} : vector<8x384xf32> to vector<8x128xf32>
    %322 = arith.mulf %320, %282 : vector<8x128xf32>
    %323 = arith.mulf %319, %318 : vector<8x128xf32>
    %324 = arith.addf %322, %323 : vector<8x128xf32>
    %325 = math.tanh %324 : vector<8x128xf32>
    %326 = arith.mulf %321, %325 : vector<8x128xf32>
    %327 = tpu.concatenate %326, %305 in 1 : vector<8x128xf32>, vector<8x128xf32> -> vector<8x256xf32>
    %328 = arith.truncf %327 : vector<8x256xf32> to vector<8x256xbf16>
    %c0_79 = arith.constant 0 : index
    %c0_80 = arith.constant 0 : index
    %329 = vector.load %arg4[%c0_79, %c0_80] : memref<256x512xbf16, #tpu.memory_space<vmem>>, vector<256x512xbf16>
    %cst_81 = arith.constant dense<0.000000e+00> : vector<8x512xf32>
    %330 = tpu.matmul %328, %329, %cst_81 {dimension_numbers = #tpu.dot_dimension_numbers<[1], [0], [0], [1], [0, 0, 1, 1], [], []>} : vector<8x256xbf16>, vector<256x512xbf16>, vector<8x512xf32> -> vector<8x512xf32>
    %331 = arith.addf %330, %10 : vector<8x512xf32>
    %332 = vector.extract_strided_slice %331 {offsets = [0, 0], sizes = [8, 384], strides = [1, 1]} : vector<8x512xf32> to vector<8x384xf32>
    %333 = arith.negf %332 : vector<8x384xf32>
    %334 = math.exp %333 : vector<8x384xf32>
    %cst_82 = arith.constant 1.000000e+00 : f32
    %335 = vector.broadcast %cst_82 : f32 to vector<8x384xf32>
    %336 = arith.addf %335, %334 : vector<8x384xf32>
    %337 = arith.divf %335, %336 : vector<8x384xf32>
    %338 = vector.extract_strided_slice %331 {offsets = [0, 384], sizes = [8, 128], strides = [1, 1]} : vector<8x512xf32> to vector<8x128xf32>
    %339 = math.tanh %338 : vector<8x128xf32>
    %340 = vector.extract_strided_slice %337 {offsets = [0, 0], sizes = [8, 128], strides = [1, 1]} : vector<8x384xf32> to vector<8x128xf32>
    %341 = vector.extract_strided_slice %337 {offsets = [0, 128], sizes = [8, 128], strides = [1, 1]} : vector<8x384xf32> to vector<8x128xf32>
    %342 = vector.extract_strided_slice %337 {offsets = [0, 256], sizes = [8, 128], strides = [1, 1]} : vector<8x384xf32> to vector<8x128xf32>
    %343 = arith.mulf %341, %303 : vector<8x128xf32>
    %344 = arith.mulf %340, %339 : vector<8x128xf32>
    %345 = arith.addf %343, %344 : vector<8x128xf32>
    %346 = math.tanh %345 : vector<8x128xf32>
    %347 = arith.mulf %342, %346 : vector<8x128xf32>
    %348 = arith.truncf %347 : vector<8x128xf32> to vector<8x128xbf16>
    %c0_83 = arith.constant 0 : index
    %c0_84 = arith.constant 0 : index
    %349 = vector.load %arg6[%c0_83, %c0_84] : memref<128x128xbf16, #tpu.memory_space<vmem>>, vector<128x128xbf16>
    %cst_85 = arith.constant dense<0.000000e+00> : vector<8x128xf32>
    %350 = tpu.matmul %348, %349, %cst_85 {dimension_numbers = #tpu.dot_dimension_numbers<[1], [0], [0], [1], [0, 0, 1, 1], [], []>} : vector<8x128xbf16>, vector<128x128xbf16>, vector<8x128xf32> -> vector<8x128xf32>
    %c0_86 = arith.constant 0 : index
    %c0_87 = arith.constant 0 : index
    %351 = vector.load %arg7[%c0_86, %c0_87] : memref<1x128xf32, #tpu.memory_space<vmem>>, vector<1x128xf32>
    %352 = vector.broadcast %351 : vector<1x128xf32> to vector<8x128xf32>
    %353 = arith.addf %350, %352 : vector<8x128xf32>
    %c0_88 = arith.constant 0 : index
    %c0_89 = arith.constant 0 : index
    %354 = vector.load %arg8[%c0_88, %c0_89] : memref<8x128xf32, #tpu.memory_space<vmem>>, vector<8x128xf32>
    tpu.vector_store %arg8[%c0_88, %c0_89], %353 {strides = array<i32>} : memref<8x128xf32, #tpu.memory_space<vmem>>, vector<8x128xf32>,
    return
  }
}

</mosaic_0001>

<llo_original>
// kernel: tpu_custom_call.1
$region0: #{tpu_custom_call.1}
  #allocation0 [shape = 'u32[]', space=smem, size = 0x4, offset = 0x4, fixed_abs, tag = 'smem constant byte address 0x4 - core index']
  #allocation1 [shape = 'u32[144,128]{1,0:T(1,128)}', space=vmem, size = 0x12000, scoped, tag = 'internal scratch']
  #allocation2 [shape = 'f32[64,512]{1,0:T(8,128)}', space=vmem, size = 0x20000, scoped, tag = 'scratch operand']
  %s0 = inlined_call_operand.vmem [shape: f32[64,16], index: 0, kind: input, shape index: {}]
  %s1 = inlined_call_operand.hbm [shape: bf16[16,512], index: 1, kind: input, shape index: {}]
  %s2 = inlined_call_operand.hbm [shape: bf16[128,512], index: 2, kind: input, shape index: {}]
  %s3 = inlined_call_operand.vmem [shape: f32[1,512], index: 3, kind: input, shape index: {}]
  %s4 = inlined_call_operand.hbm [shape: bf16[256,512], index: 4, kind: input, shape index: {}]
  %s5 = inlined_call_operand.vmem [shape: f32[1,512], index: 5, kind: input, shape index: {}]
  %s6 = inlined_call_operand.vmem [shape: bf16[128,128], index: 6, kind: input, shape index: {}]
  %s7 = inlined_call_operand.vmem [shape: f32[1,128], index: 7, kind: input, shape index: {}]
  %s8 = inlined_call_operand.hbm [shape: f32[8,128], index: 8, kind: output, shape index: {}]
  %s9 = sld [smem:[#allocation0]]
  $region54: #{tpu_custom_call.1} parent=0
    _
  %s11 = ssub.s32 1, %s9
  %s12 = scalar_select 0, %s11, %s9
  $region1: #{tpu_custom_call.1} parent=0
    #allocation3 [shape = 'u8[16384]{0}', space=vmem, size = 0x4000, scoped, tag = 'input window, operand 1, single buffered']
    #allocation4 [shape = 's32[1]{0}', space=sflag, size = 0x4, scoped, tag = 'scoped memory for tpu_custom_call.1']
    #allocation5 [shape = 's32[1]{0}', space=sflag, size = 0x4, scoped, tag = 'scoped memory for tpu_custom_call.1']
    #allocation6 [shape = 'u8[131072]{0}', space=vmem, size = 0x20000, scoped, tag = 'input window, operand 2, single buffered']
    #allocation7 [shape = 's32[1]{0}', space=sflag, size = 0x4, scoped, tag = 'scoped memory for tpu_custom_call.1']
    #allocation8 [shape = 'u8[262144]{0}', space=vmem, size = 0x40000, scoped, tag = 'input window, operand 4, single buffered']
    #allocation9 [shape = 'u8[4096]{0}', space=vmem, size = 0x1000, scoped, tag = 'output window, operand 0, single buffered']
    %13 = vsyncpa [#allocation4], 0
    %14 = vsyncpa [#allocation7], 0
    %15 = vsyncpa [#allocation5], 0
    // Predicated region
    $region2: #{tpu_custom_call.1} parent=1 // pred_check
      _
    $region3: #{tpu_custom_call.1} parent=1 // pred_check_branch
      %17 = sbr.rel (0) target = $region5
    $region4: #{tpu_custom_call.1} parent=1 // pred_region
      _
    $region5: #{tpu_custom_call.1} parent=1 // pred_fallthru
      _
    // Predicated region
    $region6: #{tpu_custom_call.1} parent=1 // pred_check
      _
    $region7: #{tpu_custom_call.1} parent=1 // pred_check_branch
      %19 = sbr.rel (0) target = $region9
    $region8: #{tpu_custom_call.1} parent=1 // pred_region
      %s21 = ssub.s32 512, 512
      %22 = vsyncadd [#allocation4], %s21
      %s23 = sshll.u32 [#allocation3], 4
      %s24 = int_to_ptr.vmem [resolvable:$true] %s23
      %29 = dma.hbm_to_vmem [thread:$0]  %s1, 512, %s24, [#allocation4], 256, 256, 16
    $region9: #{tpu_custom_call.1} parent=1 // pred_fallthru
      _
    // Predicated region
    $region10: #{tpu_custom_call.1} parent=1 // pred_check
      _
    $region11: #{tpu_custom_call.1} parent=1 // pred_check_branch
      %31 = sbr.rel (0) target = $region13
    $region12: #{tpu_custom_call.1} parent=1 // pred_region
      %s33 = ssub.s32 4096, 4096
      %34 = vsyncadd [#allocation7], %s33
      %s35 = sshll.u32 [#allocation6], 4
      %s36 = int_to_ptr.vmem [resolvable:$true] %s35
      %41 = dma.hbm_to_vmem [thread:$0]  %s2, 4096, %s36, [#allocation7], 256, 256, 16
    $region13: #{tpu_custom_call.1} parent=1 // pred_fallthru
      _
    // Predicated region
    $region14: #{tpu_custom_call.1} parent=1 // pred_check
      _
    $region15: #{tpu_custom_call.1} parent=1 // pred_check_branch
      %43 = sbr.rel (0) target = $region17
    $region16: #{tpu_custom_call.1} parent=1 // pred_region
      _
    $region17: #{tpu_custom_call.1} parent=1 // pred_fallthru
      _
    // Predicated region
    $region18: #{tpu_custom_call.1} parent=1 // pred_check
      _
    $region19: #{tpu_custom_call.1} parent=1 // pred_check_branch
      %45 = sbr.rel (0) target = $region21
    $region20: #{tpu_custom_call.1} parent=1 // pred_region
      %s47 = ssub.s32 8192, 8192
      %48 = vsyncadd [#allocation7], %s47
      %s49 = sshll.u32 [#allocation8], 4
      %s50 = int_to_ptr.vmem [resolvable:$true] %s49
      %55 = dma.hbm_to_vmem [thread:$0]  %s4, 8192, %s50, [#allocation7], 256, 256, 16
    $region21: #{tpu_custom_call.1} parent=1 // pred_fallthru
      _
    // Predicated region
    $region22: #{tpu_custom_call.1} parent=1 // pred_check
      _
    $region23: #{tpu_custom_call.1} parent=1 // pred_check_branch
      %57 = sbr.rel (0) target = $region25
    $region24: #{tpu_custom_call.1} parent=1 // pred_region
      _
    $region25: #{tpu_custom_call.1} parent=1 // pred_fallthru
      _
    // Predicated region
    $region26: #{tpu_custom_call.1} parent=1 // pred_check
      _
    $region27: #{tpu_custom_call.1} parent=1 // pred_check_branch
      %59 = sbr.rel (0) target = $region29
    $region28: #{tpu_custom_call.1} parent=1 // pred_region
      _
    $region29: #{tpu_custom_call.1} parent=1 // pred_fallthru
      _
    // Predicated region
    $region30: #{tpu_custom_call.1} parent=1 // pred_check
      _
    $region31: #{tpu_custom_call.1} parent=1 // pred_check_branch
      %61 = sbr.rel (0) target = $region33
    $region32: #{tpu_custom_call.1} parent=1 // pred_region
      _
    $region33: #{tpu_custom_call.1} parent=1 // pred_fallthru
      _
    // Predicated region
    $region34: #{tpu_custom_call.1} parent=1 // pred_check
      _
    $region35: #{tpu_custom_call.1} parent=1 // pred_check_branch
      %63 = sbr.rel (0) target = $region37
    $region36: #{tpu_custom_call.1} parent=1 // pred_region
      %64 = dma.done [#allocation4], 512
    $region37: #{tpu_custom_call.1} parent=1 // pred_fallthru
      _
    // Predicated region
    $region38: #{tpu_custom_call.1} parent=1 // pred_check
      _
    $region39: #{tpu_custom_call.1} parent=1 // pred_check_branch
      %66 = sbr.rel (0) target = $region41
    $region40: #{tpu_custom_call.1} parent=1 // pred_region
      %67 = dma.done [#allocation7], 4096
    $region41: #{tpu_custom_call.1} parent=1 // pred_fallthru
      _
    // Predicated region
    $region42: #{tpu_custom_call.1} parent=1 // pred_check
      _
    $region43: #{tpu_custom_call.1} parent=1 // pred_check_branch
      %69 = sbr.rel (0) target = $region45
    $region44: #{tpu_custom_call.1} parent=1 // pred_region
      %70 = dma.done [#allocation7], 8192
    $region45: #{tpu_custom_call.1} parent=1 // pred_fallthru
      _
    %v72 = vld [vmem:[%s0] sm:$0xff]
    %v73 = vld [vmem:[%s0 + $0x8] sm:$0xff]
    %v74 = vld [vmem:[%s0 + $0x10] sm:$0xff]
    %v75 = vld [vmem:[%s0 + $0x18] sm:$0xff]
    %v76 = vld [vmem:[%s0 + $0x20] sm:$0xff]
    %v77 = vld [vmem:[%s0 + $0x28] sm:$0xff]
    %v78 = vld [vmem:[%s0 + $0x30] sm:$0xff]
    %v79 = vld [vmem:[%s0 + $0x38] sm:$0xff]
    %v80 = vpack.c.bf16 %v73, %v72
    %v81 = vpack.c.bf16 %v75, %v74
    %v82 = vpack.c.bf16 %v77, %v76
    %v83 = vpack.c.bf16 %v79, %v78
    %v84 = vld [vmem:[#allocation3] sm:$0xff]
    %v85 = vld [vmem:[#allocation3 + $0x8] sm:$0xff]
    %v86 = vld [vmem:[#allocation3 + $0x10] sm:$0xff]
    %v87 = vld [vmem:[#allocation3 + $0x18] sm:$0xff]
    %v88 = vld [vmem:[%s3] sm:$0xf]
    %v90 = vlaneseq
    %v91 = vshrl.u32 %v90, 7
    %v92 = vsub.s32 0, %v91
    %v93 = vrot.slane %v88, %v92
    %v94 = vlaneseq
    %v95 = vshrl.u32 %v94, 7
    %v96 = vsub.s32 1, %v95
    %v97 = vrot.slane %v88, %v96
    %v98 = vlaneseq
    %v99 = vshrl.u32 %v98, 7
    %v100 = vsub.s32 2, %v99
    %v101 = vrot.slane %v88, %v100
    %v102 = vlaneseq
    %v103 = vshrl.u32 %v102, 7
    %v104 = vsub.s32 3, %v103
    %v105 = vrot.slane %v88, %v104
    %v114 = vunpack.c.l.b16 %v84
    %v115 = vunpack.c.h.b16 %v84
    %v116 = vunpack.c.l.b16 %v85
    %v117 = vunpack.c.h.b16 %v85
    %v118 = vunpack.c.l.b16 %v86
    %v119 = vunpack.c.h.b16 %v86
    %v120 = vunpack.c.l.b16 %v87
    %v121 = vunpack.c.h.b16 %v87
    %v122 = vpack.c.b16 %v118, %v114
    %v123 = vpack.c.b16 %v119, %v115
    %v124 = vpack.c.b16 %v120, %v116
    %v125 = vpack.c.b16 %v121, %v117
    %vm130 = vcmask 130048
    %v132 = vsel %vm130, %v80, 0
    %v135 = vsel %vm130, %v81, 0
    %v138 = vsel %vm130, %v82, 0
    %v141 = vsel %vm130, %v83, 0
    %143 = vmatprep.subr.bf16.mxu0 0
    %144 = vmatpush1.bf16.msra.mxu0 0
    %145 = vmatprep.subr.bf16.mxu0 0
    %146 = vmatpush1.bf16.msra.mxu0 0
    %147 = vmatprep.subr.bf16.mxu0 0
    %148 = vmatpush1.bf16.msra.mxu0 0
    %149 = vmatprep.subr.bf16.mxu0 0
    %150 = vmatpush1.bf16.msra.mxu0 0
    %151 = vmatprep.subr.bf16.mxu0 0
    %152 = vmatpush1.bf16.msra.mxu0 0
    %153 = vmatprep.subr.bf16.mxu0 0
    %154 = vmatpush1.bf16.msra.mxu0 0
    %155 = vmatprep.subr.bf16.mxu0 0
    %156 = vmatpush1.bf16.msra.mxu0 0
    %157 = vmatprep.subr.bf16.mxu0 %v123
    %158 = vmatpush1.bf16.msra.mxu0 %v122
    %159 = vmatprep.subr.bf16.mxu0 0
    %160 = vmatpush2.bf16.msra.mxu0 0
    %161 = vmatprep.subr.bf16.mxu0 0
    %162 = vmatpush2.bf16.msra.mxu0 0
    %163 = vmatprep.subr.bf16.mxu0 0
    %164 = vmatpush2.bf16.msra.mxu0 0
    %165 = vmatprep.subr.bf16.mxu0 0
    %166 = vmatpush2.bf16.msra.mxu0 0
    %167 = vmatprep.subr.bf16.mxu0 0
    %168 = vmatpush2.bf16.msra.mxu0 0
    %169 = vmatprep.subr.bf16.mxu0 0
    %170 = vmatpush2.bf16.msra.mxu0 0
    %171 = vmatprep.subr.bf16.mxu0 0
    %172 = vmatpush2.bf16.msra.mxu0 0
    %173 = vmatprep.subr.bf16.mxu0 0
    %174 = vmatpush2.bf16.msra.mxu0 0
    %175 = vmatprep.mubr.bf16.mxu0 0
    %176 = vmatmul.mubr.bf16.gmra.mxu0 %v132
    %v177 = vpop.f32.mrf.mxu0
    %v178 = vadd.f32 %v93, %v177
    %v179 = vpop.f32.mrf.mxu0
    %v180 = vadd.f32 %v97, %v179
    %v181 = vpop.f32.mrf.mxu0
    %v182 = vadd.f32 %v93, %v181
    %v183 = vpop.f32.mrf.mxu0
    %v184 = vadd.f32 %v97, %v183
    %185 = vmatprep.mubr.bf16.mxu0 0
    %186 = vmatmul.mubr.bf16.gmra.mxu0 %v135
    %v187 = vpop.f32.mrf.mxu0
    %v188 = vadd.f32 %v93, %v187
    %v189 = vpop.f32.mrf.mxu0
    %v190 = vadd.f32 %v97, %v189
    %v191 = vpop.f32.mrf.mxu0
    %v192 = vadd.f32 %v93, %v191
    %v193 = vpop.f32.mrf.mxu0
    %v194 = vadd.f32 %v97, %v193
    %195 = vmatprep.mubr.bf16.mxu0 0
    %196 = vmatmul.mubr.bf16.gmra.mxu0 %v138
    %v197 = vpop.f32.mrf.mxu0
    %v198 = vadd.f32 %v93, %v197
    %v199 = vpop.f32.mrf.mxu0
    %v200 = vadd.f32 %v97, %v199
    %v201 = vpop.f32.mrf.mxu0
    %v202 = vadd.f32 %v93, %v201
    %v203 = vpop.f32.mrf.mxu0
    %v204 = vadd.f32 %v97, %v203
    %205 = vmatprep.mubr.bf16.mxu0 0
    %206 = vmatmul.mubr.bf16.gmra.mxu0 %v141
    %v207 = vpop.f32.mrf.mxu0
    %v208 = vadd.f32 %v93, %v207
    %v209 = vpop.f32.mrf.mxu0
    %v210 = vadd.f32 %v97, %v209
    %v211 = vpop.f32.mrf.mxu0
    %v212 = vadd.f32 %v93, %v211
    %v213 = vpop.f32.mrf.mxu0
    %v214 = vadd.f32 %v97, %v213
    %215 = vdwg.mxu0
    %216 = vmatprep.subr.bf16.mxu0 0
    %217 = vmatpush1.bf16.msra.mxu0 0
    %218 = vmatprep.subr.bf16.mxu0 0
    %219 = vmatpush1.bf16.msra.mxu0 0
    %220 = vmatprep.subr.bf16.mxu0 0
    %221 = vmatpush1.bf16.msra.mxu0 0
    %222 = vmatprep.subr.bf16.mxu0 0
    %223 = vmatpush1.bf16.msra.mxu0 0
    %224 = vmatprep.subr.bf16.mxu0 0
    %225 = vmatpush1.bf16.msra.mxu0 0
    %226 = vmatprep.subr.bf16.mxu0 0
    %227 = vmatpush1.bf16.msra.mxu0 0
    %228 = vmatprep.subr.bf16.mxu0 0
    %229 = vmatpush1.bf16.msra.mxu0 0
    %230 = vmatprep.subr.bf16.mxu0 %v125
    %231 = vmatpush1.bf16.msra.mxu0 %v124
    %232 = vmatprep.subr.bf16.mxu0 0
    %233 = vmatpush2.bf16.msra.mxu0 0
    %234 = vmatprep.subr.bf16.mxu0 0
    %235 = vmatpush2.bf16.msra.mxu0 0
    %236 = vmatprep.subr.bf16.mxu0 0
    %237 = vmatpush2.bf16.msra.mxu0 0
    %238 = vmatprep.subr.bf16.mxu0 0
    %239 = vmatpush2.bf16.msra.mxu0 0
    %240 = vmatprep.subr.bf16.mxu0 0
    %241 = vmatpush2.bf16.msra.mxu0 0
    %242 = vmatprep.subr.bf16.mxu0 0
    %243 = vmatpush2.bf16.msra.mxu0 0
    %244 = vmatprep.subr.bf16.mxu0 0
    %245 = vmatpush2.bf16.msra.mxu0 0
    %246 = vmatprep.subr.bf16.mxu0 0
    %247 = vmatpush2.bf16.msra.mxu0 0
    %248 = vmatprep.mubr.bf16.mxu0 0
    %249 = vmatmul.mubr.bf16.gmra.mxu0 %v132
    %v250 = vpop.f32.mrf.mxu0
    %v251 = vadd.f32 %v101, %v250
    %v252 = vpop.f32.mrf.mxu0
    %v253 = vadd.f32 %v105, %v252
    %v254 = vpop.f32.mrf.mxu0
    %v255 = vadd.f32 %v101, %v254
    %v256 = vpop.f32.mrf.mxu0
    %v257 = vadd.f32 %v105, %v256
    %258 = vmatprep.mubr.bf16.mxu0 0
    %259 = vmatmul.mubr.bf16.gmra.mxu0 %v135
    %v260 = vpop.f32.mrf.mxu0
    %v261 = vadd.f32 %v101, %v260
    %v262 = vpop.f32.mrf.mxu0
    %v263 = vadd.f32 %v105, %v262
    %v264 = vpop.f32.mrf.mxu0
    %v265 = vadd.f32 %v101, %v264
    %v266 = vpop.f32.mrf.mxu0
    %v267 = vadd.f32 %v105, %v266
    %268 = vmatprep.mubr.bf16.mxu0 0
    %269 = vmatmul.mubr.bf16.gmra.mxu0 %v138
    %v270 = vpop.f32.mrf.mxu0
    %v271 = vadd.f32 %v101, %v270
    %v272 = vpop.f32.mrf.mxu0
    %v273 = vadd.f32 %v105, %v272
    %v274 = vpop.f32.mrf.mxu0
    %v275 = vadd.f32 %v101, %v274
    %v276 = vpop.f32.mrf.mxu0
    %v277 = vadd.f32 %v105, %v276
    %278 = vmatprep.mubr.bf16.mxu0 0
    %279 = vmatmul.mubr.bf16.gmra.mxu0 %v141
    %v280 = vpop.f32.mrf.mxu0
    %v281 = vadd.f32 %v101, %v280
    %v282 = vpop.f32.mrf.mxu0
    %v283 = vadd.f32 %v105, %v282
    %v284 = vpop.f32.mrf.mxu0
    %v285 = vadd.f32 %v101, %v284
    %v286 = vpop.f32.mrf.mxu0
    %v287 = vadd.f32 %v105, %v286
    %288 = vdwg.mxu0
    %289 = vst [vmem:[#allocation2] sm:$0xff] %v178
    %290 = vst [vmem:[#allocation2 + $0x8] sm:$0xff] %v180
    %291 = vst [vmem:[#allocation2 + $0x10] sm:$0xff] %v251
    %292 = vst [vmem:[#allocation2 + $0x18] sm:$0xff] %v253
    %293 = vst [vmem:[#allocation2 + $0x20] sm:$0xff] %v182
    %294 = vst [vmem:[#allocation2 + $0x28] sm:$0xff] %v184
    %295 = vst [vmem:[#allocation2 + $0x30] sm:$0xff] %v255
    %296 = vst [vmem:[#allocation2 + $0x38] sm:$0xff] %v257
    %297 = vst [vmem:[#allocation2 + $0x40] sm:$0xff] %v188
    %298 = vst [vmem:[#allocation2 + $0x48] sm:$0xff] %v190
    %299 = vst [vmem:[#allocation2 + $0x50] sm:$0xff] %v261
    %300 = vst [vmem:[#allocation2 + $0x58] sm:$0xff] %v263
    %301 = vst [vmem:[#allocation2 + $0x60] sm:$0xff] %v192
    %302 = vst [vmem:[#allocation2 + $0x68] sm:$0xff] %v194
    %303 = vst [vmem:[#allocation2 + $0x70] sm:$0xff] %v265
    %304 = vst [vmem:[#allocation2 + $0x78] sm:$0xff] %v267
    %305 = vst [vmem:[#allocation2 + $0x80] sm:$0xff] %v198
    %306 = vst [vmem:[#allocation2 + $0x88] sm:$0xff] %v200
    %307 = vst [vmem:[#allocation2 + $0x90] sm:$0xff] %v271
    %308 = vst [vmem:[#allocation2 + $0x98] sm:$0xff] %v273
    %309 = vst [vmem:[#allocation2 + $0xa0] sm:$0xff] %v202
    %310 = vst [vmem:[#allocation2 + $0xa8] sm:$0xff] %v204
    %311 = vst [vmem:[#allocation2 + $0xb0] sm:$0xff] %v275
    %312 = vst [vmem:[#allocation2 + $0xb8] sm:$0xff] %v277
    %313 = vst [vmem:[#allocation2 + $0xc0] sm:$0xff] %v208
    %314 = vst [vmem:[#allocation2 + $0xc8] sm:$0xff] %v210
    %315 = vst [vmem:[#allocation2 + $0xd0] sm:$0xff] %v281
    %316 = vst [vmem:[#allocation2 + $0xd8] sm:$0xff] %v283
    %317 = vst [vmem:[#allocation2 + $0xe0] sm:$0xff] %v212
    %318 = vst [vmem:[#allocation2 + $0xe8] sm:$0xff] %v214
    %319 = vst [vmem:[#allocation2 + $0xf0] sm:$0xff] %v285
    %320 = vst [vmem:[#allocation2 + $0xf8] sm:$0xff] %v287
    %v321 = vld [vmem:[%s5] sm:$0xf]
    %v323 = vlaneseq
    %v324 = vshrl.u32 %v323, 7
    %v325 = vsub.s32 0, %v324
    %v326 = vrot.slane %v321, %v325
    %v327 = vlaneseq
    %v328 = vshrl.u32 %v327, 7
    %v329 = vsub.s32 1, %v328
    %v330 = vrot.slane %v321, %v329
    %v331 = vlaneseq
    %v332 = vshrl.u32 %v331, 7
    %v333 = vsub.s32 2, %v332
    %v334 = vrot.slane %v321, %v333
    %v335 = vlaneseq
    %v336 = vshrl.u32 %v335, 7
    %v337 = vsub.s32 3, %v336
    %v338 = vrot.slane %v321, %v337
    %v343 = vld [vmem:[#allocation2] sm:$0xff]
    %v344 = vld [vmem:[#allocation2 + $0x8] sm:$0xff]
    %v345 = vld [vmem:[#allocation2 + $0x10] sm:$0xff]
    %v346 = vld [vmem:[#allocation2 + $0x18] sm:$0xff]
    %v347 = vld [vmem:[#allocation6] sm:$0xff]
    %v348 = vld [vmem:[#allocation6 + $0x8] sm:$0xff]
    %v349 = vld [vmem:[#allocation6 + $0x10] sm:$0xff]
    %v350 = vld [vmem:[#allocation6 + $0x18] sm:$0xff]
    %v351 = vld [vmem:[#allocation6 + $0x20] sm:$0xff]
    %v352 = vld [vmem:[#allocation6 + $0x28] sm:$0xff]
    %v353 = vld [vmem:[#allocation6 + $0x30] sm:$0xff]
    %v354 = vld [vmem:[#allocation6 + $0x38] sm:$0xff]
    %v355 = vld [vmem:[#allocation6 + $0x40] sm:$0xff]
    %v356 = vld [vmem:[#allocation6 + $0x48] sm:$0xff]
    %v357 = vld [vmem:[#allocation6 + $0x50] sm:$0xff]
    %v358 = vld [vmem:[#allocation6 + $0x58] sm:$0xff]
    %v359 = vld [vmem:[#allocation6 + $0x60] sm:$0xff]
    %v360 = vld [vmem:[#allocation6 + $0x68] sm:$0xff]
    %v361 = vld [vmem:[#allocation6 + $0x70] sm:$0xff]
    %v362 = vld [vmem:[#allocation6 + $0x78] sm:$0xff]
    %v363 = vld [vmem:[#allocation6 + $0x80] sm:$0xff]
    %v364 = vld [vmem:[#allocation6 + $0x88] sm:$0xff]
    %v365 = vld [vmem:[#allocation6 + $0x90] sm:$0xff]
    %v366 = vld [vmem:[#allocation6 + $0x98] sm:$0xff]
    %v367 = vld [vmem:[#allocation6 + $0xa0] sm:$0xff]
    %v368 = vld [vmem:[#allocation6 + $0xa8] sm:$0xff]
    %v369 = vld [vmem:[#allocation6 + $0xb0] sm:$0xff]
    %v370 = vld [vmem:[#allocation6 + $0xb8] sm:$0xff]
    %v371 = vld [vmem:[#allocation6 + $0xc0] sm:$0xff]
    %v372 = vld [vmem:[#allocation6 + $0xc8] sm:$0xff]
    %v373 = vld [vmem:[#allocation6 + $0xd0] sm:$0xff]
    %v374 = vld [vmem:[#allocation6 + $0xd8] sm:$0xff]
    %v375 = vld [vmem:[#allocation6 + $0xe0] sm:$0xff]
    %v376 = vld [vmem:[#allocation6 + $0xe8] sm:$0xff]
    %v377 = vld [vmem:[#allocation6 + $0xf0] sm:$0xff]
    %v378 = vld [vmem:[#allocation6 + $0xf8] sm:$0xff]
    %v411 = vunpack.c.l.b16 %v347
    %v412 = vunpack.c.h.b16 %v347
    %v413 = vunpack.c.l.b16 %v348
    %v414 = vunpack.c.h.b16 %v348
    %v415 = vunpack.c.l.b16 %v349
    %v416 = vunpack.c.h.b16 %v349
    %v417 = vunpack.c.l.b16 %v350
    %v418 = vunpack.c.h.b16 %v350
    %v419 = vunpack.c.l.b16 %v351
    %v420 = vunpack.c.h.b16 %v351
    %v421 = vunpack.c.l.b16 %v352
    %v422 = vunpack.c.h.b16 %v352
    %v423 = vunpack.c.l.b16 %v353
    %v424 = vunpack.c.h.b16 %v353
    %v425 = vunpack.c.l.b16 %v354
    %v426 = vunpack.c.h.b16 %v354
    %v427 = vunpack.c.l.b16 %v355
    %v428 = vunpack.c.h.b16 %v355
    %v429 = vunpack.c.l.b16 %v356
    %v430 = vunpack.c.h.b16 %v356
    %v431 = vunpack.c.l.b16 %v357
    %v432 = vunpack.c.h.b16 %v357
    %v433 = vunpack.c.l.b16 %v358
    %v434 = vunpack.c.h.b16 %v358
    %v435 = vunpack.c.l.b16 %v359
    %v436 = vunpack.c.h.b16 %v359
    %v437 = vunpack.c.l.b16 %v360
    %v438 = vunpack.c.h.b16 %v360
    %v439 = vunpack.c.l.b16 %v361
    %v440 = vunpack.c.h.b16 %v361
    %v441 = vunpack.c.l.b16 %v362
    %v442 = vunpack.c.h.b16 %v362
    %v443 = vunpack.c.l.b16 %v363
    %v444 = vunpack.c.h.b16 %v363
    %v445 = vunpack.c.l.b16 %v364
    %v446 = vunpack.c.h.b16 %v364
    %v447 = vunpack.c.l.b16 %v365
    %v448 = vunpack.c.h.b16 %v365
    %v449 = vunpack.c.l.b16 %v366
    %v450 = vunpack.c.h.b16 %v366
    %v451 = vunpack.c.l.b16 %v367
    %v452 = vunpack.c.h.b16 %v367
    %v453 = vunpack.c.l.b16 %v368
    %v454 = vunpack.c.h.b16 %v368
    %v455 = vunpack.c.l.b16 %v369
    %v456 = vunpack.c.h.b16 %v369
    %v457 = vunpack.c.l.b16 %v370
    %v458 = vunpack.c.h.b16 %v370
    %v459 = vunpack.c.l.b16 %v371
    %v460 = vunpack.c.h.b16 %v371
    %v461 = vunpack.c.l.b16 %v372
    %v462 = vunpack.c.h.b16 %v372
    %v463 = vunpack.c.l.b16 %v373
    %v464 = vunpack.c.h.b16 %v373
    %v465 = vunpack.c.l.b16 %v374
    %v466 = vunpack.c.h.b16 %v374
    %v467 = vunpack.c.l.b16 %v375
    %v468 = vunpack.c.h.b16 %v375
    %v469 = vunpack.c.l.b16 %v376
    %v470 = vunpack.c.h.b16 %v376
    %v471 = vunpack.c.l.b16 %v377
    %v472 = vunpack.c.h.b16 %v377
    %v473 = vunpack.c.l.b16 %v378
    %v474 = vunpack.c.h.b16 %v378
    %v475 = vpack.c.b16 %v415, %v411
    %v476 = vpack.c.b16 %v416, %v412
    %v477 = vpack.c.b16 %v417, %v413
    %v478 = vpack.c.b16 %v418, %v414
    %v479 = vpack.c.b16 %v423, %v419
    %v480 = vpack.c.b16 %v424, %v420
    %v481 = vpack.c.b16 %v425, %v421
    %v482 = vpack.c.b16 %v426, %v422
    %v483 = vpack.c.b16 %v431, %v427
    %v484 = vpack.c.b16 %v432, %v428
    %v485 = vpack.c.b16 %v433, %v429
    %v486 = vpack.c.b16 %v434, %v430
    %v487 = vpack.c.b16 %v439, %v435
    %v488 = vpack.c.b16 %v440, %v436
    %v489 = vpack.c.b16 %v441, %v437
    %v490 = vpack.c.b16 %v442, %v438
    %v491 = vpack.c.b16 %v447, %v443
    %v492 = vpack.c.b16 %v448, %v444
    %v493 = vpack.c.b16 %v449, %v445
    %v494 = vpack.c.b16 %v450, %v446
    %v495 = vpack.c.b16 %v455, %v451
    %v496 = vpack.c.b16 %v456, %v452
    %v497 = vpack.c.b16 %v457, %v453
    %v498 = vpack.c.b16 %v458, %v454
    %v499 = vpack.c.b16 %v463, %v459
    %v500 = vpack.c.b16 %v464, %v460
    %v501 = vpack.c.b16 %v465, %v461
    %v502 = vpack.c.b16 %v466, %v462
    %v503 = vpack.c.b16 %v471, %v467
    %v504 = vpack.c.b16 %v472, %v468
    %v505 = vpack.c.b16 %v473, %v469
    %v506 = vpack.c.b16 %v474, %v470
    %539 = vmatprep.subr.bf16.mxu0 %v504
    %540 = vmatpush1.bf16.msra.mxu0 %v503
    %541 = vmatprep.subr.bf16.mxu0 %v500
    %542 = vmatpush1.bf16.msra.mxu0 %v499
    %543 = vmatprep.subr.bf16.mxu0 %v496
    %544 = vmatpush1.bf16.msra.mxu0 %v495
    %545 = vmatprep.subr.bf16.mxu0 %v492
    %546 = vmatpush1.bf16.msra.mxu0 %v491
    %547 = vmatprep.subr.bf16.mxu0 %v488
    %548 = vmatpush1.bf16.msra.mxu0 %v487
    %549 = vmatprep.subr.bf16.mxu0 %v484
    %550 = vmatpush1.bf16.msra.mxu0 %v483
    %551 = vmatprep.subr.bf16.mxu0 %v480
    %552 = vmatpush1.bf16.msra.mxu0 %v479
    %553 = vmatprep.subr.bf16.mxu0 %v476
    %554 = vmatpush1.bf16.msra.mxu0 %v475
    %555 = vmatprep.subr.bf16.mxu0 0
    %556 = vmatpush2.bf16.msra.mxu0 0
    %557 = vmatprep.subr.bf16.mxu0 0
    %558 = vmatpush2.bf16.msra.mxu0 0
    %559 = vmatprep.subr.bf16.mxu0 0
    %560 = vmatpush2.bf16.msra.mxu0 0
    %561 = vmatprep.subr.bf16.mxu0 0
    %562 = vmatpush2.bf16.msra.mxu0 0
    %563 = vmatprep.subr.bf16.mxu0 0
    %564 = vmatpush2.bf16.msra.mxu0 0
    %565 = vmatprep.subr.bf16.mxu0 0
    %566 = vmatpush2.bf16.msra.mxu0 0
    %567 = vmatprep.subr.bf16.mxu0 0
    %568 = vmatpush2.bf16.msra.mxu0 0
    %569 = vmatprep.subr.bf16.mxu0 0
    %570 = vmatpush2.bf16.msra.mxu0 0
    %571 = vmatprep.mubr.bf16.mxu0 0
    %572 = vmatmul.mubr.bf16.gmra.mxu0 0
    %v573 = vpop.f32.mrf.mxu0
    %v574 = vadd.f32 0.0, %v573
    %v575 = vpop.f32.mrf.mxu0
    %v576 = vadd.f32 0.0, %v575
    %v577 = vpop.f32.mrf.mxu0
    %v578 = vpop.f32.mrf.mxu0
    %579 = vdwg.mxu0
    %580 = vmatprep.subr.bf16.mxu0 %v506
    %581 = vmatpush1.bf16.msra.mxu0 %v505
    %582 = vmatprep.subr.bf16.mxu0 %v502
    %583 = vmatpush1.bf16.msra.mxu0 %v501
    %584 = vmatprep.subr.bf16.mxu0 %v498
    %585 = vmatpush1.bf16.msra.mxu0 %v497
    %586 = vmatprep.subr.bf16.mxu0 %v494
    %587 = vmatpush1.bf16.msra.mxu0 %v493
    %588 = vmatprep.subr.bf16.mxu0 %v490
    %589 = vmatpush1.bf16.msra.mxu0 %v489
    %590 = vmatprep.subr.bf16.mxu0 %v486
    %591 = vmatpush1.bf16.msra.mxu0 %v485
    %592 = vmatprep.subr.bf16.mxu0 %v482
    %593 = vmatpush1.bf16.msra.mxu0 %v481
    %594 = vmatprep.subr.bf16.mxu0 %v478
    %595 = vmatpush1.bf16.msra.mxu0 %v477
    %596 = vmatprep.subr.bf16.mxu0 0
    %597 = vmatpush2.bf16.msra.mxu0 0
    %598 = vmatprep.subr.bf16.mxu0 0
    %599 = vmatpush2.bf16.msra.mxu0 0
    %600 = vmatprep.subr.bf16.mxu0 0
    %601 = vmatpush2.bf16.msra.mxu0 0
    %602 = vmatprep.subr.bf16.mxu0 0
    %603 = vmatpush2.bf16.msra.mxu0 0
    %604 = vmatprep.subr.bf16.mxu0 0
    %605 = vmatpush2.bf16.msra.mxu0 0
    %606 = vmatprep.subr.bf16.mxu0 0
    %607 = vmatpush2.bf16.msra.mxu0 0
    %608 = vmatprep.subr.bf16.mxu0 0
    %609 = vmatpush2.bf16.msra.mxu0 0
    %610 = vmatprep.subr.bf16.mxu0 0
    %611 = vmatpush2.bf16.msra.mxu0 0
    %612 = vmatprep.mubr.bf16.mxu0 0
    %613 = vmatmul.mubr.bf16.gmra.mxu0 0
    %v614 = vpop.f32.mrf.mxu0
    %v615 = vadd.f32 0.0, %v614
    %v616 = vpop.f32.mrf.mxu0
    %v617 = vadd.f32 0.0, %v616
    %v618 = vpop.f32.mrf.mxu0
    %v619 = vpop.f32.mrf.mxu0
    %620 = vdwg.mxu0
    %v621 = vadd.f32 %v343, %v574
    %v622 = vadd.f32 %v344, %v576
    %v623 = vadd.f32 %v345, %v615
    %v624 = vadd.f32 %v346, %v617
    %v625 = vxor.u32 %v621, 2147483648
    %v626 = vxor.u32 %v622, 2147483648
    %v627 = vxor.u32 %v623, 2147483648
    %v628 = vmul.f32 %v625, 1.442695
    %v629 = vpow.pop %v628
    %v630 = vmul.f32 %v626, 1.442695
    %v631 = vpow.pop %v630
    %v632 = vmul.f32 %v627, 1.442695
    %v633 = vpow.pop %v632
    %v634 = vadd.f32 %v629, 1.0
    %v635 = vadd.f32 %v631, 1.0
    %v636 = vadd.f32 %v633, 1.0
    %v637 = vrcp.pop %v634
    %v638 = vmul.f32 1.0, %v637
    %v639 = vrcp.pop %v635
    %v640 = vmul.f32 1.0, %v639
    %v641 = vrcp.pop %v636
    %v642 = vmul.f32 1.0, %v641
    %v643 = vtanh.pop %v624
    %v644 = vmul.f32 %v640, 0.0
    %v645 = vmul.f32 %v638, %v643
    %v646 = vadd.f32 %v644, %v645
    %v647 = vtanh.pop %v646
    %v648 = vmul.f32 %v642, %v647
    %v649 = vpack.c.bf16 %v648, %v648
    %v650 = vpack.c.bf16 0.0, 0.0
    %v651 = vld [vmem:[#allocation8] sm:$0xff]
    %v652 = vld [vmem:[#allocation8 + $0x8] sm:$0xff]
    %v653 = vld [vmem:[#allocation8 + $0x10] sm:$0xff]
    %v654 = vld [vmem:[#allocation8 + $0x18] sm:$0xff]
    %v655 = vld [vmem:[#allocation8 + $0x20] sm:$0xff]
    %v656 = vld [vmem:[#allocation8 + $0x28] sm:$0xff]
    %v657 = vld [vmem:[#allocation8 + $0x30] sm:$0xff]
    %v658 = vld [vmem:[#allocation8 + $0x38] sm:$0xff]
    %v659 = vld [vmem:[#allocation8 + $0x40] sm:$0xff]
    %v660 = vld [vmem:[#allocation8 + $0x48] sm:$0xff]
    %v661 = vld [vmem:[#allocation8 + $0x50] sm:$0xff]
    %v662 = vld [vmem:[#allocation8 + $0x58] sm:$0xff]
    %v663 = vld [vmem:[#allocation8 + $0x60] sm:$0xff]
    %v664 = vld [vmem:[#allocation8 + $0x68] sm:$0xff]
    %v665 = vld [vmem:[#allocation8 + $0x70] sm:$0xff]
    %v666 = vld [vmem:[#allocation8 + $0x78] sm:$0xff]
    %v667 = vld [vmem:[#allocation8 + $0x80] sm:$0xff]
    %v668 = vld [vmem:[#allocation8 + $0x88] sm:$0xff]
    %v669 = vld [vmem:[#allocation8 + $0x90] sm:$0xff]
    %v670 = vld [vmem:[#allocation8 + $0x98] sm:$0xff]
    %v671 = vld [vmem:[#allocation8 + $0xa0] sm:$0xff]
    %v672 = vld [vmem:[#allocation8 + $0xa8] sm:$0xff]
    %v673 = vld [vmem:[#allocation8 + $0xb0] sm:$0xff]
    %v674 = vld [vmem:[#allocation8 + $0xb8] sm:$0xff]
    %v675 = vld [vmem:[#allocation8 + $0xc0] sm:$0xff]
    %v676 = vld [vmem:[#allocation8 + $0xc8] sm:$0xff]
    %v677 = vld [vmem:[#allocation8 + $0xd0] sm:$0xff]
    %v678 = vld [vmem:[#allocation8 + $0xd8] sm:$0xff]
    %v679 = vld [vmem:[#allocation8 + $0xe0] sm:$0xff]
    %v680 = vld [vmem:[#allocation8 + $0xe8] sm:$0xff]
    %v681 = vld [vmem:[#allocation8 + $0xf0] sm:$0xff]
    %v682 = vld [vmem:[#allocation8 + $0xf8] sm:$0xff]
    %v683 = vld [vmem:[#allocation8 + $0x100] sm:$0xff]
    %v684 = vld [vmem:[#allocation8 + $0x108] sm:$0xff]
    %v685 = vld [vmem:[#allocation8 + $0x110] sm:$0xff]
    %v686 = vld [vmem:[#allocation8 + $0x118] sm:$0xff]
    %v687 = vld [vmem:[#allocation8 + $0x120] sm:$0xff]
    %v688 = vld [vmem:[#allocation8 + $0x128] sm:$0xff]
    %v689 = vld [vmem:[#allocation8 + $0x130] sm:$0xff]
    %v690 = vld [vmem:[#allocation8 + $0x138] sm:$0xff]
    %v691 = vld [vmem:[#allocation8 + $0x140] sm:$0xff]
    %v692 = vld [vmem:[#allocation8 + $0x148] sm:$0xff]
    %v693 = vld [vmem:[#allocation8 + $0x150] sm:$0xff]
    %v694 = vld [vmem:[#allocation8 + $0x158] sm:$0xff]
    %v695 = vld [vmem:[#allocation8 + $0x160] sm:$0xff]
    %v696 = vld [vmem:[#allocation8 + $0x168] sm:$0xff]
    %v697 = vld [vmem:[#allocation8 + $0x170] sm:$0xff]
    %v698 = vld [vmem:[#allocation8 + $0x178] sm:$0xff]
    %v699 = vld [vmem:[#allocation8 + $0x180] sm:$0xff]
    %v700 = vld [vmem:[#allocation8 + $0x188] sm:$0xff]
    %v701 = vld [vmem:[#allocation8 + $0x190] sm:$0xff]
    %v702 = vld [vmem:[#allocation8 + $0x198] sm:$0xff]
    %v703 = vld [vmem:[#allocation8 + $0x1a0] sm:$0xff]
    %v704 = vld [vmem:[#allocation8 + $0x1a8] sm:$0xff]
    %v705 = vld [vmem:[#allocation8 + $0x1b0] sm:$0xff]
    %v706 = vld [vmem:[#allocation8 + $0x1b8] sm:$0xff]
    %v707 = vld [vmem:[#allocation8 + $0x1c0] sm:$0xff]
    %v708 = vld [vmem:[#allocation8 + $0x1c8] sm:$0xff]
    %v709 = vld [vmem:[#allocation8 + $0x1d0] sm:$0xff]
    %v710 = vld [vmem:[#allocation8 + $0x1d8] sm:$0xff]
    %v711 = vld [vmem:[#allocation8 + $0x1e0] sm:$0xff]
    %v712 = vld [vmem:[#allocation8 + $0x1e8] sm:$0xff]
    %v713 = vld [vmem:[#allocation8 + $0x1f0] sm:$0xff]
    %v714 = vld [vmem:[#allocation8 + $0x1f8] sm:$0xff]
    %v779 = vunpack.c.l.b16 %v651
    %v780 = vunpack.c.h.b16 %v651
    %v781 = vunpack.c.l.b16 %v652
    %v782 = vunpack.c.h.b16 %v652
    %v783 = vunpack.c.l.b16 %v653
    %v784 = vunpack.c.h.b16 %v653
    %v785 = vunpack.c.l.b16 %v654
    %v786 = vunpack.c.h.b16 %v654
    %v787 = vunpack.c.l.b16 %v655
    %v788 = vunpack.c.h.b16 %v655
    %v789 = vunpack.c.l.b16 %v656
    %v790 = vunpack.c.h.b16 %v656
    %v791 = vunpack.c.l.b16 %v657
    %v792 = vunpack.c.h.b16 %v657
    %v793 = vunpack.c.l.b16 %v658
    %v794 = vunpack.c.h.b16 %v658
    %v795 = vunpack.c.l.b16 %v659
    %v796 = vunpack.c.h.b16 %v659
    %v797 = vunpack.c.l.b16 %v660
    %v798 = vunpack.c.h.b16 %v660
    %v799 = vunpack.c.l.b16 %v661
    %v800 = vunpack.c.h.b16 %v661
    %v801 = vunpack.c.l.b16 %v662
    %v802 = vunpack.c.h.b16 %v662
    %v803 = vunpack.c.l.b16 %v663
    %v804 = vunpack.c.h.b16 %v663
    %v805 = vunpack.c.l.b16 %v664
    %v806 = vunpack.c.h.b16 %v664
    %v807 = vunpack.c.l.b16 %v665
    %v808 = vunpack.c.h.b16 %v665
    %v809 = vunpack.c.l.b16 %v666
    %v810 = vunpack.c.h.b16 %v666
    %v811 = vunpack.c.l.b16 %v667
    %v812 = vunpack.c.h.b16 %v667
    %v813 = vunpack.c.l.b16 %v668
    %v814 = vunpack.c.h.b16 %v668
    %v815 = vunpack.c.l.b16 %v669
    %v816 = vunpack.c.h.b16 %v669
    %v817 = vunpack.c.l.b16 %v670
    %v818 = vunpack.c.h.b16 %v670
    %v819 = vunpack.c.l.b16 %v671
    %v820 = vunpack.c.h.b16 %v671
    %v821 = vunpack.c.l.b16 %v672
    %v822 = vunpack.c.h.b16 %v672
    %v823 = vunpack.c.l.b16 %v673
    %v824 = vunpack.c.h.b16 %v673
    %v825 = vunpack.c.l.b16 %v674
    %v826 = vunpack.c.h.b16 %v674
    %v827 = vunpack.c.l.b16 %v675
    %v828 = vunpack.c.h.b16 %v675
    %v829 = vunpack.c.l.b16 %v676
    %v830 = vunpack.c.h.b16 %v676
    %v831 = vunpack.c.l.b16 %v677
    %v832 = vunpack.c.h.b16 %v677
    %v833 = vunpack.c.l.b16 %v678
    %v834 = vunpack.c.h.b16 %v678
    %v835 = vunpack.c.l.b16 %v679
    %v836 = vunpack.c.h.b16 %v679
    %v837 = vunpack.c.l.b16 %v680
    %v838 = vunpack.c.h.b16 %v680
    %v839 = vunpack.c.l.b16 %v681
    %v840 = vunpack.c.h.b16 %v681
    %v841 = vunpack.c.l.b16 %v682
    %v842 = vunpack.c.h.b16 %v682
    %v843 = vunpack.c.l.b16 %v683
    %v844 = vunpack.c.h.b16 %v683
    %v845 = vunpack.c.l.b16 %v684
    %v846 = vunpack.c.h.b16 %v684
    %v847 = vunpack.c.l.b16 %v685
    %v848 = vunpack.c.h.b16 %v685
    %v849 = vunpack.c.l.b16 %v686
    %v850 = vunpack.c.h.b16 %v686
    %v851 = vunpack.c.l.b16 %v687
    %v852 = vunpack.c.h.b16 %v687
    %v853 = vunpack.c.l.b16 %v688
    %v854 = vunpack.c.h.b16 %v688
    %v855 = vunpack.c.l.b16 %v689
    %v856 = vunpack.c.h.b16 %v689
    %v857 = vunpack.c.l.b16 %v690
    %v858 = vunpack.c.h.b16 %v690
    %v859 = vunpack.c.l.b16 %v691
    %v860 = vunpack.c.h.b16 %v691
    %v861 = vunpack.c.l.b16 %v692
    %v862 = vunpack.c.h.b16 %v692
    %v863 = vunpack.c.l.b16 %v693
    %v864 = vunpack.c.h.b16 %v693
    %v865 = vunpack.c.l.b16 %v694
    %v866 = vunpack.c.h.b16 %v694
    %v867 = vunpack.c.l.b16 %v695
    %v868 = vunpack.c.h.b16 %v695
    %v869 = vunpack.c.l.b16 %v696
    %v870 = vunpack.c.h.b16 %v696
    %v871 = vunpack.c.l.b16 %v697
    %v872 = vunpack.c.h.b16 %v697
    %v873 = vunpack.c.l.b16 %v698
    %v874 = vunpack.c.h.b16 %v698
    %v875 = vunpack.c.l.b16 %v699
    %v876 = vunpack.c.h.b16 %v699
    %v877 = vunpack.c.l.b16 %v700
    %v878 = vunpack.c.h.b16 %v700
    %v879 = vunpack.c.l.b16 %v701
    %v880 = vunpack.c.h.b16 %v701
    %v881 = vunpack.c.l.b16 %v702
    %v882 = vunpack.c.h.b16 %v702
    %v883 = vunpack.c.l.b16 %v703
    %v884 = vunpack.c.h.b16 %v703
    %v885 = vunpack.c.l.b16 %v704
    %v886 = vunpack.c.h.b16 %v704
    %v887 = vunpack.c.l.b16 %v705
    %v888 = vunpack.c.h.b16 %v705
    %v889 = vunpack.c.l.b16 %v706
    %v890 = vunpack.c.h.b16 %v706
    %v891 = vunpack.c.l.b16 %v707
    %v892 = vunpack.c.h.b16 %v707
    %v893 = vunpack.c.l.b16 %v708
    %v894 = vunpack.c.h.b16 %v708
    %v895 = vunpack.c.l.b16 %v709
    %v896 = vunpack.c.h.b16 %v709
    %v897 = vunpack.c.l.b16 %v710
    %v898 = vunpack.c.h.b16 %v710
    %v899 = vunpack.c.l.b16 %v711
    %v900 = vunpack.c.h.b16 %v711
    %v901 = vunpack.c.l.b16 %v712
    %v902 = vunpack.c.h.b16 %v712
    %v903 = vunpack.c.l.b16 %v713
    %v904 = vunpack.c.h.b16 %v713
    %v905 = vunpack.c.l.b16 %v714
    %v906 = vunpack.c.h.b16 %v714
    %v907 = vpack.c.b16 %v783, %v779
    %v908 = vpack.c.b16 %v784, %v780
    %v909 = vpack.c.b16 %v785, %v781
    %v910 = vpack.c.b16 %v786, %v782
    %v911 = vpack.c.b16 %v791, %v787
    %v912 = vpack.c.b16 %v792, %v788
    %v913 = vpack.c.b16 %v793, %v789
    %v914 = vpack.c.b16 %v794, %v790
    %v915 = vpack.c.b16 %v799, %v795
    %v916 = vpack.c.b16 %v800, %v796
    %v917 = vpack.c.b16 %v801, %v797
    %v918 = vpack.c.b16 %v802, %v798
    %v919 = vpack.c.b16 %v807, %v803
    %v920 = vpack.c.b16 %v808, %v804
    %v921 = vpack.c.b16 %v809, %v805
    %v922 = vpack.c.b16 %v810, %v806
    %v923 = vpack.c.b16 %v815, %v811
    %v924 = vpack.c.b16 %v816, %v812
    %v925 = vpack.c.b16 %v817, %v813
    %v926 = vpack.c.b16 %v818, %v814
    %v927 = vpack.c.b16 %v823, %v819
    %v928 = vpack.c.b16 %v824, %v820
    %v929 = vpack.c.b16 %v825, %v821
    %v930 = vpack.c.b16 %v826, %v822
    %v931 = vpack.c.b16 %v831, %v827
    %v932 = vpack.c.b16 %v832, %v828
    %v933 = vpack.c.b16 %v833, %v829
    %v934 = vpack.c.b16 %v834, %v830
    %v935 = vpack.c.b16 %v839, %v835
    %v936 = vpack.c.b16 %v840, %v836
    %v937 = vpack.c.b16 %v841, %v837
    %v938 = vpack.c.b16 %v842, %v838
    %v939 = vpack.c.b16 %v847, %v843
    %v940 = vpack.c.b16 %v848, %v844
    %v941 = vpack.c.b16 %v849, %v845
    %v942 = vpack.c.b16 %v850, %v846
    %v943 = vpack.c.b16 %v855, %v851
    %v944 = vpack.c.b16 %v856, %v852
    %v945 = vpack.c.b16 %v857, %v853
    %v946 = vpack.c.b16 %v858, %v854
    %v947 = vpack.c.b16 %v863, %v859
    %v948 = vpack.c.b16 %v864, %v860
    %v949 = vpack.c.b16 %v865, %v861
    %v950 = vpack.c.b16 %v866, %v862
    %v951 = vpack.c.b16 %v871, %v867
    %v952 = vpack.c.b16 %v872, %v868
    %v953 = vpack.c.b16 %v873, %v869
    %v954 = vpack.c.b16 %v874, %v870
    %v955 = vpack.c.b16 %v879, %v875
    %v956 = vpack.c.b16 %v880, %v876
    %v957 = vpack.c.b16 %v881, %v877
    %v958 = vpack.c.b16 %v882, %v878
    %v959 = vpack.c.b16 %v887, %v883
    %v960 = vpack.c.b16 %v888, %v884
    %v961 = vpack.c.b16 %v889, %v885
    %v962 = vpack.c.b16 %v890, %v886
    %v963 = vpack.c.b16 %v895, %v891
    %v964 = vpack.c.b16 %v896, %v892
    %v965 = vpack.c.b16 %v897, %v893
    %v966 = vpack.c.b16 %v898, %v894
    %v967 = vpack.c.b16 %v903, %v899
    %v968 = vpack.c.b16 %v904, %v900
    %v969 = vpack.c.b16 %v905, %v901
    %v970 = vpack.c.b16 %v906, %v902
    %1035 = vmatprep.subr.bf16.mxu0 %v936
    %1036 = vmatpush1.bf16.msra.mxu0 %v935
    %1037 = vmatprep.subr.bf16.mxu0 %v932
    %1038 = vmatpush1.bf16.msra.mxu0 %v931
    %1039 = vmatprep.subr.bf16.mxu0 %v928
    %1040 = vmatpush1.bf16.msra.mxu0 %v927
    %1041 = vmatprep.subr.bf16.mxu0 %v924
    %1042 = vmatpush1.bf16.msra.mxu0 %v923
    %1043 = vmatprep.subr.bf16.mxu0 %v920
    %1044 = vmatpush1.bf16.msra.mxu0 %v919
    %1045 = vmatprep.subr.bf16.mxu0 %v916
    %1046 = vmatpush1.bf16.msra.mxu0 %v915
    %1047 = vmatprep.subr.bf16.mxu0 %v912
    %1048 = vmatpush1.bf16.msra.mxu0 %v911
    %1049 = vmatprep.subr.bf16.mxu0 %v908
    %1050 = vmatpush1.bf16.msra.mxu0 %v907
    %1051 = vmatprep.subr.bf16.mxu0 %v968
    %1052 = vmatpush2.bf16.msra.mxu0 %v967
    %1053 = vmatprep.subr.bf16.mxu0 %v964
    %1054 = vmatpush2.bf16.msra.mxu0 %v963
    %1055 = vmatprep.subr.bf16.mxu0 %v960
    %1056 = vmatpush2.bf16.msra.mxu0 %v959
    %1057 = vmatprep.subr.bf16.mxu0 %v956
    %1058 = vmatpush2.bf16.msra.mxu0 %v955
    %1059 = vmatprep.subr.bf16.mxu0 %v952
    %1060 = vmatpush2.bf16.msra.mxu0 %v951
    %1061 = vmatprep.subr.bf16.mxu0 %v948
    %1062 = vmatpush2.bf16.msra.mxu0 %v947
    %1063 = vmatprep.subr.bf16.mxu0 %v944
    %1064 = vmatpush2.bf16.msra.mxu0 %v943
    %1065 = vmatprep.subr.bf16.mxu0 %v940
    %1066 = vmatpush2.bf16.msra.mxu0 %v939
    %1067 = vmatprep.mubr.bf16.mxu0 %v650
    %1068 = vmatmul.mubr.bf16.gmra.mxu0 %v649
    %v1069 = vpop.f32.mrf.mxu0
    %v1070 = vadd.f32 %v326, %v1069
    %v1071 = vpop.f32.mrf.mxu0
    %v1072 = vadd.f32 %v330, %v1071
    %v1073 = vpop.f32.mrf.mxu0
    %v1074 = vpop.f32.mrf.mxu0
    %1075 = vdwg.mxu0
    %1076 = vmatprep.subr.bf16.mxu0 %v938
    %1077 = vmatpush1.bf16.msra.mxu0 %v937
    %1078 = vmatprep.subr.bf16.mxu0 %v934
    %1079 = vmatpush1.bf16.msra.mxu0 %v933
    %1080 = vmatprep.subr.bf16.mxu0 %v930
    %1081 = vmatpush1.bf16.msra.mxu0 %v929
    %1082 = vmatprep.subr.bf16.mxu0 %v926
    %1083 = vmatpush1.bf16.msra.mxu0 %v925
    %1084 = vmatprep.subr.bf16.mxu0 %v922
    %1085 = vmatpush1.bf16.msra.mxu0 %v921
    %1086 = vmatprep.subr.bf16.mxu0 %v918
    %1087 = vmatpush1.bf16.msra.mxu0 %v917
    %1088 = vmatprep.subr.bf16.mxu0 %v914
    %1089 = vmatpush1.bf16.msra.mxu0 %v913
    %1090 = vmatprep.subr.bf16.mxu0 %v910
    %1091 = vmatpush1.bf16.msra.mxu0 %v909
    %1092 = vmatprep.subr.bf16.mxu0 %v970
    %1093 = vmatpush2.bf16.msra.mxu0 %v969
    %1094 = vmatprep.subr.bf16.mxu0 %v966
    %1095 = vmatpush2.bf16.msra.mxu0 %v965
    %1096 = vmatprep.subr.bf16.mxu0 %v962
    %1097 = vmatpush2.bf16.msra.mxu0 %v961
    %1098 = vmatprep.subr.bf16.mxu0 %v958
    %1099 = vmatpush2.bf16.msra.mxu0 %v957
    %1100 = vmatprep.subr.bf16.mxu0 %v954
    %1101 = vmatpush2.bf16.msra.mxu0 %v953
    %1102 = vmatprep.subr.bf16.mxu0 %v950
    %1103 = vmatpush2.bf16.msra.mxu0 %v949
    %1104 = vmatprep.subr.bf16.mxu0 %v946
    %1105 = vmatpush2.bf16.msra.mxu0 %v945
    %1106 = vmatprep.subr.bf16.mxu0 %v942
    %1107 = vmatpush2.bf16.msra.mxu0 %v941
    %1108 = vmatprep.mubr.bf16.mxu0 %v650
    %1109 = vmatmul.mubr.bf16.gmra.mxu0 %v649
    %v1110 = vpop.f32.mrf.mxu0
    %v1111 = vadd.f32 %v334, %v1110
    %v1112 = vpop.f32.mrf.mxu0
    %v1113 = vadd.f32 %v338, %v1112
    %v1114 = vpop.f32.mrf.mxu0
    %v1115 = vpop.f32.mrf.mxu0
    %1116 = vdwg.mxu0
    %v1117 = vxor.u32 %v1070, 2147483648
    %v1118 = vxor.u32 %v1072, 2147483648
    %v1119 = vxor.u32 %v1111, 2147483648
    %v1120 = vmul.f32 %v1117, 1.442695
    %v1121 = vpow.pop %v1120
    %v1122 = vmul.f32 %v1118, 1.442695
    %v1123 = vpow.pop %v1122
    %v1124 = vmul.f32 %v1119, 1.442695
    %v1125 = vpow.pop %v1124
    %v1126 = vadd.f32 %v1121, 1.0
    %v1127 = vadd.f32 %v1123, 1.0
    %v1128 = vadd.f32 %v1125, 1.0
    %v1129 = vrcp.pop %v1126
    %v1130 = vmul.f32 1.0, %v1129
    %v1131 = vrcp.pop %v1127
    %v1132 = vmul.f32 1.0, %v1131
    %v1133 = vrcp.pop %v1128
    %v1134 = vmul.f32 1.0, %v1133
    %v1135 = vtanh.pop %v1113
    %v1136 = vmul.f32 %v1132, 0.0
    %v1137 = vmul.f32 %v1130, %v1135
    %v1138 = vadd.f32 %v1136, %v1137
    %v1139 = vtanh.pop %v1138
    %v1140 = vmul.f32 %v1134, %v1139
    %v1141 = vld [vmem:[#allocation2 + $0x20] sm:$0xff]
    %v1142 = vld [vmem:[#allocation2 + $0x28] sm:$0xff]
    %v1143 = vld [vmem:[#allocation2 + $0x30] sm:$0xff]
    %v1144 = vld [vmem:[#allocation2 + $0x38] sm:$0xff]
    %1145 = vmatprep.subr.bf16.mxu0 %v504
    %1146 = vmatpush1.bf16.msra.mxu0 %v503
    %1147 = vmatprep.subr.bf16.mxu0 %v500
    %1148 = vmatpush1.bf16.msra.mxu0 %v499
    %1149 = vmatprep.subr.bf16.mxu0 %v496
    %1150 = vmatpush1.bf16.msra.mxu0 %v495
    %1151 = vmatprep.subr.bf16.mxu0 %v492
    %1152 = vmatpush1.bf16.msra.mxu0 %v491
    %1153 = vmatprep.subr.bf16.mxu0 %v488
    %1154 = vmatpush1.bf16.msra.mxu0 %v487
    %1155 = vmatprep.subr.bf16.mxu0 %v484
    %1156 = vmatpush1.bf16.msra.mxu0 %v483
    %1157 = vmatprep.subr.bf16.mxu0 %v480
    %1158 = vmatpush1.bf16.msra.mxu0 %v479
    %1159 = vmatprep.subr.bf16.mxu0 %v476
    %1160 = vmatpush1.bf16.msra.mxu0 %v475
    %1161 = vmatprep.subr.bf16.mxu0 0
    %1162 = vmatpush2.bf16.msra.mxu0 0
    %1163 = vmatprep.subr.bf16.mxu0 0
    %1164 = vmatpush2.bf16.msra.mxu0 0
    %1165 = vmatprep.subr.bf16.mxu0 0
    %1166 = vmatpush2.bf16.msra.mxu0 0
    %1167 = vmatprep.subr.bf16.mxu0 0
    %1168 = vmatpush2.bf16.msra.mxu0 0
    %1169 = vmatprep.subr.bf16.mxu0 0
    %1170 = vmatpush2.bf16.msra.mxu0 0
    %1171 = vmatprep.subr.bf16.mxu0 0
    %1172 = vmatpush2.bf16.msra.mxu0 0
    %1173 = vmatprep.subr.bf16.mxu0 0
    %1174 = vmatpush2.bf16.msra.mxu0 0
    %1175 = vmatprep.subr.bf16.mxu0 0
    %1176 = vmatpush2.bf16.msra.mxu0 0
    %1177 = vmatprep.mubr.bf16.mxu0 0
    %1178 = vmatmul.mubr.bf16.gmra.mxu0 %v649
    %v1179 = vpop.f32.mrf.mxu0
    %v1180 = vadd.f32 0.0, %v1179
    %v1181 = vpop.f32.mrf.mxu0
    %v1182 = vadd.f32 0.0, %v1181
    %v1183 = vpop.f32.mrf.mxu0
    %v1184 = vpop.f32.mrf.mxu0
    %1185 = vdwg.mxu0
    %1186 = vmatprep.subr.bf16.mxu0 %v506
    %1187 = vmatpush1.bf16.msra.mxu0 %v505
    %1188 = vmatprep.subr.bf16.mxu0 %v502
    %1189 = vmatpush1.bf16.msra.mxu0 %v501
    %1190 = vmatprep.subr.bf16.mxu0 %v498
    %1191 = vmatpush1.bf16.msra.mxu0 %v497
    %1192 = vmatprep.subr.bf16.mxu0 %v494
    %1193 = vmatpush1.bf16.msra.mxu0 %v493
    %1194 = vmatprep.subr.bf16.mxu0 %v490
    %1195 = vmatpush1.bf16.msra.mxu0 %v489
    %1196 = vmatprep.subr.bf16.mxu0 %v486
    %1197 = vmatpush1.bf16.msra.mxu0 %v485
    %1198 = vmatprep.subr.bf16.mxu0 %v482
    %1199 = vmatpush1.bf16.msra.mxu0 %v481
    %1200 = vmatprep.subr.bf16.mxu0 %v478
    %1201 = vmatpush1.bf16.msra.mxu0 %v477
    %1202 = vmatprep.subr.bf16.mxu0 0
    %1203 = vmatpush2.bf16.msra.mxu0 0
    %1204 = vmatprep.subr.bf16.mxu0 0
    %1205 = vmatpush2.bf16.msra.mxu0 0
    %1206 = vmatprep.subr.bf16.mxu0 0
    %1207 = vmatpush2.bf16.msra.mxu0 0
    %1208 = vmatprep.subr.bf16.mxu0 0
    %1209 = vmatpush2.bf16.msra.mxu0 0
    %1210 = vmatprep.subr.bf16.mxu0 0
    %1211 = vmatpush2.bf16.msra.mxu0 0
    %1212 = vmatprep.subr.bf16.mxu0 0
    %1213 = vmatpush2.bf16.msra.mxu0 0
    %1214 = vmatprep.subr.bf16.mxu0 0
    %1215 = vmatpush2.bf16.msra.mxu0 0
    %1216 = vmatprep.subr.bf16.mxu0 0
    %1217 = vmatpush2.bf16.msra.mxu0 0
    %1218 = vmatprep.mubr.bf16.mxu0 0
    %1219 = vmatmul.mubr.bf16.gmra.mxu0 %v649
    %v1220 = vpop.f32.mrf.mxu0
    %v1221 = vadd.f32 0.0, %v1220
    %v1222 = vpop.f32.mrf.mxu0
    %v1223 = vadd.f32 0.0, %v1222
    %v1224 = vpop.f32.mrf.mxu0
    %v1225 = vpop.f32.mrf.mxu0
    %1226 = vdwg.mxu0
    %v1227 = vadd.f32 %v1141, %v1180
    %v1228 = vadd.f32 %v1142, %v1182
    %v1229 = vadd.f32 %v1143, %v1221
    %v1230 = vadd.f32 %v1144, %v1223
    %v1231 = vxor.u32 %v1227, 2147483648
    %v1232 = vxor.u32 %v1228, 2147483648
    %v1233 = vxor.u32 %v1229, 2147483648
    %v1234 = vmul.f32 %v1231, 1.442695
    %v1235 = vpow.pop %v1234
    %v1236 = vmul.f32 %v1232, 1.442695
    %v1237 = vpow.pop %v1236
    %v1238 = vmul.f32 %v1233, 1.442695
    %v1239 = vpow.pop %v1238
    %v1240 = vadd.f32 %v1235, 1.0
    %v1241 = vadd.f32 %v1237, 1.0
    %v1242 = vadd.f32 %v1239, 1.0
    %v1243 = vrcp.pop %v1240
    %v1244 = vmul.f32 1.0, %v1243
    %v1245 = vrcp.pop %v1241
    %v1246 = vmul.f32 1.0, %v1245
    %v1247 = vrcp.pop %v1242
    %v1248 = vmul.f32 1.0, %v1247
    %v1249 = vtanh.pop %v1230
    %v1250 = vmul.f32 %v1246, %v646
    %v1251 = vmul.f32 %v1244, %v1249
    %v1252 = vadd.f32 %v1250, %v1251
    %v1253 = vtanh.pop %v1252
    %v1254 = vmul.f32 %v1248, %v1253
    %v1255 = vpack.c.bf16 %v1254, %v1254
    %v1256 = vpack.c.bf16 %v1140, %v1140
    %1257 = vmatprep.subr.bf16.mxu0 %v936
    %1258 = vmatpush1.bf16.msra.mxu0 %v935
    %1259 = vmatprep.subr.bf16.mxu0 %v932
    %1260 = vmatpush1.bf16.msra.mxu0 %v931
    %1261 = vmatprep.subr.bf16.mxu0 %v928
    %1262 = vmatpush1.bf16.msra.mxu0 %v927
    %1263 = vmatprep.subr.bf16.mxu0 %v924
    %1264 = vmatpush1.bf16.msra.mxu0 %v923
    %1265 = vmatprep.subr.bf16.mxu0 %v920
    %1266 = vmatpush1.bf16.msra.mxu0 %v919
    %1267 = vmatprep.subr.bf16.mxu0 %v916
    %1268 = vmatpush1.bf16.msra.mxu0 %v915
    %1269 = vmatprep.subr.bf16.mxu0 %v912
    %1270 = vmatpush1.bf16.msra.mxu0 %v911
    %1271 = vmatprep.subr.bf16.mxu0 %v908
    %1272 = vmatpush1.bf16.msra.mxu0 %v907
    %1273 = vmatprep.subr.bf16.mxu0 %v968
    %1274 = vmatpush2.bf16.msra.mxu0 %v967
    %1275 = vmatprep.subr.bf16.mxu0 %v964
    %1276 = vmatpush2.bf16.msra.mxu0 %v963
    %1277 = vmatprep.subr.bf16.mxu0 %v960
    %1278 = vmatpush2.bf16.msra.mxu0 %v959
    %1279 = vmatprep.subr.bf16.mxu0 %v956
    %1280 = vmatpush2.bf16.msra.mxu0 %v955
    %1281 = vmatprep.subr.bf16.mxu0 %v952
    %1282 = vmatpush2.bf16.msra.mxu0 %v951
    %1283 = vmatprep.subr.bf16.mxu0 %v948
    %1284 = vmatpush2.bf16.msra.mxu0 %v947
    %1285 = vmatprep.subr.bf16.mxu0 %v944
    %1286 = vmatpush2.bf16.msra.mxu0 %v943
    %1287 = vmatprep.subr.bf16.mxu0 %v940
    %1288 = vmatpush2.bf16.msra.mxu0 %v939
    %1289 = vmatprep.mubr.bf16.mxu0 %v1256
    %1290 = vmatmul.mubr.bf16.gmra.mxu0 %v1255
    %v1291 = vpop.f32.mrf.mxu0
    %v1292 = vadd.f32 %v326, %v1291
    %v1293 = vpop.f32.mrf.mxu0
    %v1294 = vadd.f32 %v330, %v1293
    %v1295 = vpop.f32.mrf.mxu0
    %v1296 = vpop.f32.mrf.mxu0
    %1297 = vdwg.mxu0
    %1298 = vmatprep.subr.bf16.mxu0 %v938
    %1299 = vmatpush1.bf16.msra.mxu0 %v937
    %1300 = vmatprep.subr.bf16.mxu0 %v934
    %1301 = vmatpush1.bf16.msra.mxu0 %v933
    %1302 = vmatprep.subr.bf16.mxu0 %v930
    %1303 = vmatpush1.bf16.msra.mxu0 %v929
    %1304 = vmatprep.subr.bf16.mxu0 %v926
    %1305 = vmatpush1.bf16.msra.mxu0 %v925
    %1306 = vmatprep.subr.bf16.mxu0 %v922
    %1307 = vmatpush1.bf16.msra.mxu0 %v921
    %1308 = vmatprep.subr.bf16.mxu0 %v918
    %1309 = vmatpush1.bf16.msra.mxu0 %v917
    %1310 = vmatprep.subr.bf16.mxu0 %v914
    %1311 = vmatpush1.bf16.msra.mxu0 %v913
    %1312 = vmatprep.subr.bf16.mxu0 %v910
    %1313 = vmatpush1.bf16.msra.mxu0 %v909
    %1314 = vmatprep.subr.bf16.mxu0 %v970
    %1315 = vmatpush2.bf16.msra.mxu0 %v969
    %1316 = vmatprep.subr.bf16.mxu0 %v966
    %1317 = vmatpush2.bf16.msra.mxu0 %v965
    %1318 = vmatprep.subr.bf16.mxu0 %v962
    %1319 = vmatpush2.bf16.msra.mxu0 %v961
    %1320 = vmatprep.subr.bf16.mxu0 %v958
    %1321 = vmatpush2.bf16.msra.mxu0 %v957
    %1322 = vmatprep.subr.bf16.mxu0 %v954
    %1323 = vmatpush2.bf16.msra.mxu0 %v953
    %1324 = vmatprep.subr.bf16.mxu0 %v950
    %1325 = vmatpush2.bf16.msra.mxu0 %v949
    %1326 = vmatprep.subr.bf16.mxu0 %v946
    %1327 = vmatpush2.bf16.msra.mxu0 %v945
    %1328 = vmatprep.subr.bf16.mxu0 %v942
    %1329 = vmatpush2.bf16.msra.mxu0 %v941
    %1330 = vmatprep.mubr.bf16.mxu0 %v1256
    %1331 = vmatmul.mubr.bf16.gmra.mxu0 %v1255
    %v1332 = vpop.f32.mrf.mxu0
    %v1333 = vadd.f32 %v334, %v1332
    %v1334 = vpop.f32.mrf.mxu0
    %v1335 = vadd.f32 %v338, %v1334
    %v1336 = vpop.f32.mrf.mxu0
    %v1337 = vpop.f32.mrf.mxu0
    %1338 = vdwg.mxu0
    %v1339 = vxor.u32 %v1292, 2147483648
    %v1340 = vxor.u32 %v1294, 2147483648
    %v1341 = vxor.u32 %v1333, 2147483648
    %v1342 = vmul.f32 %v1339, 1.442695
    %v1343 = vpow.pop %v1342
    %v1344 = vmul.f32 %v1340, 1.442695
    %v1345 = vpow.pop %v1344
    %v1346 = vmul.f32 %v1341, 1.442695
    %v1347 = vpow.pop %v1346
    %v1348 = vadd.f32 %v1343, 1.0
    %v1349 = vadd.f32 %v1345, 1.0
    %v1350 = vadd.f32 %v1347, 1.0
    %v1351 = vrcp.pop %v1348
    %v1352 = vmul.f32 1.0, %v1351
    %v1353 = vrcp.pop %v1349
    %v1354 = vmul.f32 1.0, %v1353
    %v1355 = vrcp.pop %v1350
    %v1356 = vmul.f32 1.0, %v1355
    %v1357 = vtanh.pop %v1335
    %v1358 = vmul.f32 %v1354, %v1138
    %v1359 = vmul.f32 %v1352, %v1357
    %v1360 = vadd.f32 %v1358, %v1359
    %v1361 = vtanh.pop %v1360
    %v1362 = vmul.f32 %v1356, %v1361
    %v1363 = vld [vmem:[#allocation2 + $0x40] sm:$0xff]
    %v1364 = vld [vmem:[#allocation2 + $0x48] sm:$0xff]
    %v1365 = vld [vmem:[#allocation2 + $0x50] sm:$0xff]
    %v1366 = vld [vmem:[#allocation2 + $0x58] sm:$0xff]
    %1367 = vmatprep.subr.bf16.mxu0 %v504
    %1368 = vmatpush1.bf16.msra.mxu0 %v503
    %1369 = vmatprep.subr.bf16.mxu0 %v500
    %1370 = vmatpush1.bf16.msra.mxu0 %v499
    %1371 = vmatprep.subr.bf16.mxu0 %v496
    %1372 = vmatpush1.bf16.msra.mxu0 %v495
    %1373 = vmatprep.subr.bf16.mxu0 %v492
    %1374 = vmatpush1.bf16.msra.mxu0 %v491
    %1375 = vmatprep.subr.bf16.mxu0 %v488
    %1376 = vmatpush1.bf16.msra.mxu0 %v487
    %1377 = vmatprep.subr.bf16.mxu0 %v484
    %1378 = vmatpush1.bf16.msra.mxu0 %v483
    %1379 = vmatprep.subr.bf16.mxu0 %v480
    %1380 = vmatpush1.bf16.msra.mxu0 %v479
    %1381 = vmatprep.subr.bf16.mxu0 %v476
    %1382 = vmatpush1.bf16.msra.mxu0 %v475
    %1383 = vmatprep.subr.bf16.mxu0 0
    %1384 = vmatpush2.bf16.msra.mxu0 0
    %1385 = vmatprep.subr.bf16.mxu0 0
    %1386 = vmatpush2.bf16.msra.mxu0 0
    %1387 = vmatprep.subr.bf16.mxu0 0
    %1388 = vmatpush2.bf16.msra.mxu0 0
    %1389 = vmatprep.subr.bf16.mxu0 0
    %1390 = vmatpush2.bf16.msra.mxu0 0
    %1391 = vmatprep.subr.bf16.mxu0 0
    %1392 = vmatpush2.bf16.msra.mxu0 0
    %1393 = vmatprep.subr.bf16.mxu0 0
    %1394 = vmatpush2.bf16.msra.mxu0 0
    %1395 = vmatprep.subr.bf16.mxu0 0
    %1396 = vmatpush2.bf16.msra.mxu0 0
    %1397 = vmatprep.subr.bf16.mxu0 0
    %1398 = vmatpush2.bf16.msra.mxu0 0
    %1399 = vmatprep.mubr.bf16.mxu0 0
    %1400 = vmatmul.mubr.bf16.gmra.mxu0 %v1255
    %v1401 = vpop.f32.mrf.mxu0
    %v1402 = vadd.f32 0.0, %v1401
    %v1403 = vpop.f32.mrf.mxu0
    %v1404 = vadd.f32 0.0, %v1403
    %v1405 = vpop.f32.mrf.mxu0
    %v1406 = vpop.f32.mrf.mxu0
    %1407 = vdwg.mxu0
    %1408 = vmatprep.subr.bf16.mxu0 %v506
    %1409 = vmatpush1.bf16.msra.mxu0 %v505
    %1410 = vmatprep.subr.bf16.mxu0 %v502
    %1411 = vmatpush1.bf16.msra.mxu0 %v501
    %1412 = vmatprep.subr.bf16.mxu0 %v498
    %1413 = vmatpush1.bf16.msra.mxu0 %v497
    %1414 = vmatprep.subr.bf16.mxu0 %v494
    %1415 = vmatpush1.bf16.msra.mxu0 %v493
    %1416 = vmatprep.subr.bf16.mxu0 %v490
    %1417 = vmatpush1.bf16.msra.mxu0 %v489
    %1418 = vmatprep.subr.bf16.mxu0 %v486
    %1419 = vmatpush1.bf16.msra.mxu0 %v485
    %1420 = vmatprep.subr.bf16.mxu0 %v482
    %1421 = vmatpush1.bf16.msra.mxu0 %v481
    %1422 = vmatprep.subr.bf16.mxu0 %v478
    %1423 = vmatpush1.bf16.msra.mxu0 %v477
    %1424 = vmatprep.subr.bf16.mxu0 0
    %1425 = vmatpush2.bf16.msra.mxu0 0
    %1426 = vmatprep.subr.bf16.mxu0 0
    %1427 = vmatpush2.bf16.msra.mxu0 0
    %1428 = vmatprep.subr.bf16.mxu0 0
    %1429 = vmatpush2.bf16.msra.mxu0 0
    %1430 = vmatprep.subr.bf16.mxu0 0
    %1431 = vmatpush2.bf16.msra.mxu0 0
    %1432 = vmatprep.subr.bf16.mxu0 0
    %1433 = vmatpush2.bf16.msra.mxu0 0
    %1434 = vmatprep.subr.bf16.mxu0 0
    %1435 = vmatpush2.bf16.msra.mxu0 0
    %1436 = vmatprep.subr.bf16.mxu0 0
    %1437 = vmatpush2.bf16.msra.mxu0 0
    %1438 = vmatprep.subr.bf16.mxu0 0
    %1439 = vmatpush2.bf16.msra.mxu0 0
    %1440 = vmatprep.mubr.bf16.mxu0 0
    %1441 = vmatmul.mubr.bf16.gmra.mxu0 %v1255
    %v1442 = vpop.f32.mrf.mxu0
    %v1443 = vadd.f32 0.0, %v1442
    %v1444 = vpop.f32.mrf.mxu0
    %v1445 = vadd.f32 0.0, %v1444
    %v1446 = vpop.f32.mrf.mxu0
    %v1447 = vpop.f32.mrf.mxu0
    %1448 = vdwg.mxu0
    %v1449 = vadd.f32 %v1363, %v1402
    %v1450 = vadd.f32 %v1364, %v1404
    %v1451 = vadd.f32 %v1365, %v1443
    %v1452 = vadd.f32 %v1366, %v1445
    %v1453 = vxor.u32 %v1449, 2147483648
    %v1454 = vxor.u32 %v1450, 2147483648
    %v1455 = vxor.u32 %v1451, 2147483648
    %v1456 = vmul.f32 %v1453, 1.442695
    %v1457 = vpow.pop %v1456
    %v1458 = vmul.f32 %v1454, 1.442695
    %v1459 = vpow.pop %v1458
    %v1460 = vmul.f32 %v1455, 1.442695
    %v1461 = vpow.pop %v1460
    %v1462 = vadd.f32 %v1457, 1.0
    %v1463 = vadd.f32 %v1459, 1.0
    %v1464 = vadd.f32 %v1461, 1.0
    %v1465 = vrcp.pop %v1462
    %v1466 = vmul.f32 1.0, %v1465
    %v1467 = vrcp.pop %v1463
    %v1468 = vmul.f32 1.0, %v1467
    %v1469 = vrcp.pop %v1464
    %v1470 = vmul.f32 1.0, %v1469
    %v1471 = vtanh.pop %v1452
    %v1472 = vmul.f32 %v1468, %v1252
    %v1473 = vmul.f32 %v1466, %v1471
    %v1474 = vadd.f32 %v1472, %v1473
    %v1475 = vtanh.pop %v1474
    %v1476 = vmul.f32 %v1470, %v1475
    %v1477 = vpack.c.bf16 %v1476, %v1476
    %v1478 = vpack.c.bf16 %v1362, %v1362
    %1479 = vmatprep.subr.bf16.mxu0 %v936
    %1480 = vmatpush1.bf16.msra.mxu0 %v935
    %1481 = vmatprep.subr.bf16.mxu0 %v932
    %1482 = vmatpush1.bf16.msra.mxu0 %v931
    %1483 = vmatprep.subr.bf16.mxu0 %v928
    %1484 = vmatpush1.bf16.msra.mxu0 %v927
    %1485 = vmatprep.subr.bf16.mxu0 %v924
    %1486 = vmatpush1.bf16.msra.mxu0 %v923
    %1487 = vmatprep.subr.bf16.mxu0 %v920
    %1488 = vmatpush1.bf16.msra.mxu0 %v919
    %1489 = vmatprep.subr.bf16.mxu0 %v916
    %1490 = vmatpush1.bf16.msra.mxu0 %v915
    %1491 = vmatprep.subr.bf16.mxu0 %v912
    %1492 = vmatpush1.bf16.msra.mxu0 %v911
    %1493 = vmatprep.subr.bf16.mxu0 %v908
    %1494 = vmatpush1.bf16.msra.mxu0 %v907
    %1495 = vmatprep.subr.bf16.mxu0 %v968
    %1496 = vmatpush2.bf16.msra.mxu0 %v967
    %1497 = vmatprep.subr.bf16.mxu0 %v964
    %1498 = vmatpush2.bf16.msra.mxu0 %v963
    %1499 = vmatprep.subr.bf16.mxu0 %v960
    %1500 = vmatpush2.bf16.msra.mxu0 %v959
    %1501 = vmatprep.subr.bf16.mxu0 %v956
    %1502 = vmatpush2.bf16.msra.mxu0 %v955
    %1503 = vmatprep.subr.bf16.mxu0 %v952
    %1504 = vmatpush2.bf16.msra.mxu0 %v951
    %1505 = vmatprep.subr.bf16.mxu0 %v948
    %1506 = vmatpush2.bf16.msra.mxu0 %v947
    %1507 = vmatprep.subr.bf16.mxu0 %v944
    %1508 = vmatpush2.bf16.msra.mxu0 %v943
    %1509 = vmatprep.subr.bf16.mxu0 %v940
    %1510 = vmatpush2.bf16.msra.mxu0 %v939
    %1511 = vmatprep.mubr.bf16.mxu0 %v1478
    %1512 = vmatmul.mubr.bf16.gmra.mxu0 %v1477
    %v1513 = vpop.f32.mrf.mxu0
    %v1514 = vadd.f32 %v326, %v1513
    %v1515 = vpop.f32.mrf.mxu0
    %v1516 = vadd.f32 %v330, %v1515
    %v1517 = vpop.f32.mrf.mxu0
    %v1518 = vpop.f32.mrf.mxu0
    %1519 = vdwg.mxu0
    %1520 = vmatprep.subr.bf16.mxu0 %v938
    %1521 = vmatpush1.bf16.msra.mxu0 %v937
    %1522 = vmatprep.subr.bf16.mxu0 %v934
    %1523 = vmatpush1.bf16.msra.mxu0 %v933
    %1524 = vmatprep.subr.bf16.mxu0 %v930
    %1525 = vmatpush1.bf16.msra.mxu0 %v929
    %1526 = vmatprep.subr.bf16.mxu0 %v926
    %1527 = vmatpush1.bf16.msra.mxu0 %v925
    %1528 = vmatprep.subr.bf16.mxu0 %v922
    %1529 = vmatpush1.bf16.msra.mxu0 %v921
    %1530 = vmatprep.subr.bf16.mxu0 %v918
    %1531 = vmatpush1.bf16.msra.mxu0 %v917
    %1532 = vmatprep.subr.bf16.mxu0 %v914
    %1533 = vmatpush1.bf16.msra.mxu0 %v913
    %1534 = vmatprep.subr.bf16.mxu0 %v910
    %1535 = vmatpush1.bf16.msra.mxu0 %v909
    %1536 = vmatprep.subr.bf16.mxu0 %v970
    %1537 = vmatpush2.bf16.msra.mxu0 %v969
    %1538 = vmatprep.subr.bf16.mxu0 %v966
    %1539 = vmatpush2.bf16.msra.mxu0 %v965
    %1540 = vmatprep.subr.bf16.mxu0 %v962
    %1541 = vmatpush2.bf16.msra.mxu0 %v961
    %1542 = vmatprep.subr.bf16.mxu0 %v958
    %1543 = vmatpush2.bf16.msra.mxu0 %v957
    %1544 = vmatprep.subr.bf16.mxu0 %v954
    %1545 = vmatpush2.bf16.msra.mxu0 %v953
    %1546 = vmatprep.subr.bf16.mxu0 %v950
    %1547 = vmatpush2.bf16.msra.mxu0 %v949
    %1548 = vmatprep.subr.bf16.mxu0 %v946
    %1549 = vmatpush2.bf16.msra.mxu0 %v945
    %1550 = vmatprep.subr.bf16.mxu0 %v942
    %1551 = vmatpush2.bf16.msra.mxu0 %v941
    %1552 = vmatprep.mubr.bf16.mxu0 %v1478
    %1553 = vmatmul.mubr.bf16.gmra.mxu0 %v1477
    %v1554 = vpop.f32.mrf.mxu0
    %v1555 = vadd.f32 %v334, %v1554
    %v1556 = vpop.f32.mrf.mxu0
    %v1557 = vadd.f32 %v338, %v1556
    %v1558 = vpop.f32.mrf.mxu0
    %v1559 = vpop.f32.mrf.mxu0
    %1560 = vdwg.mxu0
    %v1561 = vxor.u32 %v1514, 2147483648
    %v1562 = vxor.u32 %v1516, 2147483648
    %v1563 = vxor.u32 %v1555, 2147483648
    %v1564 = vmul.f32 %v1561, 1.442695
    %v1565 = vpow.pop %v1564
    %v1566 = vmul.f32 %v1562, 1.442695
    %v1567 = vpow.pop %v1566
    %v1568 = vmul.f32 %v1563, 1.442695
    %v1569 = vpow.pop %v1568
    %v1570 = vadd.f32 %v1565, 1.0
    %v1571 = vadd.f32 %v1567, 1.0
    %v1572 = vadd.f32 %v1569, 1.0
    %v1573 = vrcp.pop %v1570
    %v1574 = vmul.f32 1.0, %v1573
    %v1575 = vrcp.pop %v1571
    %v1576 = vmul.f32 1.0, %v1575
    %v1577 = vrcp.pop %v1572
    %v1578 = vmul.f32 1.0, %v1577
    %v1579 = vtanh.pop %v1557
    %v1580 = vmul.f32 %v1576, %v1360
    %v1581 = vmul.f32 %v1574, %v1579
    %v1582 = vadd.f32 %v1580, %v1581
    %v1583 = vtanh.pop %v1582
    %v1584 = vmul.f32 %v1578, %v1583
    %v1585 = vld [vmem:[#allocation2 + $0x60] sm:$0xff]
    %v1586 = vld [vmem:[#allocation2 + $0x68] sm:$0xff]
    %v1587 = vld [vmem:[#allocation2 + $0x70] sm:$0xff]
    %v1588 = vld [vmem:[#allocation2 + $0x78] sm:$0xff]
    %1589 = vmatprep.subr.bf16.mxu0 %v504
    %1590 = vmatpush1.bf16.msra.mxu0 %v503
    %1591 = vmatprep.subr.bf16.mxu0 %v500
    %1592 = vmatpush1.bf16.msra.mxu0 %v499
    %1593 = vmatprep.subr.bf16.mxu0 %v496
    %1594 = vmatpush1.bf16.msra.mxu0 %v495
    %1595 = vmatprep.subr.bf16.mxu0 %v492
    %1596 = vmatpush1.bf16.msra.mxu0 %v491
    %1597 = vmatprep.subr.bf16.mxu0 %v488
    %1598 = vmatpush1.bf16.msra.mxu0 %v487
    %1599 = vmatprep.subr.bf16.mxu0 %v484
    %1600 = vmatpush1.bf16.msra.mxu0 %v483
    %1601 = vmatprep.subr.bf16.mxu0 %v480
    %1602 = vmatpush1.bf16.msra.mxu0 %v479
    %1603 = vmatprep.subr.bf16.mxu0 %v476
    %1604 = vmatpush1.bf16.msra.mxu0 %v475
    %1605 = vmatprep.subr.bf16.mxu0 0
    %1606 = vmatpush2.bf16.msra.mxu0 0
    %1607 = vmatprep.subr.bf16.mxu0 0
    %1608 = vmatpush2.bf16.msra.mxu0 0
    %1609 = vmatprep.subr.bf16.mxu0 0
    %1610 = vmatpush2.bf16.msra.mxu0 0
    %1611 = vmatprep.subr.bf16.mxu0 0
    %1612 = vmatpush2.bf16.msra.mxu0 0
    %1613 = vmatprep.subr.bf16.mxu0 0
    %1614 = vmatpush2.bf16.msra.mxu0 0
    %1615 = vmatprep.subr.bf16.mxu0 0
    %1616 = vmatpush2.bf16.msra.mxu0 0
    %1617 = vmatprep.subr.bf16.mxu0 0
    %1618 = vmatpush2.bf16.msra.mxu0 0
    %1619 = vmatprep.subr.bf16.mxu0 0
    %1620 = vmatpush2.bf16.msra.mxu0 0
    %1621 = vmatprep.mubr.bf16.mxu0 0
    %1622 = vmatmul.mubr.bf16.gmra.mxu0 %v1477
    %v1623 = vpop.f32.mrf.mxu0
    %v1624 = vadd.f32 0.0, %v1623
    %v1625 = vpop.f32.mrf.mxu0
    %v1626 = vadd.f32 0.0, %v1625
    %v1627 = vpop.f32.mrf.mxu0
    %v1628 = vpop.f32.mrf.mxu0
    %1629 = vdwg.mxu0
    %1630 = vmatprep.subr.bf16.mxu0 %v506
    %1631 = vmatpush1.bf16.msra.mxu0 %v505
    %1632 = vmatprep.subr.bf16.mxu0 %v502
    %1633 = vmatpush1.bf16.msra.mxu0 %v501
    %1634 = vmatprep.subr.bf16.mxu0 %v498
    %1635 = vmatpush1.bf16.msra.mxu0 %v497
    %1636 = vmatprep.subr.bf16.mxu0 %v494
    %1637 = vmatpush1.bf16.msra.mxu0 %v493
    %1638 = vmatprep.subr.bf16.mxu0 %v490
    %1639 = vmatpush1.bf16.msra.mxu0 %v489
    %1640 = vmatprep.subr.bf16.mxu0 %v486
    %1641 = vmatpush1.bf16.msra.mxu0 %v485
    %1642 = vmatprep.subr.bf16.mxu0 %v482
    %1643 = vmatpush1.bf16.msra.mxu0 %v481
    %1644 = vmatprep.subr.bf16.mxu0 %v478
    %1645 = vmatpush1.bf16.msra.mxu0 %v477
    %1646 = vmatprep.subr.bf16.mxu0 0
    %1647 = vmatpush2.bf16.msra.mxu0 0
    %1648 = vmatprep.subr.bf16.mxu0 0
    %1649 = vmatpush2.bf16.msra.mxu0 0
    %1650 = vmatprep.subr.bf16.mxu0 0
    %1651 = vmatpush2.bf16.msra.mxu0 0
    %1652 = vmatprep.subr.bf16.mxu0 0
    %1653 = vmatpush2.bf16.msra.mxu0 0
    %1654 = vmatprep.subr.bf16.mxu0 0
    %1655 = vmatpush2.bf16.msra.mxu0 0
    %1656 = vmatprep.subr.bf16.mxu0 0
    %1657 = vmatpush2.bf16.msra.mxu0 0
    %1658 = vmatprep.subr.bf16.mxu0 0
    %1659 = vmatpush2.bf16.msra.mxu0 0
    %1660 = vmatprep.subr.bf16.mxu0 0
    %1661 = vmatpush2.bf16.msra.mxu0 0
    %1662 = vmatprep.mubr.bf16.mxu0 0
    %1663 = vmatmul.mubr.bf16.gmra.mxu0 %v1477
    %v1664 = vpop.f32.mrf.mxu0
    %v1665 = vadd.f32 0.0, %v1664
    %v1666 = vpop.f32.mrf.mxu0
    %v1667 = vadd.f32 0.0, %v1666
    %v1668 = vpop.f32.mrf.mxu0
    %v1669 = vpop.f32.mrf.mxu0
    %1670 = vdwg.mxu0
    %v1671 = vadd.f32 %v1585, %v1624
    %v1672 = vadd.f32 %v1586, %v1626
    %v1673 = vadd.f32 %v1587, %v1665
    %v1674 = vadd.f32 %v1588, %v1667
    %v1675 = vxor.u32 %v1671, 2147483648
    %v1676 = vxor.u32 %v1672, 2147483648
    %v1677 = vxor.u32 %v1673, 2147483648
    %v1678 = vmul.f32 %v1675, 1.442695
    %v1679 = vpow.pop %v1678
    %v1680 = vmul.f32 %v1676, 1.442695
    %v1681 = vpow.pop %v1680
    %v1682 = vmul.f32 %v1677, 1.442695
    %v1683 = vpow.pop %v1682
    %v1684 = vadd.f32 %v1679, 1.0
    %v1685 = vadd.f32 %v1681, 1.0
    %v1686 = vadd.f32 %v1683, 1.0
    %v1687 = vrcp.pop %v1684
    %v1688 = vmul.f32 1.0, %v1687
    %v1689 = vrcp.pop %v1685
    %v1690 = vmul.f32 1.0, %v1689
    %v1691 = vrcp.pop %v1686
    %v1692 = vmul.f32 1.0, %v1691
    %v1693 = vtanh.pop %v1674
    %v1694 = vmul.f32 %v1690, %v1474
    %v1695 = vmul.f32 %v1688, %v1693
    %v1696 = vadd.f32 %v1694, %v1695
    %v1697 = vtanh.pop %v1696
    %v1698 = vmul.f32 %v1692, %v1697
    %v1699 = vpack.c.bf16 %v1698, %v1698
    %v1700 = vpack.c.bf16 %v1584, %v1584
    %1701 = vmatprep.subr.bf16.mxu0 %v936
    %1702 = vmatpush1.bf16.msra.mxu0 %v935
    %1703 = vmatprep.subr.bf16.mxu0 %v932
    %1704 = vmatpush1.bf16.msra.mxu0 %v931
    %1705 = vmatprep.subr.bf16.mxu0 %v928
    %1706 = vmatpush1.bf16.msra.mxu0 %v927
    %1707 = vmatprep.subr.bf16.mxu0 %v924
    %1708 = vmatpush1.bf16.msra.mxu0 %v923
    %1709 = vmatprep.subr.bf16.mxu0 %v920
    %1710 = vmatpush1.bf16.msra.mxu0 %v919
    %1711 = vmatprep.subr.bf16.mxu0 %v916
    %1712 = vmatpush1.bf16.msra.mxu0 %v915
    %1713 = vmatprep.subr.bf16.mxu0 %v912
    %1714 = vmatpush1.bf16.msra.mxu0 %v911
    %1715 = vmatprep.subr.bf16.mxu0 %v908
    %1716 = vmatpush1.bf16.msra.mxu0 %v907
    %1717 = vmatprep.subr.bf16.mxu0 %v968
    %1718 = vmatpush2.bf16.msra.mxu0 %v967
    %1719 = vmatprep.subr.bf16.mxu0 %v964
    %1720 = vmatpush2.bf16.msra.mxu0 %v963
    %1721 = vmatprep.subr.bf16.mxu0 %v960
    %1722 = vmatpush2.bf16.msra.mxu0 %v959
    %1723 = vmatprep.subr.bf16.mxu0 %v956
    %1724 = vmatpush2.bf16.msra.mxu0 %v955
    %1725 = vmatprep.subr.bf16.mxu0 %v952
    %1726 = vmatpush2.bf16.msra.mxu0 %v951
    %1727 = vmatprep.subr.bf16.mxu0 %v948
    %1728 = vmatpush2.bf16.msra.mxu0 %v947
    %1729 = vmatprep.subr.bf16.mxu0 %v944
    %1730 = vmatpush2.bf16.msra.mxu0 %v943
    %1731 = vmatprep.subr.bf16.mxu0 %v940
    %1732 = vmatpush2.bf16.msra.mxu0 %v939
    %1733 = vmatprep.mubr.bf16.mxu0 %v1700
    %1734 = vmatmul.mubr.bf16.gmra.mxu0 %v1699
    %v1735 = vpop.f32.mrf.mxu0
    %v1736 = vadd.f32 %v326, %v1735
    %v1737 = vpop.f32.mrf.mxu0
    %v1738 = vadd.f32 %v330, %v1737
    %v1739 = vpop.f32.mrf.mxu0
    %v1740 = vpop.f32.mrf.mxu0
    %1741 = vdwg.mxu0
    %1742 = vmatprep.subr.bf16.mxu0 %v938
    %1743 = vmatpush1.bf16.msra.mxu0 %v937
    %1744 = vmatprep.subr.bf16.mxu0 %v934
    %1745 = vmatpush1.bf16.msra.mxu0 %v933
    %1746 = vmatprep.subr.bf16.mxu0 %v930
    %1747 = vmatpush1.bf16.msra.mxu0 %v929
    %1748 = vmatprep.subr.bf16.mxu0 %v926
    %1749 = vmatpush1.bf16.msra.mxu0 %v925
    %1750 = vmatprep.subr.bf16.mxu0 %v922
    %1751 = vmatpush1.bf16.msra.mxu0 %v921
    %1752 = vmatprep.subr.bf16.mxu0 %v918
    %1753 = vmatpush1.bf16.msra.mxu0 %v917
    %1754 = vmatprep.subr.bf16.mxu0 %v914
    %1755 = vmatpush1.bf16.msra.mxu0 %v913
    %1756 = vmatprep.subr.bf16.mxu0 %v910
    %1757 = vmatpush1.bf16.msra.mxu0 %v909
    %1758 = vmatprep.subr.bf16.mxu0 %v970
    %1759 = vmatpush2.bf16.msra.mxu0 %v969
    %1760 = vmatprep.subr.bf16.mxu0 %v966
    %1761 = vmatpush2.bf16.msra.mxu0 %v965
    %1762 = vmatprep.subr.bf16.mxu0 %v962
    %1763 = vmatpush2.bf16.msra.mxu0 %v961
    %1764 = vmatprep.subr.bf16.mxu0 %v958
    %1765 = vmatpush2.bf16.msra.mxu0 %v957
    %1766 = vmatprep.subr.bf16.mxu0 %v954
    %1767 = vmatpush2.bf16.msra.mxu0 %v953
    %1768 = vmatprep.subr.bf16.mxu0 %v950
    %1769 = vmatpush2.bf16.msra.mxu0 %v949
    %1770 = vmatprep.subr.bf16.mxu0 %v946
    %1771 = vmatpush2.bf16.msra.mxu0 %v945
    %1772 = vmatprep.subr.bf16.mxu0 %v942
    %1773 = vmatpush2.bf16.msra.mxu0 %v941
    %1774 = vmatprep.mubr.bf16.mxu0 %v1700
    %1775 = vmatmul.mubr.bf16.gmra.mxu0 %v1699
    %v1776 = vpop.f32.mrf.mxu0
    %v1777 = vadd.f32 %v334, %v1776
    %v1778 = vpop.f32.mrf.mxu0
    %v1779 = vadd.f32 %v338, %v1778
    %v1780 = vpop.f32.mrf.mxu0
    %v1781 = vpop.f32.mrf.mxu0
    %1782 = vdwg.mxu0
    %v1783 = vxor.u32 %v1736, 2147483648
    %v1784 = vxor.u32 %v1738, 2147483648
    %v1785 = vxor.u32 %v1777, 2147483648
    %v1786 = vmul.f32 %v1783, 1.442695
    %v1787 = vpow.pop %v1786
    %v1788 = vmul.f32 %v1784, 1.442695
    %v1789 = vpow.pop %v1788
    %v1790 = vmul.f32 %v1785, 1.442695
    %v1791 = vpow.pop %v1790
    %v1792 = vadd.f32 %v1787, 1.0
    %v1793 = vadd.f32 %v1789, 1.0
    %v1794 = vadd.f32 %v1791, 1.0
    %v1795 = vrcp.pop %v1792
    %v1796 = vmul.f32 1.0, %v1795
    %v1797 = vrcp.pop %v1793
    %v1798 = vmul.f32 1.0, %v1797
    %v1799 = vrcp.pop %v1794
    %v1800 = vmul.f32 1.0, %v1799
    %v1801 = vtanh.pop %v1779
    %v1802 = vmul.f32 %v1798, %v1582
    %v1803 = vmul.f32 %v1796, %v1801
    %v1804 = vadd.f32 %v1802, %v1803
    %v1805 = vtanh.pop %v1804
    %v1806 = vmul.f32 %v1800, %v1805
    %v1807 = vld [vmem:[#allocation2 + $0x80] sm:$0xff]
    %v1808 = vld [vmem:[#allocation2 + $0x88] sm:$0xff]
    %v1809 = vld [vmem:[#allocation2 + $0x90] sm:$0xff]
    %v1810 = vld [vmem:[#allocation2 + $0x98] sm:$0xff]
    %1811 = vmatprep.subr.bf16.mxu0 %v504
    %1812 = vmatpush1.bf16.msra.mxu0 %v503
    %1813 = vmatprep.subr.bf16.mxu0 %v500
    %1814 = vmatpush1.bf16.msra.mxu0 %v499
    %1815 = vmatprep.subr.bf16.mxu0 %v496
    %1816 = vmatpush1.bf16.msra.mxu0 %v495
    %1817 = vmatprep.subr.bf16.mxu0 %v492
    %1818 = vmatpush1.bf16.msra.mxu0 %v491
    %1819 = vmatprep.subr.bf16.mxu0 %v488
    %1820 = vmatpush1.bf16.msra.mxu0 %v487
    %1821 = vmatprep.subr.bf16.mxu0 %v484
    %1822 = vmatpush1.bf16.msra.mxu0 %v483
    %1823 = vmatprep.subr.bf16.mxu0 %v480
    %1824 = vmatpush1.bf16.msra.mxu0 %v479
    %1825 = vmatprep.subr.bf16.mxu0 %v476
    %1826 = vmatpush1.bf16.msra.mxu0 %v475
    %1827 = vmatprep.subr.bf16.mxu0 0
    %1828 = vmatpush2.bf16.msra.mxu0 0
    %1829 = vmatprep.subr.bf16.mxu0 0
    %1830 = vmatpush2.bf16.msra.mxu0 0
    %1831 = vmatprep.subr.bf16.mxu0 0
    %1832 = vmatpush2.bf16.msra.mxu0 0
    %1833 = vmatprep.subr.bf16.mxu0 0
    %1834 = vmatpush2.bf16.msra.mxu0 0
    %1835 = vmatprep.subr.bf16.mxu0 0
    %1836 = vmatpush2.bf16.msra.mxu0 0
    %1837 = vmatprep.subr.bf16.mxu0 0
    %1838 = vmatpush2.bf16.msra.mxu0 0
    %1839 = vmatprep.subr.bf16.mxu0 0
    %1840 = vmatpush2.bf16.msra.mxu0 0
    %1841 = vmatprep.subr.bf16.mxu0 0
    %1842 = vmatpush2.bf16.msra.mxu0 0
    %1843 = vmatprep.mubr.bf16.mxu0 0
    %1844 = vmatmul.mubr.bf16.gmra.mxu0 %v1699
    %v1845 = vpop.f32.mrf.mxu0
    %v1846 = vadd.f32 0.0, %v1845
    %v1847 = vpop.f32.mrf.mxu0
    %v1848 = vadd.f32 0.0, %v1847
    %v1849 = vpop.f32.mrf.mxu0
    %v1850 = vpop.f32.mrf.mxu0
    %1851 = vdwg.mxu0
    %1852 = vmatprep.subr.bf16.mxu0 %v506
    %1853 = vmatpush1.bf16.msra.mxu0 %v505
    %1854 = vmatprep.subr.bf16.mxu0 %v502
    %1855 = vmatpush1.bf16.msra.mxu0 %v501
    %1856 = vmatprep.subr.bf16.mxu0 %v498
    %1857 = vmatpush1.bf16.msra.mxu0 %v497
    %1858 = vmatprep.subr.bf16.mxu0 %v494
    %1859 = vmatpush1.bf16.msra.mxu0 %v493
    %1860 = vmatprep.subr.bf16.mxu0 %v490
    %1861 = vmatpush1.bf16.msra.mxu0 %v489
    %1862 = vmatprep.subr.bf16.mxu0 %v486
    %1863 = vmatpush1.bf16.msra.mxu0 %v485
    %1864 = vmatprep.subr.bf16.mxu0 %v482
    %1865 = vmatpush1.bf16.msra.mxu0 %v481
    %1866 = vmatprep.subr.bf16.mxu0 %v478
    %1867 = vmatpush1.bf16.msra.mxu0 %v477
    %1868 = vmatprep.subr.bf16.mxu0 0
    %1869 = vmatpush2.bf16.msra.mxu0 0
    %1870 = vmatprep.subr.bf16.mxu0 0
    %1871 = vmatpush2.bf16.msra.mxu0 0
    %1872 = vmatprep.subr.bf16.mxu0 0
    %1873 = vmatpush2.bf16.msra.mxu0 0
    %1874 = vmatprep.subr.bf16.mxu0 0
    %1875 = vmatpush2.bf16.msra.mxu0 0
    %1876 = vmatprep.subr.bf16.mxu0 0
    %1877 = vmatpush2.bf16.msra.mxu0 0
    %1878 = vmatprep.subr.bf16.mxu0 0
    %1879 = vmatpush2.bf16.msra.mxu0 0
    %1880 = vmatprep.subr.bf16.mxu0 0
    %1881 = vmatpush2.bf16.msra.mxu0 0
    %1882 = vmatprep.subr.bf16.mxu0 0
    %1883 = vmatpush2.bf16.msra.mxu0 0
    %1884 = vmatprep.mubr.bf16.mxu0 0
    %1885 = vmatmul.mubr.bf16.gmra.mxu0 %v1699
    %v1886 = vpop.f32.mrf.mxu0
    %v1887 = vadd.f32 0.0, %v1886
    %v1888 = vpop.f32.mrf.mxu0
    %v1889 = vadd.f32 0.0, %v1888
    %v1890 = vpop.f32.mrf.mxu0
    %v1891 = vpop.f32.mrf.mxu0
    %1892 = vdwg.mxu0
    %v1893 = vadd.f32 %v1807, %v1846
    %v1894 = vadd.f32 %v1808, %v1848
    %v1895 = vadd.f32 %v1809, %v1887
    %v1896 = vadd.f32 %v1810, %v1889
    %v1897 = vxor.u32 %v1893, 2147483648
    %v1898 = vxor.u32 %v1894, 2147483648
    %v1899 = vxor.u32 %v1895, 2147483648
    %v1900 = vmul.f32 %v1897, 1.442695
    %v1901 = vpow.pop %v1900
    %v1902 = vmul.f32 %v1898, 1.442695
    %v1903 = vpow.pop %v1902
    %v1904 = vmul.f32 %v1899, 1.442695
    %v1905 = vpow.pop %v1904
    %v1906 = vadd.f32 %v1901, 1.0
    %v1907 = vadd.f32 %v1903, 1.0
    %v1908 = vadd.f32 %v1905, 1.0
    %v1909 = vrcp.pop %v1906
    %v1910 = vmul.f32 1.0, %v1909
    %v1911 = vrcp.pop %v1907
    %v1912 = vmul.f32 1.0, %v1911
    %v1913 = vrcp.pop %v1908
    %v1914 = vmul.f32 1.0, %v1913
    %v1915 = vtanh.pop %v1896
    %v1916 = vmul.f32 %v1912, %v1696
    %v1917 = vmul.f32 %v1910, %v1915
    %v1918 = vadd.f32 %v1916, %v1917
    %v1919 = vtanh.pop %v1918
    %v1920 = vmul.f32 %v1914, %v1919
    %v1921 = vpack.c.bf16 %v1920, %v1920
    %v1922 = vpack.c.bf16 %v1806, %v1806
    %1923 = vmatprep.subr.bf16.mxu0 %v936
    %1924 = vmatpush1.bf16.msra.mxu0 %v935
    %1925 = vmatprep.subr.bf16.mxu0 %v932
    %1926 = vmatpush1.bf16.msra.mxu0 %v931
    %1927 = vmatprep.subr.bf16.mxu0 %v928
    %1928 = vmatpush1.bf16.msra.mxu0 %v927
    %1929 = vmatprep.subr.bf16.mxu0 %v924
    %1930 = vmatpush1.bf16.msra.mxu0 %v923
    %1931 = vmatprep.subr.bf16.mxu0 %v920
    %1932 = vmatpush1.bf16.msra.mxu0 %v919
    %1933 = vmatprep.subr.bf16.mxu0 %v916
    %1934 = vmatpush1.bf16.msra.mxu0 %v915
    %1935 = vmatprep.subr.bf16.mxu0 %v912
    %1936 = vmatpush1.bf16.msra.mxu0 %v911
    %1937 = vmatprep.subr.bf16.mxu0 %v908
    %1938 = vmatpush1.bf16.msra.mxu0 %v907
    %1939 = vmatprep.subr.bf16.mxu0 %v968
    %1940 = vmatpush2.bf16.msra.mxu0 %v967
    %1941 = vmatprep.subr.bf16.mxu0 %v964
    %1942 = vmatpush2.bf16.msra.mxu0 %v963
    %1943 = vmatprep.subr.bf16.mxu0 %v960
    %1944 = vmatpush2.bf16.msra.mxu0 %v959
    %1945 = vmatprep.subr.bf16.mxu0 %v956
    %1946 = vmatpush2.bf16.msra.mxu0 %v955
    %1947 = vmatprep.subr.bf16.mxu0 %v952
    %1948 = vmatpush2.bf16.msra.mxu0 %v951
    %1949 = vmatprep.subr.bf16.mxu0 %v948
    %1950 = vmatpush2.bf16.msra.mxu0 %v947
    %1951 = vmatprep.subr.bf16.mxu0 %v944
    %1952 = vmatpush2.bf16.msra.mxu0 %v943
    %1953 = vmatprep.subr.bf16.mxu0 %v940
    %1954 = vmatpush2.bf16.msra.mxu0 %v939
    %1955 = vmatprep.mubr.bf16.mxu0 %v1922
    %1956 = vmatmul.mubr.bf16.gmra.mxu0 %v1921
    %v1957 = vpop.f32.mrf.mxu0
    %v1958 = vadd.f32 %v326, %v1957
    %v1959 = vpop.f32.mrf.mxu0
    %v1960 = vadd.f32 %v330, %v1959
    %v1961 = vpop.f32.mrf.mxu0
    %v1962 = vpop.f32.mrf.mxu0
    %1963 = vdwg.mxu0
    %1964 = vmatprep.subr.bf16.mxu0 %v938
    %1965 = vmatpush1.bf16.msra.mxu0 %v937
    %1966 = vmatprep.subr.bf16.mxu0 %v934
    %1967 = vmatpush1.bf16.msra.mxu0 %v933
    %1968 = vmatprep.subr.bf16.mxu0 %v930
    %1969 = vmatpush1.bf16.msra.mxu0 %v929
    %1970 = vmatprep.subr.bf16.mxu0 %v926
    %1971 = vmatpush1.bf16.msra.mxu0 %v925
    %1972 = vmatprep.subr.bf16.mxu0 %v922
    %1973 = vmatpush1.bf16.msra.mxu0 %v921
    %1974 = vmatprep.subr.bf16.mxu0 %v918
    %1975 = vmatpush1.bf16.msra.mxu0 %v917
    %1976 = vmatprep.subr.bf16.mxu0 %v914
    %1977 = vmatpush1.bf16.msra.mxu0 %v913
    %1978 = vmatprep.subr.bf16.mxu0 %v910
    %1979 = vmatpush1.bf16.msra.mxu0 %v909
    %1980 = vmatprep.subr.bf16.mxu0 %v970
    %1981 = vmatpush2.bf16.msra.mxu0 %v969
    %1982 = vmatprep.subr.bf16.mxu0 %v966
    %1983 = vmatpush2.bf16.msra.mxu0 %v965
    %1984 = vmatprep.subr.bf16.mxu0 %v962
    %1985 = vmatpush2.bf16.msra.mxu0 %v961
    %1986 = vmatprep.subr.bf16.mxu0 %v958
    %1987 = vmatpush2.bf16.msra.mxu0 %v957
    %1988 = vmatprep.subr.bf16.mxu0 %v954
    %1989 = vmatpush2.bf16.msra.mxu0 %v953
    %1990 = vmatprep.subr.bf16.mxu0 %v950
    %1991 = vmatpush2.bf16.msra.mxu0 %v949
    %1992 = vmatprep.subr.bf16.mxu0 %v946
    %1993 = vmatpush2.bf16.msra.mxu0 %v945
    %1994 = vmatprep.subr.bf16.mxu0 %v942
    %1995 = vmatpush2.bf16.msra.mxu0 %v941
    %1996 = vmatprep.mubr.bf16.mxu0 %v1922
    %1997 = vmatmul.mubr.bf16.gmra.mxu0 %v1921
    %v1998 = vpop.f32.mrf.mxu0
    %v1999 = vadd.f32 %v334, %v1998
    %v2000 = vpop.f32.mrf.mxu0
    %v2001 = vadd.f32 %v338, %v2000
    %v2002 = vpop.f32.mrf.mxu0
    %v2003 = vpop.f32.mrf.mxu0
    %2004 = vdwg.mxu0
    %v2005 = vxor.u32 %v1958, 2147483648
    %v2006 = vxor.u32 %v1960, 2147483648
    %v2007 = vxor.u32 %v1999, 2147483648
    %v2008 = vmul.f32 %v2005, 1.442695
    %v2009 = vpow.pop %v2008
    %v2010 = vmul.f32 %v2006, 1.442695
    %v2011 = vpow.pop %v2010
    %v2012 = vmul.f32 %v2007, 1.442695
    %v2013 = vpow.pop %v2012
    %v2014 = vadd.f32 %v2009, 1.0
    %v2015 = vadd.f32 %v2011, 1.0
    %v2016 = vadd.f32 %v2013, 1.0
    %v2017 = vrcp.pop %v2014
    %v2018 = vmul.f32 1.0, %v2017
    %v2019 = vrcp.pop %v2015
    %v2020 = vmul.f32 1.0, %v2019
    %v2021 = vrcp.pop %v2016
    %v2022 = vmul.f32 1.0, %v2021
    %v2023 = vtanh.pop %v2001
    %v2024 = vmul.f32 %v2020, %v1804
    %v2025 = vmul.f32 %v2018, %v2023
    %v2026 = vadd.f32 %v2024, %v2025
    %v2027 = vtanh.pop %v2026
    %v2028 = vmul.f32 %v2022, %v2027
    %v2029 = vld [vmem:[#allocation2 + $0xa0] sm:$0xff]
    %v2030 = vld [vmem:[#allocation2 + $0xa8] sm:$0xff]
    %v2031 = vld [vmem:[#allocation2 + $0xb0] sm:$0xff]
    %v2032 = vld [vmem:[#allocation2 + $0xb8] sm:$0xff]
    %2033 = vmatprep.subr.bf16.mxu0 %v504
    %2034 = vmatpush1.bf16.msra.mxu0 %v503
    %2035 = vmatprep.subr.bf16.mxu0 %v500
    %2036 = vmatpush1.bf16.msra.mxu0 %v499
    %2037 = vmatprep.subr.bf16.mxu0 %v496
    %2038 = vmatpush1.bf16.msra.mxu0 %v495
    %2039 = vmatprep.subr.bf16.mxu0 %v492
    %2040 = vmatpush1.bf16.msra.mxu0 %v491
    %2041 = vmatprep.subr.bf16.mxu0 %v488
    %2042 = vmatpush1.bf16.msra.mxu0 %v487
    %2043 = vmatprep.subr.bf16.mxu0 %v484
    %2044 = vmatpush1.bf16.msra.mxu0 %v483
    %2045 = vmatprep.subr.bf16.mxu0 %v480
    %2046 = vmatpush1.bf16.msra.mxu0 %v479
    %2047 = vmatprep.subr.bf16.mxu0 %v476
    %2048 = vmatpush1.bf16.msra.mxu0 %v475
    %2049 = vmatprep.subr.bf16.mxu0 0
    %2050 = vmatpush2.bf16.msra.mxu0 0
    %2051 = vmatprep.subr.bf16.mxu0 0
    %2052 = vmatpush2.bf16.msra.mxu0 0
    %2053 = vmatprep.subr.bf16.mxu0 0
    %2054 = vmatpush2.bf16.msra.mxu0 0
    %2055 = vmatprep.subr.bf16.mxu0 0
    %2056 = vmatpush2.bf16.msra.mxu0 0
    %2057 = vmatprep.subr.bf16.mxu0 0
    %2058 = vmatpush2.bf16.msra.mxu0 0
    %2059 = vmatprep.subr.bf16.mxu0 0
    %2060 = vmatpush2.bf16.msra.mxu0 0
    %2061 = vmatprep.subr.bf16.mxu0 0
    %2062 = vmatpush2.bf16.msra.mxu0 0
    %2063 = vmatprep.subr.bf16.mxu0 0
    %2064 = vmatpush2.bf16.msra.mxu0 0
    %2065 = vmatprep.mubr.bf16.mxu0 0
    %2066 = vmatmul.mubr.bf16.gmra.mxu0 %v1921
    %v2067 = vpop.f32.mrf.mxu0
    %v2068 = vadd.f32 0.0, %v2067
    %v2069 = vpop.f32.mrf.mxu0
    %v2070 = vadd.f32 0.0, %v2069
    %v2071 = vpop.f32.mrf.mxu0
    %v2072 = vpop.f32.mrf.mxu0
    %2073 = vdwg.mxu0
    %2074 = vmatprep.subr.bf16.mxu0 %v506
    %2075 = vmatpush1.bf16.msra.mxu0 %v505
    %2076 = vmatprep.subr.bf16.mxu0 %v502
    %2077 = vmatpush1.bf16.msra.mxu0 %v501
    %2078 = vmatprep.subr.bf16.mxu0 %v498
    %2079 = vmatpush1.bf16.msra.mxu0 %v497
    %2080 = vmatprep.subr.bf16.mxu0 %v494
    %2081 = vmatpush1.bf16.msra.mxu0 %v493
    %2082 = vmatprep.subr.bf16.mxu0 %v490
    %2083 = vmatpush1.bf16.msra.mxu0 %v489
    %2084 = vmatprep.subr.bf16.mxu0 %v486
    %2085 = vmatpush1.bf16.msra.mxu0 %v485
    %2086 = vmatprep.subr.bf16.mxu0 %v482
    %2087 = vmatpush1.bf16.msra.mxu0 %v481
    %2088 = vmatprep.subr.bf16.mxu0 %v478
    %2089 = vmatpush1.bf16.msra.mxu0 %v477
    %2090 = vmatprep.subr.bf16.mxu0 0
    %2091 = vmatpush2.bf16.msra.mxu0 0
    %2092 = vmatprep.subr.bf16.mxu0 0
    %2093 = vmatpush2.bf16.msra.mxu0 0
    %2094 = vmatprep.subr.bf16.mxu0 0
    %2095 = vmatpush2.bf16.msra.mxu0 0
    %2096 = vmatprep.subr.bf16.mxu0 0
    %2097 = vmatpush2.bf16.msra.mxu0 0
    %2098 = vmatprep.subr.bf16.mxu0 0
    %2099 = vmatpush2.bf16.msra.mxu0 0
    %2100 = vmatprep.subr.bf16.mxu0 0
    %2101 = vmatpush2.bf16.msra.mxu0 0
    %2102 = vmatprep.subr.bf16.mxu0 0
    %2103 = vmatpush2.bf16.msra.mxu0 0
    %2104 = vmatprep.subr.bf16.mxu0 0
    %2105 = vmatpush2.bf16.msra.mxu0 0
    %2106 = vmatprep.mubr.bf16.mxu0 0
    %2107 = vmatmul.mubr.bf16.gmra.mxu0 %v1921
    %v2108 = vpop.f32.mrf.mxu0
    %v2109 = vadd.f32 0.0, %v2108
    %v2110 = vpop.f32.mrf.mxu0
    %v2111 = vadd.f32 0.0, %v2110
    %v2112 = vpop.f32.mrf.mxu0
    %v2113 = vpop.f32.mrf.mxu0
    %2114 = vdwg.mxu0
    %v2115 = vadd.f32 %v2029, %v2068
    %v2116 = vadd.f32 %v2030, %v2070
    %v2117 = vadd.f32 %v2031, %v2109
    %v2118 = vadd.f32 %v2032, %v2111
    %v2119 = vxor.u32 %v2115, 2147483648
    %v2120 = vxor.u32 %v2116, 2147483648
    %v2121 = vxor.u32 %v2117, 2147483648
    %v2122 = vmul.f32 %v2119, 1.442695
    %v2123 = vpow.pop %v2122
    %v2124 = vmul.f32 %v2120, 1.442695
    %v2125 = vpow.pop %v2124
    %v2126 = vmul.f32 %v2121, 1.442695
    %v2127 = vpow.pop %v2126
    %v2128 = vadd.f32 %v2123, 1.0
    %v2129 = vadd.f32 %v2125, 1.0
    %v2130 = vadd.f32 %v2127, 1.0
    %v2131 = vrcp.pop %v2128
    %v2132 = vmul.f32 1.0, %v2131
    %v2133 = vrcp.pop %v2129
    %v2134 = vmul.f32 1.0, %v2133
    %v2135 = vrcp.pop %v2130
    %v2136 = vmul.f32 1.0, %v2135
    %v2137 = vtanh.pop %v2118
    %v2138 = vmul.f32 %v2134, %v1918
    %v2139 = vmul.f32 %v2132, %v2137
    %v2140 = vadd.f32 %v2138, %v2139
    %v2141 = vtanh.pop %v2140
    %v2142 = vmul.f32 %v2136, %v2141
    %v2143 = vpack.c.bf16 %v2142, %v2142
    %v2144 = vpack.c.bf16 %v2028, %v2028
    %2145 = vmatprep.subr.bf16.mxu0 %v936
    %2146 = vmatpush1.bf16.msra.mxu0 %v935
    %2147 = vmatprep.subr.bf16.mxu0 %v932
    %2148 = vmatpush1.bf16.msra.mxu0 %v931
    %2149 = vmatprep.subr.bf16.mxu0 %v928
    %2150 = vmatpush1.bf16.msra.mxu0 %v927
    %2151 = vmatprep.subr.bf16.mxu0 %v924
    %2152 = vmatpush1.bf16.msra.mxu0 %v923
    %2153 = vmatprep.subr.bf16.mxu0 %v920
    %2154 = vmatpush1.bf16.msra.mxu0 %v919
    %2155 = vmatprep.subr.bf16.mxu0 %v916
    %2156 = vmatpush1.bf16.msra.mxu0 %v915
    %2157 = vmatprep.subr.bf16.mxu0 %v912
    %2158 = vmatpush1.bf16.msra.mxu0 %v911
    %2159 = vmatprep.subr.bf16.mxu0 %v908
    %2160 = vmatpush1.bf16.msra.mxu0 %v907
    %2161 = vmatprep.subr.bf16.mxu0 %v968
    %2162 = vmatpush2.bf16.msra.mxu0 %v967
    %2163 = vmatprep.subr.bf16.mxu0 %v964
    %2164 = vmatpush2.bf16.msra.mxu0 %v963
    %2165 = vmatprep.subr.bf16.mxu0 %v960
    %2166 = vmatpush2.bf16.msra.mxu0 %v959
    %2167 = vmatprep.subr.bf16.mxu0 %v956
    %2168 = vmatpush2.bf16.msra.mxu0 %v955
    %2169 = vmatprep.subr.bf16.mxu0 %v952
    %2170 = vmatpush2.bf16.msra.mxu0 %v951
    %2171 = vmatprep.subr.bf16.mxu0 %v948
    %2172 = vmatpush2.bf16.msra.mxu0 %v947
    %2173 = vmatprep.subr.bf16.mxu0 %v944
    %2174 = vmatpush2.bf16.msra.mxu0 %v943
    %2175 = vmatprep.subr.bf16.mxu0 %v940
    %2176 = vmatpush2.bf16.msra.mxu0 %v939
    %2177 = vmatprep.mubr.bf16.mxu0 %v2144
    %2178 = vmatmul.mubr.bf16.gmra.mxu0 %v2143
    %v2179 = vpop.f32.mrf.mxu0
    %v2180 = vadd.f32 %v326, %v2179
    %v2181 = vpop.f32.mrf.mxu0
    %v2182 = vadd.f32 %v330, %v2181
    %v2183 = vpop.f32.mrf.mxu0
    %v2184 = vpop.f32.mrf.mxu0
    %2185 = vdwg.mxu0
    %2186 = vmatprep.subr.bf16.mxu0 %v938
    %2187 = vmatpush1.bf16.msra.mxu0 %v937
    %2188 = vmatprep.subr.bf16.mxu0 %v934
    %2189 = vmatpush1.bf16.msra.mxu0 %v933
    %2190 = vmatprep.subr.bf16.mxu0 %v930
    %2191 = vmatpush1.bf16.msra.mxu0 %v929
    %2192 = vmatprep.subr.bf16.mxu0 %v926
    %2193 = vmatpush1.bf16.msra.mxu0 %v925
    %2194 = vmatprep.subr.bf16.mxu0 %v922
    %2195 = vmatpush1.bf16.msra.mxu0 %v921
    %2196 = vmatprep.subr.bf16.mxu0 %v918
    %2197 = vmatpush1.bf16.msra.mxu0 %v917
    %2198 = vmatprep.subr.bf16.mxu0 %v914
    %2199 = vmatpush1.bf16.msra.mxu0 %v913
    %2200 = vmatprep.subr.bf16.mxu0 %v910
    %2201 = vmatpush1.bf16.msra.mxu0 %v909
    %2202 = vmatprep.subr.bf16.mxu0 %v970
    %2203 = vmatpush2.bf16.msra.mxu0 %v969
    %2204 = vmatprep.subr.bf16.mxu0 %v966
    %2205 = vmatpush2.bf16.msra.mxu0 %v965
    %2206 = vmatprep.subr.bf16.mxu0 %v962
    %2207 = vmatpush2.bf16.msra.mxu0 %v961
    %2208 = vmatprep.subr.bf16.mxu0 %v958
    %2209 = vmatpush2.bf16.msra.mxu0 %v957
    %2210 = vmatprep.subr.bf16.mxu0 %v954
    %2211 = vmatpush2.bf16.msra.mxu0 %v953
    %2212 = vmatprep.subr.bf16.mxu0 %v950
    %2213 = vmatpush2.bf16.msra.mxu0 %v949
    %2214 = vmatprep.subr.bf16.mxu0 %v946
    %2215 = vmatpush2.bf16.msra.mxu0 %v945
    %2216 = vmatprep.subr.bf16.mxu0 %v942
    %2217 = vmatpush2.bf16.msra.mxu0 %v941
    %2218 = vmatprep.mubr.bf16.mxu0 %v2144
    %2219 = vmatmul.mubr.bf16.gmra.mxu0 %v2143
    %v2220 = vpop.f32.mrf.mxu0
    %v2221 = vadd.f32 %v334, %v2220
    %v2222 = vpop.f32.mrf.mxu0
    %v2223 = vadd.f32 %v338, %v2222
    %v2224 = vpop.f32.mrf.mxu0
    %v2225 = vpop.f32.mrf.mxu0
    %2226 = vdwg.mxu0
    %v2227 = vxor.u32 %v2180, 2147483648
    %v2228 = vxor.u32 %v2182, 2147483648
    %v2229 = vxor.u32 %v2221, 2147483648
    %v2230 = vmul.f32 %v2227, 1.442695
    %v2231 = vpow.pop %v2230
    %v2232 = vmul.f32 %v2228, 1.442695
    %v2233 = vpow.pop %v2232
    %v2234 = vmul.f32 %v2229, 1.442695
    %v2235 = vpow.pop %v2234
    %v2236 = vadd.f32 %v2231, 1.0
    %v2237 = vadd.f32 %v2233, 1.0
    %v2238 = vadd.f32 %v2235, 1.0
    %v2239 = vrcp.pop %v2236
    %v2240 = vmul.f32 1.0, %v2239
    %v2241 = vrcp.pop %v2237
    %v2242 = vmul.f32 1.0, %v2241
    %v2243 = vrcp.pop %v2238
    %v2244 = vmul.f32 1.0, %v2243
    %v2245 = vtanh.pop %v2223
    %v2246 = vmul.f32 %v2242, %v2026
    %v2247 = vmul.f32 %v2240, %v2245
    %v2248 = vadd.f32 %v2246, %v2247
    %v2249 = vtanh.pop %v2248
    %v2250 = vmul.f32 %v2244, %v2249
    %v2251 = vld [vmem:[#allocation2 + $0xc0] sm:$0xff]
    %v2252 = vld [vmem:[#allocation2 + $0xc8] sm:$0xff]
    %v2253 = vld [vmem:[#allocation2 + $0xd0] sm:$0xff]
    %v2254 = vld [vmem:[#allocation2 + $0xd8] sm:$0xff]
    %2255 = vmatprep.subr.bf16.mxu0 %v504
    %2256 = vmatpush1.bf16.msra.mxu0 %v503
    %2257 = vmatprep.subr.bf16.mxu0 %v500
    %2258 = vmatpush1.bf16.msra.mxu0 %v499
    %2259 = vmatprep.subr.bf16.mxu0 %v496
    %2260 = vmatpush1.bf16.msra.mxu0 %v495
    %2261 = vmatprep.subr.bf16.mxu0 %v492
    %2262 = vmatpush1.bf16.msra.mxu0 %v491
    %2263 = vmatprep.subr.bf16.mxu0 %v488
    %2264 = vmatpush1.bf16.msra.mxu0 %v487
    %2265 = vmatprep.subr.bf16.mxu0 %v484
    %2266 = vmatpush1.bf16.msra.mxu0 %v483
    %2267 = vmatprep.subr.bf16.mxu0 %v480
    %2268 = vmatpush1.bf16.msra.mxu0 %v479
    %2269 = vmatprep.subr.bf16.mxu0 %v476
    %2270 = vmatpush1.bf16.msra.mxu0 %v475
    %2271 = vmatprep.subr.bf16.mxu0 0
    %2272 = vmatpush2.bf16.msra.mxu0 0
    %2273 = vmatprep.subr.bf16.mxu0 0
    %2274 = vmatpush2.bf16.msra.mxu0 0
    %2275 = vmatprep.subr.bf16.mxu0 0
    %2276 = vmatpush2.bf16.msra.mxu0 0
    %2277 = vmatprep.subr.bf16.mxu0 0
    %2278 = vmatpush2.bf16.msra.mxu0 0
    %2279 = vmatprep.subr.bf16.mxu0 0
    %2280 = vmatpush2.bf16.msra.mxu0 0
    %2281 = vmatprep.subr.bf16.mxu0 0
    %2282 = vmatpush2.bf16.msra.mxu0 0
    %2283 = vmatprep.subr.bf16.mxu0 0
    %2284 = vmatpush2.bf16.msra.mxu0 0
    %2285 = vmatprep.subr.bf16.mxu0 0
    %2286 = vmatpush2.bf16.msra.mxu0 0
    %2287 = vmatprep.mubr.bf16.mxu0 0
    %2288 = vmatmul.mubr.bf16.gmra.mxu0 %v2143
    %v2289 = vpop.f32.mrf.mxu0
    %v2290 = vadd.f32 0.0, %v2289
    %v2291 = vpop.f32.mrf.mxu0
    %v2292 = vadd.f32 0.0, %v2291
    %v2293 = vpop.f32.mrf.mxu0
    %v2294 = vpop.f32.mrf.mxu0
    %2295 = vdwg.mxu0
    %2296 = vmatprep.subr.bf16.mxu0 %v506
    %2297 = vmatpush1.bf16.msra.mxu0 %v505
    %2298 = vmatprep.subr.bf16.mxu0 %v502
    %2299 = vmatpush1.bf16.msra.mxu0 %v501
    %2300 = vmatprep.subr.bf16.mxu0 %v498
    %2301 = vmatpush1.bf16.msra.mxu0 %v497
    %2302 = vmatprep.subr.bf16.mxu0 %v494
    %2303 = vmatpush1.bf16.msra.mxu0 %v493
    %2304 = vmatprep.subr.bf16.mxu0 %v490
    %2305 = vmatpush1.bf16.msra.mxu0 %v489
    %2306 = vmatprep.subr.bf16.mxu0 %v486
    %2307 = vmatpush1.bf16.msra.mxu0 %v485
    %2308 = vmatprep.subr.bf16.mxu0 %v482
    %2309 = vmatpush1.bf16.msra.mxu0 %v481
    %2310 = vmatprep.subr.bf16.mxu0 %v478
    %2311 = vmatpush1.bf16.msra.mxu0 %v477
    %2312 = vmatprep.subr.bf16.mxu0 0
    %2313 = vmatpush2.bf16.msra.mxu0 0
    %2314 = vmatprep.subr.bf16.mxu0 0
    %2315 = vmatpush2.bf16.msra.mxu0 0
    %2316 = vmatprep.subr.bf16.mxu0 0
    %2317 = vmatpush2.bf16.msra.mxu0 0
    %2318 = vmatprep.subr.bf16.mxu0 0
    %2319 = vmatpush2.bf16.msra.mxu0 0
    %2320 = vmatprep.subr.bf16.mxu0 0
    %2321 = vmatpush2.bf16.msra.mxu0 0
    %2322 = vmatprep.subr.bf16.mxu0 0
    %2323 = vmatpush2.bf16.msra.mxu0 0
    %2324 = vmatprep.subr.bf16.mxu0 0
    %2325 = vmatpush2.bf16.msra.mxu0 0
    %2326 = vmatprep.subr.bf16.mxu0 0
    %2327 = vmatpush2.bf16.msra.mxu0 0
    %2328 = vmatprep.mubr.bf16.mxu0 0
    %2329 = vmatmul.mubr.bf16.gmra.mxu0 %v2143
    %v2330 = vpop.f32.mrf.mxu0
    %v2331 = vadd.f32 0.0, %v2330
    %v2332 = vpop.f32.mrf.mxu0
    %v2333 = vadd.f32 0.0, %v2332
    %v2334 = vpop.f32.mrf.mxu0
    %v2335 = vpop.f32.mrf.mxu0
    %2336 = vdwg.mxu0
    %v2337 = vadd.f32 %v2251, %v2290
    %v2338 = vadd.f32 %v2252, %v2292
    %v2339 = vadd.f32 %v2253, %v2331
    %v2340 = vadd.f32 %v2254, %v2333
    %v2341 = vxor.u32 %v2337, 2147483648
    %v2342 = vxor.u32 %v2338, 2147483648
    %v2343 = vxor.u32 %v2339, 2147483648
    %v2344 = vmul.f32 %v2341, 1.442695
    %v2345 = vpow.pop %v2344
    %v2346 = vmul.f32 %v2342, 1.442695
    %v2347 = vpow.pop %v2346
    %v2348 = vmul.f32 %v2343, 1.442695
    %v2349 = vpow.pop %v2348
    %v2350 = vadd.f32 %v2345, 1.0
    %v2351 = vadd.f32 %v2347, 1.0
    %v2352 = vadd.f32 %v2349, 1.0
    %v2353 = vrcp.pop %v2350
    %v2354 = vmul.f32 1.0, %v2353
    %v2355 = vrcp.pop %v2351
    %v2356 = vmul.f32 1.0, %v2355
    %v2357 = vrcp.pop %v2352
    %v2358 = vmul.f32 1.0, %v2357
    %v2359 = vtanh.pop %v2340
    %v2360 = vmul.f32 %v2356, %v2140
    %v2361 = vmul.f32 %v2354, %v2359
    %v2362 = vadd.f32 %v2360, %v2361
    %v2363 = vtanh.pop %v2362
    %v2364 = vmul.f32 %v2358, %v2363
    %v2365 = vpack.c.bf16 %v2364, %v2364
    %v2366 = vpack.c.bf16 %v2250, %v2250
    %2367 = vmatprep.subr.bf16.mxu0 %v936
    %2368 = vmatpush1.bf16.msra.mxu0 %v935
    %2369 = vmatprep.subr.bf16.mxu0 %v932
    %2370 = vmatpush1.bf16.msra.mxu0 %v931
    %2371 = vmatprep.subr.bf16.mxu0 %v928
    %2372 = vmatpush1.bf16.msra.mxu0 %v927
    %2373 = vmatprep.subr.bf16.mxu0 %v924
    %2374 = vmatpush1.bf16.msra.mxu0 %v923
    %2375 = vmatprep.subr.bf16.mxu0 %v920
    %2376 = vmatpush1.bf16.msra.mxu0 %v919
    %2377 = vmatprep.subr.bf16.mxu0 %v916
    %2378 = vmatpush1.bf16.msra.mxu0 %v915
    %2379 = vmatprep.subr.bf16.mxu0 %v912
    %2380 = vmatpush1.bf16.msra.mxu0 %v911
    %2381 = vmatprep.subr.bf16.mxu0 %v908
    %2382 = vmatpush1.bf16.msra.mxu0 %v907
    %2383 = vmatprep.subr.bf16.mxu0 %v968
    %2384 = vmatpush2.bf16.msra.mxu0 %v967
    %2385 = vmatprep.subr.bf16.mxu0 %v964
    %2386 = vmatpush2.bf16.msra.mxu0 %v963
    %2387 = vmatprep.subr.bf16.mxu0 %v960
    %2388 = vmatpush2.bf16.msra.mxu0 %v959
    %2389 = vmatprep.subr.bf16.mxu0 %v956
    %2390 = vmatpush2.bf16.msra.mxu0 %v955
    %2391 = vmatprep.subr.bf16.mxu0 %v952
    %2392 = vmatpush2.bf16.msra.mxu0 %v951
    %2393 = vmatprep.subr.bf16.mxu0 %v948
    %2394 = vmatpush2.bf16.msra.mxu0 %v947
    %2395 = vmatprep.subr.bf16.mxu0 %v944
    %2396 = vmatpush2.bf16.msra.mxu0 %v943
    %2397 = vmatprep.subr.bf16.mxu0 %v940
    %2398 = vmatpush2.bf16.msra.mxu0 %v939
    %2399 = vmatprep.mubr.bf16.mxu0 %v2366
    %2400 = vmatmul.mubr.bf16.gmra.mxu0 %v2365
    %v2401 = vpop.f32.mrf.mxu0
    %v2402 = vadd.f32 %v326, %v2401
    %v2403 = vpop.f32.mrf.mxu0
    %v2404 = vadd.f32 %v330, %v2403
    %v2405 = vpop.f32.mrf.mxu0
    %v2406 = vpop.f32.mrf.mxu0
    %2407 = vdwg.mxu0
    %2408 = vmatprep.subr.bf16.mxu0 %v938
    %2409 = vmatpush1.bf16.msra.mxu0 %v937
    %2410 = vmatprep.subr.bf16.mxu0 %v934
    %2411 = vmatpush1.bf16.msra.mxu0 %v933
    %2412 = vmatprep.subr.bf16.mxu0 %v930
    %2413 = vmatpush1.bf16.msra.mxu0 %v929
    %2414 = vmatprep.subr.bf16.mxu0 %v926
    %2415 = vmatpush1.bf16.msra.mxu0 %v925
    %2416 = vmatprep.subr.bf16.mxu0 %v922
    %2417 = vmatpush1.bf16.msra.mxu0 %v921
    %2418 = vmatprep.subr.bf16.mxu0 %v918
    %2419 = vmatpush1.bf16.msra.mxu0 %v917
    %2420 = vmatprep.subr.bf16.mxu0 %v914
    %2421 = vmatpush1.bf16.msra.mxu0 %v913
    %2422 = vmatprep.subr.bf16.mxu0 %v910
    %2423 = vmatpush1.bf16.msra.mxu0 %v909
    %2424 = vmatprep.subr.bf16.mxu0 %v970
    %2425 = vmatpush2.bf16.msra.mxu0 %v969
    %2426 = vmatprep.subr.bf16.mxu0 %v966
    %2427 = vmatpush2.bf16.msra.mxu0 %v965
    %2428 = vmatprep.subr.bf16.mxu0 %v962
    %2429 = vmatpush2.bf16.msra.mxu0 %v961
    %2430 = vmatprep.subr.bf16.mxu0 %v958
    %2431 = vmatpush2.bf16.msra.mxu0 %v957
    %2432 = vmatprep.subr.bf16.mxu0 %v954
    %2433 = vmatpush2.bf16.msra.mxu0 %v953
    %2434 = vmatprep.subr.bf16.mxu0 %v950
    %2435 = vmatpush2.bf16.msra.mxu0 %v949
    %2436 = vmatprep.subr.bf16.mxu0 %v946
    %2437 = vmatpush2.bf16.msra.mxu0 %v945
    %2438 = vmatprep.subr.bf16.mxu0 %v942
    %2439 = vmatpush2.bf16.msra.mxu0 %v941
    %2440 = vmatprep.mubr.bf16.mxu0 %v2366
    %2441 = vmatmul.mubr.bf16.gmra.mxu0 %v2365
    %v2442 = vpop.f32.mrf.mxu0
    %v2443 = vadd.f32 %v334, %v2442
    %v2444 = vpop.f32.mrf.mxu0
    %v2445 = vadd.f32 %v338, %v2444
    %v2446 = vpop.f32.mrf.mxu0
    %v2447 = vpop.f32.mrf.mxu0
    %2448 = vdwg.mxu0
    %v2449 = vxor.u32 %v2402, 2147483648
    %v2450 = vxor.u32 %v2404, 2147483648
    %v2451 = vxor.u32 %v2443, 2147483648
    %v2452 = vmul.f32 %v2449, 1.442695
    %v2453 = vpow.pop %v2452
    %v2454 = vmul.f32 %v2450, 1.442695
    %v2455 = vpow.pop %v2454
    %v2456 = vmul.f32 %v2451, 1.442695
    %v2457 = vpow.pop %v2456
    %v2458 = vadd.f32 %v2453, 1.0
    %v2459 = vadd.f32 %v2455, 1.0
    %v2460 = vadd.f32 %v2457, 1.0
    %v2461 = vrcp.pop %v2458
    %v2462 = vmul.f32 1.0, %v2461
    %v2463 = vrcp.pop %v2459
    %v2464 = vmul.f32 1.0, %v2463
    %v2465 = vrcp.pop %v2460
    %v2466 = vmul.f32 1.0, %v2465
    %v2467 = vtanh.pop %v2445
    %v2468 = vmul.f32 %v2464, %v2248
    %v2469 = vmul.f32 %v2462, %v2467
    %v2470 = vadd.f32 %v2468, %v2469
    %v2471 = vtanh.pop %v2470
    %v2472 = vmul.f32 %v2466, %v2471
    %v2473 = vld [vmem:[#allocation2 + $0xe0] sm:$0xff]
    %v2474 = vld [vmem:[#allocation2 + $0xe8] sm:$0xff]
    %v2475 = vld [vmem:[#allocation2 + $0xf0] sm:$0xff]
    %v2476 = vld [vmem:[#allocation2 + $0xf8] sm:$0xff]
    %2477 = vmatprep.subr.bf16.mxu0 %v504
    %2478 = vmatpush1.bf16.msra.mxu0 %v503
    %2479 = vmatprep.subr.bf16.mxu0 %v500
    %2480 = vmatpush1.bf16.msra.mxu0 %v499
    %2481 = vmatprep.subr.bf16.mxu0 %v496
    %2482 = vmatpush1.bf16.msra.mxu0 %v495
    %2483 = vmatprep.subr.bf16.mxu0 %v492
    %2484 = vmatpush1.bf16.msra.mxu0 %v491
    %2485 = vmatprep.subr.bf16.mxu0 %v488
    %2486 = vmatpush1.bf16.msra.mxu0 %v487
    %2487 = vmatprep.subr.bf16.mxu0 %v484
    %2488 = vmatpush1.bf16.msra.mxu0 %v483
    %2489 = vmatprep.subr.bf16.mxu0 %v480
    %2490 = vmatpush1.bf16.msra.mxu0 %v479
    %2491 = vmatprep.subr.bf16.mxu0 %v476
    %2492 = vmatpush1.bf16.msra.mxu0 %v475
    %2493 = vmatprep.subr.bf16.mxu0 0
    %2494 = vmatpush2.bf16.msra.mxu0 0
    %2495 = vmatprep.subr.bf16.mxu0 0
    %2496 = vmatpush2.bf16.msra.mxu0 0
    %2497 = vmatprep.subr.bf16.mxu0 0
    %2498 = vmatpush2.bf16.msra.mxu0 0
    %2499 = vmatprep.subr.bf16.mxu0 0
    %2500 = vmatpush2.bf16.msra.mxu0 0
    %2501 = vmatprep.subr.bf16.mxu0 0
    %2502 = vmatpush2.bf16.msra.mxu0 0
    %2503 = vmatprep.subr.bf16.mxu0 0
    %2504 = vmatpush2.bf16.msra.mxu0 0
    %2505 = vmatprep.subr.bf16.mxu0 0
    %2506 = vmatpush2.bf16.msra.mxu0 0
    %2507 = vmatprep.subr.bf16.mxu0 0
    %2508 = vmatpush2.bf16.msra.mxu0 0
    %2509 = vmatprep.mubr.bf16.mxu0 0
    %2510 = vmatmul.mubr.bf16.gmra.mxu0 %v2365
    %v2511 = vpop.f32.mrf.mxu0
    %v2512 = vadd.f32 0.0, %v2511
    %v2513 = vpop.f32.mrf.mxu0
    %v2514 = vadd.f32 0.0, %v2513
    %v2515 = vpop.f32.mrf.mxu0
    %v2516 = vpop.f32.mrf.mxu0
    %2517 = vdwg.mxu0
    %2518 = vmatprep.subr.bf16.mxu0 %v506
    %2519 = vmatpush1.bf16.msra.mxu0 %v505
    %2520 = vmatprep.subr.bf16.mxu0 %v502
    %2521 = vmatpush1.bf16.msra.mxu0 %v501
    %2522 = vmatprep.subr.bf16.mxu0 %v498
    %2523 = vmatpush1.bf16.msra.mxu0 %v497
    %2524 = vmatprep.subr.bf16.mxu0 %v494
    %2525 = vmatpush1.bf16.msra.mxu0 %v493
    %2526 = vmatprep.subr.bf16.mxu0 %v490
    %2527 = vmatpush1.bf16.msra.mxu0 %v489
    %2528 = vmatprep.subr.bf16.mxu0 %v486
    %2529 = vmatpush1.bf16.msra.mxu0 %v485
    %2530 = vmatprep.subr.bf16.mxu0 %v482
    %2531 = vmatpush1.bf16.msra.mxu0 %v481
    %2532 = vmatprep.subr.bf16.mxu0 %v478
    %2533 = vmatpush1.bf16.msra.mxu0 %v477
    %2534 = vmatprep.subr.bf16.mxu0 0
    %2535 = vmatpush2.bf16.msra.mxu0 0
    %2536 = vmatprep.subr.bf16.mxu0 0
    %2537 = vmatpush2.bf16.msra.mxu0 0
    %2538 = vmatprep.subr.bf16.mxu0 0
    %2539 = vmatpush2.bf16.msra.mxu0 0
    %2540 = vmatprep.subr.bf16.mxu0 0
    %2541 = vmatpush2.bf16.msra.mxu0 0
    %2542 = vmatprep.subr.bf16.mxu0 0
    %2543 = vmatpush2.bf16.msra.mxu0 0
    %2544 = vmatprep.subr.bf16.mxu0 0
    %2545 = vmatpush2.bf16.msra.mxu0 0
    %2546 = vmatprep.subr.bf16.mxu0 0
    %2547 = vmatpush2.bf16.msra.mxu0 0
    %2548 = vmatprep.subr.bf16.mxu0 0
    %2549 = vmatpush2.bf16.msra.mxu0 0
    %2550 = vmatprep.mubr.bf16.mxu0 0
    %2551 = vmatmul.mubr.bf16.gmra.mxu0 %v2365
    %v2552 = vpop.f32.mrf.mxu0
    %v2553 = vadd.f32 0.0, %v2552
    %v2554 = vpop.f32.mrf.mxu0
    %v2555 = vadd.f32 0.0, %v2554
    %v2556 = vpop.f32.mrf.mxu0
    %v2557 = vpop.f32.mrf.mxu0
    %2558 = vdwg.mxu0
    %v2559 = vadd.f32 %v2473, %v2512
    %v2560 = vadd.f32 %v2474, %v2514
    %v2561 = vadd.f32 %v2475, %v2553
    %v2562 = vadd.f32 %v2476, %v2555
    %v2563 = vxor.u32 %v2559, 2147483648
    %v2564 = vxor.u32 %v2560, 2147483648
    %v2565 = vxor.u32 %v2561, 2147483648
    %v2566 = vmul.f32 %v2563, 1.442695
    %v2567 = vpow.pop %v2566
    %v2568 = vmul.f32 %v2564, 1.442695
    %v2569 = vpow.pop %v2568
    %v2570 = vmul.f32 %v2565, 1.442695
    %v2571 = vpow.pop %v2570
    %v2572 = vadd.f32 %v2567, 1.0
    %v2573 = vadd.f32 %v2569, 1.0
    %v2574 = vadd.f32 %v2571, 1.0
    %v2575 = vrcp.pop %v2572
    %v2576 = vmul.f32 1.0, %v2575
    %v2577 = vrcp.pop %v2573
    %v2578 = vmul.f32 1.0, %v2577
    %v2579 = vrcp.pop %v2574
    %v2580 = vmul.f32 1.0, %v2579
    %v2581 = vtanh.pop %v2562
    %v2582 = vmul.f32 %v2578, %v2362
    %v2583 = vmul.f32 %v2576, %v2581
    %v2584 = vadd.f32 %v2582, %v2583
    %v2585 = vtanh.pop %v2584
    %v2586 = vmul.f32 %v2580, %v2585
    %v2587 = vpack.c.bf16 %v2586, %v2586
    %v2588 = vpack.c.bf16 %v2472, %v2472
    %2589 = vmatprep.subr.bf16.mxu0 %v936
    %2590 = vmatpush1.bf16.msra.mxu0 %v935
    %2591 = vmatprep.subr.bf16.mxu0 %v932
    %2592 = vmatpush1.bf16.msra.mxu0 %v931
    %2593 = vmatprep.subr.bf16.mxu0 %v928
    %2594 = vmatpush1.bf16.msra.mxu0 %v927
    %2595 = vmatprep.subr.bf16.mxu0 %v924
    %2596 = vmatpush1.bf16.msra.mxu0 %v923
    %2597 = vmatprep.subr.bf16.mxu0 %v920
    %2598 = vmatpush1.bf16.msra.mxu0 %v919
    %2599 = vmatprep.subr.bf16.mxu0 %v916
    %2600 = vmatpush1.bf16.msra.mxu0 %v915
    %2601 = vmatprep.subr.bf16.mxu0 %v912
    %2602 = vmatpush1.bf16.msra.mxu0 %v911
    %2603 = vmatprep.subr.bf16.mxu0 %v908
    %2604 = vmatpush1.bf16.msra.mxu0 %v907
    %2605 = vmatprep.subr.bf16.mxu0 %v968
    %2606 = vmatpush2.bf16.msra.mxu0 %v967
    %2607 = vmatprep.subr.bf16.mxu0 %v964
    %2608 = vmatpush2.bf16.msra.mxu0 %v963
    %2609 = vmatprep.subr.bf16.mxu0 %v960
    %2610 = vmatpush2.bf16.msra.mxu0 %v959
    %2611 = vmatprep.subr.bf16.mxu0 %v956
    %2612 = vmatpush2.bf16.msra.mxu0 %v955
    %2613 = vmatprep.subr.bf16.mxu0 %v952
    %2614 = vmatpush2.bf16.msra.mxu0 %v951
    %2615 = vmatprep.subr.bf16.mxu0 %v948
    %2616 = vmatpush2.bf16.msra.mxu0 %v947
    %2617 = vmatprep.subr.bf16.mxu0 %v944
    %2618 = vmatpush2.bf16.msra.mxu0 %v943
    %2619 = vmatprep.subr.bf16.mxu0 %v940
    %2620 = vmatpush2.bf16.msra.mxu0 %v939
    %2621 = vmatprep.mubr.bf16.mxu0 %v2588
    %2622 = vmatmul.mubr.bf16.gmra.mxu0 %v2587
    %v2623 = vpop.f32.mrf.mxu0
    %v2624 = vadd.f32 %v326, %v2623
    %v2625 = vpop.f32.mrf.mxu0
    %v2626 = vadd.f32 %v330, %v2625
    %v2627 = vpop.f32.mrf.mxu0
    %v2628 = vpop.f32.mrf.mxu0
    %2629 = vdwg.mxu0
    %2630 = vmatprep.subr.bf16.mxu0 %v938
    %2631 = vmatpush1.bf16.msra.mxu0 %v937
    %2632 = vmatprep.subr.bf16.mxu0 %v934
    %2633 = vmatpush1.bf16.msra.mxu0 %v933
    %2634 = vmatprep.subr.bf16.mxu0 %v930
    %2635 = vmatpush1.bf16.msra.mxu0 %v929
    %2636 = vmatprep.subr.bf16.mxu0 %v926
    %2637 = vmatpush1.bf16.msra.mxu0 %v925
    %2638 = vmatprep.subr.bf16.mxu0 %v922
    %2639 = vmatpush1.bf16.msra.mxu0 %v921
    %2640 = vmatprep.subr.bf16.mxu0 %v918
    %2641 = vmatpush1.bf16.msra.mxu0 %v917
    %2642 = vmatprep.subr.bf16.mxu0 %v914
    %2643 = vmatpush1.bf16.msra.mxu0 %v913
    %2644 = vmatprep.subr.bf16.mxu0 %v910
    %2645 = vmatpush1.bf16.msra.mxu0 %v909
    %2646 = vmatprep.subr.bf16.mxu0 %v970
    %2647 = vmatpush2.bf16.msra.mxu0 %v969
    %2648 = vmatprep.subr.bf16.mxu0 %v966
    %2649 = vmatpush2.bf16.msra.mxu0 %v965
    %2650 = vmatprep.subr.bf16.mxu0 %v962
    %2651 = vmatpush2.bf16.msra.mxu0 %v961
    %2652 = vmatprep.subr.bf16.mxu0 %v958
    %2653 = vmatpush2.bf16.msra.mxu0 %v957
    %2654 = vmatprep.subr.bf16.mxu0 %v954
    %2655 = vmatpush2.bf16.msra.mxu0 %v953
    %2656 = vmatprep.subr.bf16.mxu0 %v950
    %2657 = vmatpush2.bf16.msra.mxu0 %v949
    %2658 = vmatprep.subr.bf16.mxu0 %v946
    %2659 = vmatpush2.bf16.msra.mxu0 %v945
    %2660 = vmatprep.subr.bf16.mxu0 %v942
    %2661 = vmatpush2.bf16.msra.mxu0 %v941
    %2662 = vmatprep.mubr.bf16.mxu0 %v2588
    %2663 = vmatmul.mubr.bf16.gmra.mxu0 %v2587
    %v2664 = vpop.f32.mrf.mxu0
    %v2665 = vadd.f32 %v334, %v2664
    %v2666 = vpop.f32.mrf.mxu0
    %v2667 = vadd.f32 %v338, %v2666
    %v2668 = vpop.f32.mrf.mxu0
    %v2669 = vpop.f32.mrf.mxu0
    %2670 = vdwg.mxu0
    %v2671 = vxor.u32 %v2624, 2147483648
    %v2672 = vxor.u32 %v2626, 2147483648
    %v2673 = vxor.u32 %v2665, 2147483648
    %v2674 = vmul.f32 %v2671, 1.442695
    %v2675 = vpow.pop %v2674
    %v2676 = vmul.f32 %v2672, 1.442695
    %v2677 = vpow.pop %v2676
    %v2678 = vmul.f32 %v2673, 1.442695
    %v2679 = vpow.pop %v2678
    %v2680 = vadd.f32 %v2675, 1.0
    %v2681 = vadd.f32 %v2677, 1.0
    %v2682 = vadd.f32 %v2679, 1.0
    %v2683 = vrcp.pop %v2680
    %v2684 = vmul.f32 1.0, %v2683
    %v2685 = vrcp.pop %v2681
    %v2686 = vmul.f32 1.0, %v2685
    %v2687 = vrcp.pop %v2682
    %v2688 = vmul.f32 1.0, %v2687
    %v2689 = vtanh.pop %v2667
    %v2690 = vmul.f32 %v2686, %v2470
    %v2691 = vmul.f32 %v2684, %v2689
    %v2692 = vadd.f32 %v2690, %v2691
    %v2693 = vtanh.pop %v2692
    %v2694 = vmul.f32 %v2688, %v2693
    %v2695 = vpack.c.bf16 %v2694, %v2694
    %v2696 = vld [vmem:[%s6] sm:$0xf]
    %v2697 = vld [vmem:[%s6 + $0x4] sm:$0xf]
    %v2698 = vld [vmem:[%s6 + $0x8] sm:$0xf]
    %v2699 = vld [vmem:[%s6 + $0xc] sm:$0xf]
    %v2700 = vld [vmem:[%s6 + $0x10] sm:$0xf]
    %v2701 = vld [vmem:[%s6 + $0x14] sm:$0xf]
    %v2702 = vld [vmem:[%s6 + $0x18] sm:$0xf]
    %v2703 = vld [vmem:[%s6 + $0x1c] sm:$0xf]
    %v2704 = vld [vmem:[%s6 + $0x20] sm:$0xf]
    %v2705 = vld [vmem:[%s6 + $0x24] sm:$0xf]
    %v2706 = vld [vmem:[%s6 + $0x28] sm:$0xf]
    %v2707 = vld [vmem:[%s6 + $0x2c] sm:$0xf]
    %v2708 = vld [vmem:[%s6 + $0x30] sm:$0xf]
    %v2709 = vld [vmem:[%s6 + $0x34] sm:$0xf]
    %v2710 = vld [vmem:[%s6 + $0x38] sm:$0xf]
    %v2711 = vld [vmem:[%s6 + $0x3c] sm:$0xf]
    %v2712 = vld [vmem:[%s7] sm:$0x1]
    %v2714 = vlaneseq
    %v2715 = vshrl.u32 %v2714, 7
    %v2716 = vsub.s32 0, %v2715
    %v2717 = vrot.slane %v2712, %v2716
    %v2735 = vunpack.c.l.b16 %v2696
    %v2736 = vunpack.c.l.b16 %v2697
    %v2737 = vunpack.c.l.b16 %v2698
    %v2738 = vunpack.c.l.b16 %v2699
    %v2739 = vunpack.c.l.b16 %v2700
    %v2740 = vunpack.c.l.b16 %v2701
    %v2741 = vunpack.c.l.b16 %v2702
    %v2742 = vunpack.c.l.b16 %v2703
    %v2743 = vunpack.c.l.b16 %v2704
    %v2744 = vunpack.c.l.b16 %v2705
    %v2745 = vunpack.c.l.b16 %v2706
    %v2746 = vunpack.c.l.b16 %v2707
    %v2747 = vunpack.c.l.b16 %v2708
    %v2748 = vunpack.c.l.b16 %v2709
    %v2749 = vunpack.c.l.b16 %v2710
    %v2750 = vunpack.c.l.b16 %v2711
    %v2751 = vpack.c.b16 %v2736, %v2735
    %v2752 = vpack.c.b16 %v2738, %v2737
    %v2753 = vpack.c.b16 %v2740, %v2739
    %v2754 = vpack.c.b16 %v2742, %v2741
    %v2755 = vpack.c.b16 %v2744, %v2743
    %v2756 = vpack.c.b16 %v2746, %v2745
    %v2757 = vpack.c.b16 %v2748, %v2747
    %v2758 = vpack.c.b16 %v2750, %v2749
    %2767 = vmatprep.subr.bf16.mxu0 0
    %2768 = vmatpush1.bf16.msra.mxu0 %v2758
    %2769 = vmatprep.subr.bf16.mxu0 0
    %2770 = vmatpush1.bf16.msra.mxu0 %v2757
    %2771 = vmatprep.subr.bf16.mxu0 0
    %2772 = vmatpush1.bf16.msra.mxu0 %v2756
    %2773 = vmatprep.subr.bf16.mxu0 0
    %2774 = vmatpush1.bf16.msra.mxu0 %v2755
    %2775 = vmatprep.subr.bf16.mxu0 0
    %2776 = vmatpush1.bf16.msra.mxu0 %v2754
    %2777 = vmatprep.subr.bf16.mxu0 0
    %2778 = vmatpush1.bf16.msra.mxu0 %v2753
    %2779 = vmatprep.subr.bf16.mxu0 0
    %2780 = vmatpush1.bf16.msra.mxu0 %v2752
    %2781 = vmatprep.subr.bf16.mxu0 0
    %2782 = vmatpush1.bf16.msra.mxu0 %v2751
    %2783 = vmatprep.subr.bf16.mxu0 0
    %2784 = vmatpush2.bf16.msra.mxu0 0
    %2785 = vmatprep.subr.bf16.mxu0 0
    %2786 = vmatpush2.bf16.msra.mxu0 0
    %2787 = vmatprep.subr.bf16.mxu0 0
    %2788 = vmatpush2.bf16.msra.mxu0 0
    %2789 = vmatprep.subr.bf16.mxu0 0
    %2790 = vmatpush2.bf16.msra.mxu0 0
    %2791 = vmatprep.subr.bf16.mxu0 0
    %2792 = vmatpush2.bf16.msra.mxu0 0
    %2793 = vmatprep.subr.bf16.mxu0 0
    %2794 = vmatpush2.bf16.msra.mxu0 0
    %2795 = vmatprep.subr.bf16.mxu0 0
    %2796 = vmatpush2.bf16.msra.mxu0 0
    %2797 = vmatprep.subr.bf16.mxu0 0
    %2798 = vmatpush2.bf16.msra.mxu0 0
    %2799 = vmatprep.mubr.bf16.mxu0 0
    %2800 = vmatmul.mubr.bf16.gmra.mxu0 %v2695
    %v2801 = vpop.f32.mrf.mxu0
    %v2802 = vadd.f32 %v2717, %v2801
    %v2803 = vpop.f32.mrf.mxu0
    %v2804 = vpop.f32.mrf.mxu0
    %v2805 = vpop.f32.mrf.mxu0
    %2806 = vdwg.mxu0
    %2807 = vst [vmem:[#allocation9] sm:$0xff] %v2802
    // Predicated region
    $region46: #{tpu_custom_call.1} parent=1 // pred_check
      _
    $region47: #{tpu_custom_call.1} parent=1 // pred_check_branch
      %2809 = sbr.rel (0) target = $region49
    $region48: #{tpu_custom_call.1} parent=1 // pred_region
      %s2811 = ssub.s32 128, 128
      %2812 = vsyncadd [#allocation5], %s2811
      %s2814 = sshll.u32 [#allocation9], 4
      %s2815 = int_to_ptr.vmem [resolvable:$true] %s2814
      %2817 = dma.vmem_to_hbm [thread:$0]  %s2815, 128, %s8, [#allocation5]
    $region49: #{tpu_custom_call.1} parent=1 // pred_fallthru
      _
    // Predicated region
    $region50: #{tpu_custom_call.1} parent=1 // pred_check
      _
    $region51: #{tpu_custom_call.1} parent=1 // pred_check_branch
      %2819 = sbr.rel (0) target = $region53
    $region52: #{tpu_custom_call.1} parent=1 // pred_region
      %2820 = dma.done [#allocation5], 128
    $region53: #{tpu_custom_call.1} parent=1 // pred_fallthru
      _
    %2821 = vsyncpa [#allocation4], 1
    %2822 = vsyncpa [#allocation7], 1
    %2823 = vsyncpa [#allocation5], 1

</llo_original>
